<compile_context>
chip_gen: v7x
topology: tpu7x:2x2x1
jax: 0.10.0
libtpu: 0.0.40
codegen_flags: <defaults>
</compile_context>

<pallas_src>
import math

import jax
import jax.numpy as jnp
from jax.experimental import pallas as pl
from jax.experimental.pallas import tpu as pltpu

# ------------------------- small BERT-like config ----------------------------
VOCAB = 100
HIDDEN = 32
N_HEADS = 4
HEAD_DIM = HIDDEN // N_HEADS
INTERMEDIATE = 64
MAX_POS = 16
N_LAYERS = 2
LN_EPS = 1e-12

BATCH = 2
SEQ = 8
BS = BATCH * SEQ

# vector-slab row indices (one padded 128-lane row per vector)
_V_BQKV, _V_BO, _V_B1, _V_B2 = 0, 1, 2, 3
_V_LN1G, _V_LN1B, _V_LN2G, _V_LN2B = 4, 5, 6, 7
_V_EG, _V_EB = 8, 9
_V_ROWS = 10
_V_LANES = 128


# ------------------------------ kernel helpers -------------------------------
def _layer_norm(v, gamma, beta):
    # One-pass mean / mean-of-squares -> halves the cross-lane reductions.
    mu = jnp.mean(v, axis=-1, keepdims=True)
    var = jnp.mean(v * v, axis=-1, keepdims=True) - mu * mu
    return (v - mu) * jax.lax.rsqrt(var + LN_EPS) * gamma + beta


def _gelu(x):
    # TODO(synk): HF BERT uses exact (erf) GELU; tanh approximation kept for a
    # Mosaic-safe EUP lowering (~1e-3 deviation).
    c = 0.7978845608028654  # sqrt(2/pi)
    return 0.5 * x * (1.0 + jnp.tanh(c * (x + 0.044715 * x * x * x)))


def _self_attention(x, wqkv, bqkv, wo_heads, bo):
    """x: (BS, H) f32 -> (BS, H) f32.  1/sqrt(hd) already folded into wqkv/bqkv."""
    qkv = jnp.dot(x.astype(jnp.bfloat16), wqkv,
                  preferred_element_type=jnp.float32) + bqkv            # (BS, 3H)
    q = qkv[:, 0:HIDDEN].reshape(BATCH, SEQ, HIDDEN)
    k = qkv[:, HIDDEN:2 * HIDDEN].reshape(BATCH, SEQ, HIDDEN)
    v = qkv[:, 2 * HIDDEN:3 * HIDDEN].reshape(BATCH, SEQ, HIDDEN).astype(jnp.bfloat16)

    attn = None
    for h in range(N_HEADS):                                # static unroll (4)
        sl = slice(h * HEAD_DIM, (h + 1) * HEAD_DIM)
        qh = q[:, :, sl].astype(jnp.bfloat16)               # (B, S, hd)
        kh = k[:, :, sl].astype(jnp.bfloat16)
        vh = v[:, :, sl]
        s = jnp.einsum("bqd,bkd->bqk", qh, kh,
                       preferred_element_type=jnp.float32)              # (B,S,S)
        s = s - jnp.max(s, axis=-1, keepdims=True)
        p = jnp.exp(s)
        p = p * pl.reciprocal(jnp.sum(p, axis=-1, keepdims=True), approx=True)
        ctx = jnp.einsum("bqk,bkd->bqd", p.astype(jnp.bfloat16), vh,
                         preferred_element_type=jnp.float32)            # (B,S,hd)
        # Fold the output projection per head: ctx @ Wo == sum_h ctx_h @ Wo_h.
        part = jnp.dot(ctx.reshape(BS, HEAD_DIM).astype(jnp.bfloat16), wo_heads[h],
                       preferred_element_type=jnp.float32)              # (BS, H)
        attn = part if attn is None else attn + part
    return attn + bo


def _bert_layer(x, wqkv, bqkv, wo_heads, bo, ln1g, ln1b, w1, b1, w2, b2, ln2g, ln2b):
    """One BertLayer on the flat (B*S, H) hidden state (all LN/GELU in f32)."""
    attn = _self_attention(x, wqkv, bqkv, wo_heads, bo)
    y = _layer_norm(attn + x, ln1g, ln1b)                   # add & norm
    h1 = _gelu(jnp.dot(y.astype(jnp.bfloat16), w1,
                       preferred_element_type=jnp.float32) + b1)        # (BS, I)
    ffn = jnp.dot(h1.astype(jnp.bfloat16), w2,
                  preferred_element_type=jnp.float32) + b2              # (BS, H)
    return _layer_norm(ffn + y, ln2g, ln2b)                 # add & norm


# ------------------------------ fused kernel ---------------------------------
def fused_bert_kernel(ids_ref, word_ref, pos_type_ref, wmat_ref, w2_ref, vec_ref,
                      *out_refs):
    """out_refs: N_LAYERS + 1 flat (B*S, H) hidden states."""
    H, I = HIDDEN, INTERMEDIATE

    # ---- unpack the two weight slabs once (shared by every layer) ----
    wmat = wmat_ref[...]                                    # (H, 3H+H+I) bf16
    wqkv = wmat[:, 0:3 * H]                                 # Q columns pre-scaled
    wo = wmat[:, 3 * H:4 * H]
    w1 = wmat[:, 4 * H:4 * H + I]
    w2 = w2_ref[...]                                        # (I, H) bf16
    wo_heads = tuple(wo[h * HEAD_DIM:(h + 1) * HEAD_DIM, :] for h in range(N_HEADS))

    # ---- biases / LN params: broadcast ONCE, reused by all layers ----
    vec = vec_ref[...]                                      # (10, 128) f32

    def vrow(r, n):
        return jnp.broadcast_to(vec[r:r + 1, 0:n], (BS, n))

    bqkv = vrow(_V_BQKV, 3 * H)
    bo = vrow(_V_BO, H)
    b1 = vrow(_V_B1, I)
    b2 = vrow(_V_B2, H)
    ln1g = vrow(_V_LN1G, H)
    ln1b = vrow(_V_LN1B, H)
    ln2g = vrow(_V_LN2G, H)
    ln2b = vrow(_V_LN2B, H)
    eg = vrow(_V_EG, H)
    eb = vrow(_V_EB, H)

    # ---- embeddings: in-kernel word-row gather + pos/type add + LayerNorm ----
    h0 = out_refs[0]                                        # (BS, H) staging + output
    for i in range(BS):                                     # static unroll (16 rows)
        h0[i:i + 1, :] = word_ref[ids_ref[i]]               # dynamic (1, H) row load
    x = _layer_norm(h0[...] + pos_type_ref[...], eg, eb)
    h0[...] = x

    # ModuleList([BertLayer(cfg)] * n_layers): the SAME weights applied N times.
    for li in range(N_LAYERS):                              # static unroll
        x = _bert_layer(x, wqkv, bqkv, wo_heads, bo, ln1g, ln1b,
                        w1, b1, w2, b2, ln2g, ln2b)
        out_refs[li + 1][...] = x


# -------------------------- host-side weight packing --------------------------
def pack_params(params):
    """Pack the 13 tiny tensors into 3 slabs + the embedding tables (once)."""
    p = params["layer"]
    H = HIDDEN
    scale = 1.0 / math.sqrt(HEAD_DIM)

    # Fold attention scale into the Q projection (and its bias).
    wqkv = p["wqkv"].at[:, :H].multiply(scale)
    bqkv = p["bqkv"].at[:, :H].multiply(scale)

    wmat = jnp.concatenate([wqkv, p["wo"], p["w1"]], axis=1).astype(jnp.bfloat16)
    w2 = p["w2"].astype(jnp.bfloat16)

    def row(v):
        v = jnp.asarray(v, jnp.float32).reshape(-1)
        return jnp.pad(v, (0, _V_LANES - v.shape[0]))

    vec = jnp.stack([row(bqkv), row(p["bo"]), row(p["b1"]), row(p["b2"]),
                     row(p["ln1_g"]), row(p["ln1_b"]),
                     row(p["ln2_g"]), row(p["ln2_b"]),
                     row(params["emb_ln_g"]), row(params["emb_ln_b"])])   # (10, 128)

    # (VOCAB, 1, H) so the token id indexes a leading (non-tiled) dim in-kernel.
    word3 = params["word_emb"].astype(jnp.float32).reshape(VOCAB, 1, HIDDEN)
    # token_type_ids == 0 in the reference forward; positions are 0..S-1.
    pos_type = jnp.tile(params["pos_emb"][:SEQ] + params["type_emb"][0][None, :],
                        (BATCH, 1)).astype(jnp.float32)                   # (BS, H)
    return dict(word3=word3, pos_type=pos_type, wmat=wmat, w2=w2, vec=vec)


# ------------------------------ module forward --------------------------------
def raw_bert_transformer_forward(input_ids, packed):
    B, S = input_ids.shape
    ids_flat = input_ids.reshape(B * S).astype(jnp.int32)

    vmem = pl.BlockSpec(memory_space=pltpu.MemorySpace.VMEM)
    smem = pl.BlockSpec(memory_space=pltpu.MemorySpace.SMEM)

    outs = pl.pallas_call(
        fused_bert_kernel,
        out_shape=tuple(jax.ShapeDtypeStruct((B * S, HIDDEN), jnp.float32)
                        for _ in range(N_LAYERS + 1)),
        in_specs=[smem, vmem, vmem, vmem, vmem, vmem],
        out_specs=tuple(vmem for _ in range(N_LAYERS + 1)),
    )(ids_flat, packed["word3"], packed["pos_type"],
      packed["wmat"], packed["w2"], packed["vec"])

    hiddens = tuple(o.reshape(B, S, HIDDEN) for o in outs)
    return hiddens[-1], hiddens


# ------------------------- deterministic parameters ---------------------------
def init_params(key):
    std = 0.02
    ks = jax.random.split(key, 16)
    H, I = HIDDEN, INTERMEDIATE
    n = lambda k, shape: (std * jax.random.normal(k, shape)).astype(jnp.float32)

    # Q/K/V pre-concatenated into one (H, 3H) projection.
    wqkv = jnp.concatenate([n(ks[0], (H, H)), n(ks[1], (H, H)), n(ks[2], (H, H))],
                           axis=1)
    layer = dict(
        wqkv=wqkv, bqkv=jnp.zeros((1, 3 * H), jnp.float32),
        wo=n(ks[3], (H, H)), bo=jnp.zeros((1, H), jnp.float32),
        ln1_g=jnp.ones((1, H), jnp.float32), ln1_b=jnp.zeros((1, H), jnp.float32),
        w1=n(ks[4], (H, I)), b1=jnp.zeros((1, I), jnp.float32),
        w2=n(ks[5], (I, H)), b2=jnp.zeros((1, H), jnp.float32),
        ln2_g=jnp.ones((1, H), jnp.float32), ln2_b=jnp.zeros((1, H), jnp.float32),
    )
    return dict(
        word_emb=n(ks[6], (VOCAB, H)),
        pos_emb=n(ks[7], (MAX_POS, H)),
        type_emb=n(ks[8], (2, H)),
        emb_ln_g=jnp.ones((1, H), jnp.float32),
        emb_ln_b=jnp.zeros((1, H), jnp.float32),
        layer=layer,
    )


if __name__ == "__main__":
    key = jax.random.PRNGKey(0)
    pkey, dkey = jax.random.split(key)
    params = init_params(pkey)
    packed = pack_params(params)          # one-time weight packing (amortized)

    input_ids = jax.random.randint(dkey, (BATCH, SEQ), 0, VOCAB, dtype=jnp.int32)

    fwd = jax.jit(raw_bert_transformer_forward)
    final, all_hiddens = fwd(input_ids, packed)
    final = jax.block_until_ready(final)
    for h in all_hiddens:
        jax.block_until_ready(h)

    assert final.shape == (BATCH, SEQ, HIDDEN)
    assert len(all_hiddens) == N_LAYERS + 1
    assert all(h.shape == (BATCH, SEQ, HIDDEN) for h in all_hiddens)
    assert bool(jnp.all(jnp.isfinite(final)))
    print("KERNEL_OK")
</pallas_src>

<mosaic_0001>
module attributes {stable_mosaic.version = 11 : i64} {
  func.func @fused_bert_kernel(%arg0: memref<16xi32, #tpu.memory_space<smem>>, %arg1: memref<100x1x32xf32, #tpu.memory_space<vmem>>, %arg2: memref<16x32xf32, #tpu.memory_space<vmem>>, %arg3: memref<32x192xbf16, #tpu.memory_space<vmem>>, %arg4: memref<64x32xbf16, #tpu.memory_space<vmem>>, %arg5: memref<10x128xf32, #tpu.memory_space<vmem>>, %arg6: memref<16x32xf32, #tpu.memory_space<vmem>>, %arg7: memref<16x32xf32, #tpu.memory_space<vmem>>, %arg8: memref<16x32xf32, #tpu.memory_space<vmem>>) attributes {dimension_semantics = [], scalar_prefetch = 0 : i64, scratch_operands = 0 : i64, tpu.core_type = #tpu.core_type<tc>} {
    %c0 = arith.constant 0 : index
    %c0_0 = arith.constant 0 : index
    %0 = vector.load %arg3[%c0, %c0_0] : memref<32x192xbf16, #tpu.memory_space<vmem>>, vector<32x192xbf16>
    %1 = vector.extract_strided_slice %0 {offsets = [0, 0], sizes = [32, 96], strides = [1, 1]} : vector<32x192xbf16> to vector<32x96xbf16>
    %2 = vector.extract_strided_slice %0 {offsets = [0, 96], sizes = [32, 32], strides = [1, 1]} : vector<32x192xbf16> to vector<32x32xbf16>
    %3 = vector.extract_strided_slice %0 {offsets = [0, 128], sizes = [32, 64], strides = [1, 1]} : vector<32x192xbf16> to vector<32x64xbf16>
    %c0_1 = arith.constant 0 : index
    %c0_2 = arith.constant 0 : index
    %4 = vector.load %arg4[%c0_1, %c0_2] : memref<64x32xbf16, #tpu.memory_space<vmem>>, vector<64x32xbf16>
    %5 = vector.extract_strided_slice %2 {offsets = [0, 0], sizes = [8, 32], strides = [1, 1]} : vector<32x32xbf16> to vector<8x32xbf16>
    %6 = vector.extract_strided_slice %2 {offsets = [8, 0], sizes = [8, 32], strides = [1, 1]} : vector<32x32xbf16> to vector<8x32xbf16>
    %7 = vector.extract_strided_slice %2 {offsets = [16, 0], sizes = [8, 32], strides = [1, 1]} : vector<32x32xbf16> to vector<8x32xbf16>
    %8 = vector.extract_strided_slice %2 {offsets = [24, 0], sizes = [8, 32], strides = [1, 1]} : vector<32x32xbf16> to vector<8x32xbf16>
    %c0_3 = arith.constant 0 : index
    %c0_4 = arith.constant 0 : index
    %9 = vector.load %arg5[%c0_3, %c0_4] : memref<10x128xf32, #tpu.memory_space<vmem>>, vector<10x128xf32>
    %10 = vector.extract_strided_slice %9 {offsets = [0, 0], sizes = [1, 96], strides = [1, 1]} : vector<10x128xf32> to vector<1x96xf32>
    %11 = vector.shape_cast %10 : vector<1x96xf32> to vector<1x96xf32>
    %12 = vector.broadcast %11 : vector<1x96xf32> to vector<16x96xf32>
    %13 = vector.extract_strided_slice %9 {offsets = [1, 0], sizes = [1, 32], strides = [1, 1]} : vector<10x128xf32> to vector<1x32xf32>
    %14 = vector.shape_cast %13 : vector<1x32xf32> to vector<1x32xf32>
    %15 = vector.broadcast %14 : vector<1x32xf32> to vector<16x32xf32>
    %16 = vector.extract_strided_slice %9 {offsets = [2, 0], sizes = [1, 64], strides = [1, 1]} : vector<10x128xf32> to vector<1x64xf32>
    %17 = vector.shape_cast %16 : vector<1x64xf32> to vector<1x64xf32>
    %18 = vector.broadcast %17 : vector<1x64xf32> to vector<16x64xf32>
    %19 = vector.extract_strided_slice %9 {offsets = [3, 0], sizes = [1, 32], strides = [1, 1]} : vector<10x128xf32> to vector<1x32xf32>
    %20 = vector.shape_cast %19 : vector<1x32xf32> to vector<1x32xf32>
    %21 = vector.broadcast %20 : vector<1x32xf32> to vector<16x32xf32>
    %22 = vector.extract_strided_slice %9 {offsets = [4, 0], sizes = [1, 32], strides = [1, 1]} : vector<10x128xf32> to vector<1x32xf32>
    %23 = vector.shape_cast %22 : vector<1x32xf32> to vector<1x32xf32>
    %24 = vector.broadcast %23 : vector<1x32xf32> to vector<16x32xf32>
    %25 = vector.extract_strided_slice %9 {offsets = [5, 0], sizes = [1, 32], strides = [1, 1]} : vector<10x128xf32> to vector<1x32xf32>
    %26 = vector.shape_cast %25 : vector<1x32xf32> to vector<1x32xf32>
    %27 = vector.broadcast %26 : vector<1x32xf32> to vector<16x32xf32>
    %28 = vector.extract_strided_slice %9 {offsets = [6, 0], sizes = [1, 32], strides = [1, 1]} : vector<10x128xf32> to vector<1x32xf32>
    %29 = vector.shape_cast %28 : vector<1x32xf32> to vector<1x32xf32>
    %30 = vector.broadcast %29 : vector<1x32xf32> to vector<16x32xf32>
    %31 = vector.extract_strided_slice %9 {offsets = [7, 0], sizes = [1, 32], strides = [1, 1]} : vector<10x128xf32> to vector<1x32xf32>
    %32 = vector.shape_cast %31 : vector<1x32xf32> to vector<1x32xf32>
    %33 = vector.broadcast %32 : vector<1x32xf32> to vector<16x32xf32>
    %34 = vector.extract_strided_slice %9 {offsets = [8, 0], sizes = [1, 32], strides = [1, 1]} : vector<10x128xf32> to vector<1x32xf32>
    %35 = vector.shape_cast %34 : vector<1x32xf32> to vector<1x32xf32>
    %36 = vector.broadcast %35 : vector<1x32xf32> to vector<16x32xf32>
    %37 = vector.extract_strided_slice %9 {offsets = [9, 0], sizes = [1, 32], strides = [1, 1]} : vector<10x128xf32> to vector<1x32xf32>
    %38 = vector.shape_cast %37 : vector<1x32xf32> to vector<1x32xf32>
    %39 = vector.broadcast %38 : vector<1x32xf32> to vector<16x32xf32>
    %c0_5 = arith.constant 0 : index
    %40 = memref.load %arg0[%c0_5] : memref<16xi32, #tpu.memory_space<smem>>
    %41 = arith.index_cast %40 : i32 to index
    %c0_6 = arith.constant 0 : index
    %c0_7 = arith.constant 0 : index
    %42 = vector.load %arg1[%41, %c0_6, %c0_7] : memref<100x1x32xf32, #tpu.memory_space<vmem>>, vector<1x1x32xf32>
    %43 = vector.shape_cast %42 : vector<1x1x32xf32> to vector<1x32xf32>
    %c0_8 = arith.constant 0 : index
    %c0_9 = arith.constant 0 : index
    %44 = vector.load %arg6[%c0_8, %c0_9] : memref<16x32xf32, #tpu.memory_space<vmem>>, vector<1x32xf32>
    tpu.vector_store %arg6[%c0_8, %c0_9], %43 {strides = array<i32>} : memref<16x32xf32, #tpu.memory_space<vmem>>, vector<1x32xf32>,
    %c1 = arith.constant 1 : index
    %45 = memref.load %arg0[%c1] : memref<16xi32, #tpu.memory_space<smem>>
    %46 = arith.index_cast %45 : i32 to index
    %c0_10 = arith.constant 0 : index
    %c0_11 = arith.constant 0 : index
    %47 = vector.load %arg1[%46, %c0_10, %c0_11] : memref<100x1x32xf32, #tpu.memory_space<vmem>>, vector<1x1x32xf32>
    %48 = vector.shape_cast %47 : vector<1x1x32xf32> to vector<1x32xf32>
    %c1_12 = arith.constant 1 : index
    %c0_13 = arith.constant 0 : index
    %49 = vector.load %arg6[%c1_12, %c0_13] : memref<16x32xf32, #tpu.memory_space<vmem>>, vector<1x32xf32>
    tpu.vector_store %arg6[%c1_12, %c0_13], %48 {strides = array<i32>} : memref<16x32xf32, #tpu.memory_space<vmem>>, vector<1x32xf32>,
    %c2 = arith.constant 2 : index
    %50 = memref.load %arg0[%c2] : memref<16xi32, #tpu.memory_space<smem>>
    %51 = arith.index_cast %50 : i32 to index
    %c0_14 = arith.constant 0 : index
    %c0_15 = arith.constant 0 : index
    %52 = vector.load %arg1[%51, %c0_14, %c0_15] : memref<100x1x32xf32, #tpu.memory_space<vmem>>, vector<1x1x32xf32>
    %53 = vector.shape_cast %52 : vector<1x1x32xf32> to vector<1x32xf32>
    %c2_16 = arith.constant 2 : index
    %c0_17 = arith.constant 0 : index
    %54 = vector.load %arg6[%c2_16, %c0_17] : memref<16x32xf32, #tpu.memory_space<vmem>>, vector<1x32xf32>
    tpu.vector_store %arg6[%c2_16, %c0_17], %53 {strides = array<i32>} : memref<16x32xf32, #tpu.memory_space<vmem>>, vector<1x32xf32>,
    %c3 = arith.constant 3 : index
    %55 = memref.load %arg0[%c3] : memref<16xi32, #tpu.memory_space<smem>>
    %56 = arith.index_cast %55 : i32 to index
    %c0_18 = arith.constant 0 : index
    %c0_19 = arith.constant 0 : index
    %57 = vector.load %arg1[%56, %c0_18, %c0_19] : memref<100x1x32xf32, #tpu.memory_space<vmem>>, vector<1x1x32xf32>
    %58 = vector.shape_cast %57 : vector<1x1x32xf32> to vector<1x32xf32>
    %c3_20 = arith.constant 3 : index
    %c0_21 = arith.constant 0 : index
    %59 = vector.load %arg6[%c3_20, %c0_21] : memref<16x32xf32, #tpu.memory_space<vmem>>, vector<1x32xf32>
    tpu.vector_store %arg6[%c3_20, %c0_21], %58 {strides = array<i32>} : memref<16x32xf32, #tpu.memory_space<vmem>>, vector<1x32xf32>,
    %c4 = arith.constant 4 : index
    %60 = memref.load %arg0[%c4] : memref<16xi32, #tpu.memory_space<smem>>
    %61 = arith.index_cast %60 : i32 to index
    %c0_22 = arith.constant 0 : index
    %c0_23 = arith.constant 0 : index
    %62 = vector.load %arg1[%61, %c0_22, %c0_23] : memref<100x1x32xf32, #tpu.memory_space<vmem>>, vector<1x1x32xf32>
    %63 = vector.shape_cast %62 : vector<1x1x32xf32> to vector<1x32xf32>
    %c4_24 = arith.constant 4 : index
    %c0_25 = arith.constant 0 : index
    %64 = vector.load %arg6[%c4_24, %c0_25] : memref<16x32xf32, #tpu.memory_space<vmem>>, vector<1x32xf32>
    tpu.vector_store %arg6[%c4_24, %c0_25], %63 {strides = array<i32>} : memref<16x32xf32, #tpu.memory_space<vmem>>, vector<1x32xf32>,
    %c5 = arith.constant 5 : index
    %65 = memref.load %arg0[%c5] : memref<16xi32, #tpu.memory_space<smem>>
    %66 = arith.index_cast %65 : i32 to index
    %c0_26 = arith.constant 0 : index
    %c0_27 = arith.constant 0 : index
    %67 = vector.load %arg1[%66, %c0_26, %c0_27] : memref<100x1x32xf32, #tpu.memory_space<vmem>>, vector<1x1x32xf32>
    %68 = vector.shape_cast %67 : vector<1x1x32xf32> to vector<1x32xf32>
    %c5_28 = arith.constant 5 : index
    %c0_29 = arith.constant 0 : index
    %69 = vector.load %arg6[%c5_28, %c0_29] : memref<16x32xf32, #tpu.memory_space<vmem>>, vector<1x32xf32>
    tpu.vector_store %arg6[%c5_28, %c0_29], %68 {strides = array<i32>} : memref<16x32xf32, #tpu.memory_space<vmem>>, vector<1x32xf32>,
    %c6 = arith.constant 6 : index
    %70 = memref.load %arg0[%c6] : memref<16xi32, #tpu.memory_space<smem>>
    %71 = arith.index_cast %70 : i32 to index
    %c0_30 = arith.constant 0 : index
    %c0_31 = arith.constant 0 : index
    %72 = vector.load %arg1[%71, %c0_30, %c0_31] : memref<100x1x32xf32, #tpu.memory_space<vmem>>, vector<1x1x32xf32>
    %73 = vector.shape_cast %72 : vector<1x1x32xf32> to vector<1x32xf32>
    %c6_32 = arith.constant 6 : index
    %c0_33 = arith.constant 0 : index
    %74 = vector.load %arg6[%c6_32, %c0_33] : memref<16x32xf32, #tpu.memory_space<vmem>>, vector<1x32xf32>
    tpu.vector_store %arg6[%c6_32, %c0_33], %73 {strides = array<i32>} : memref<16x32xf32, #tpu.memory_space<vmem>>, vector<1x32xf32>,
    %c7 = arith.constant 7 : index
    %75 = memref.load %arg0[%c7] : memref<16xi32, #tpu.memory_space<smem>>
    %76 = arith.index_cast %75 : i32 to index
    %c0_34 = arith.constant 0 : index
    %c0_35 = arith.constant 0 : index
    %77 = vector.load %arg1[%76, %c0_34, %c0_35] : memref<100x1x32xf32, #tpu.memory_space<vmem>>, vector<1x1x32xf32>
    %78 = vector.shape_cast %77 : vector<1x1x32xf32> to vector<1x32xf32>
    %c7_36 = arith.constant 7 : index
    %c0_37 = arith.constant 0 : index
    %79 = vector.load %arg6[%c7_36, %c0_37] : memref<16x32xf32, #tpu.memory_space<vmem>>, vector<1x32xf32>
    tpu.vector_store %arg6[%c7_36, %c0_37], %78 {strides = array<i32>} : memref<16x32xf32, #tpu.memory_space<vmem>>, vector<1x32xf32>,
    %c8 = arith.constant 8 : index
    %80 = memref.load %arg0[%c8] : memref<16xi32, #tpu.memory_space<smem>>
    %81 = arith.index_cast %80 : i32 to index
    %c0_38 = arith.constant 0 : index
    %c0_39 = arith.constant 0 : index
    %82 = vector.load %arg1[%81, %c0_38, %c0_39] : memref<100x1x32xf32, #tpu.memory_space<vmem>>, vector<1x1x32xf32>
    %83 = vector.shape_cast %82 : vector<1x1x32xf32> to vector<1x32xf32>
    %c8_40 = arith.constant 8 : index
    %c0_41 = arith.constant 0 : index
    %84 = vector.load %arg6[%c8_40, %c0_41] : memref<16x32xf32, #tpu.memory_space<vmem>>, vector<1x32xf32>
    tpu.vector_store %arg6[%c8_40, %c0_41], %83 {strides = array<i32>} : memref<16x32xf32, #tpu.memory_space<vmem>>, vector<1x32xf32>,
    %c9 = arith.constant 9 : index
    %85 = memref.load %arg0[%c9] : memref<16xi32, #tpu.memory_space<smem>>
    %86 = arith.index_cast %85 : i32 to index
    %c0_42 = arith.constant 0 : index
    %c0_43 = arith.constant 0 : index
    %87 = vector.load %arg1[%86, %c0_42, %c0_43] : memref<100x1x32xf32, #tpu.memory_space<vmem>>, vector<1x1x32xf32>
    %88 = vector.shape_cast %87 : vector<1x1x32xf32> to vector<1x32xf32>
    %c9_44 = arith.constant 9 : index
    %c0_45 = arith.constant 0 : index
    %89 = vector.load %arg6[%c9_44, %c0_45] : memref<16x32xf32, #tpu.memory_space<vmem>>, vector<1x32xf32>
    tpu.vector_store %arg6[%c9_44, %c0_45], %88 {strides = array<i32>} : memref<16x32xf32, #tpu.memory_space<vmem>>, vector<1x32xf32>,
    %c10 = arith.constant 10 : index
    %90 = memref.load %arg0[%c10] : memref<16xi32, #tpu.memory_space<smem>>
    %91 = arith.index_cast %90 : i32 to index
    %c0_46 = arith.constant 0 : index
    %c0_47 = arith.constant 0 : index
    %92 = vector.load %arg1[%91, %c0_46, %c0_47] : memref<100x1x32xf32, #tpu.memory_space<vmem>>, vector<1x1x32xf32>
    %93 = vector.shape_cast %92 : vector<1x1x32xf32> to vector<1x32xf32>
    %c10_48 = arith.constant 10 : index
    %c0_49 = arith.constant 0 : index
    %94 = vector.load %arg6[%c10_48, %c0_49] : memref<16x32xf32, #tpu.memory_space<vmem>>, vector<1x32xf32>
    tpu.vector_store %arg6[%c10_48, %c0_49], %93 {strides = array<i32>} : memref<16x32xf32, #tpu.memory_space<vmem>>, vector<1x32xf32>,
    %c11 = arith.constant 11 : index
    %95 = memref.load %arg0[%c11] : memref<16xi32, #tpu.memory_space<smem>>
    %96 = arith.index_cast %95 : i32 to index
    %c0_50 = arith.constant 0 : index
    %c0_51 = arith.constant 0 : index
    %97 = vector.load %arg1[%96, %c0_50, %c0_51] : memref<100x1x32xf32, #tpu.memory_space<vmem>>, vector<1x1x32xf32>
    %98 = vector.shape_cast %97 : vector<1x1x32xf32> to vector<1x32xf32>
    %c11_52 = arith.constant 11 : index
    %c0_53 = arith.constant 0 : index
    %99 = vector.load %arg6[%c11_52, %c0_53] : memref<16x32xf32, #tpu.memory_space<vmem>>, vector<1x32xf32>
    tpu.vector_store %arg6[%c11_52, %c0_53], %98 {strides = array<i32>} : memref<16x32xf32, #tpu.memory_space<vmem>>, vector<1x32xf32>,
    %c12 = arith.constant 12 : index
    %100 = memref.load %arg0[%c12] : memref<16xi32, #tpu.memory_space<smem>>
    %101 = arith.index_cast %100 : i32 to index
    %c0_54 = arith.constant 0 : index
    %c0_55 = arith.constant 0 : index
    %102 = vector.load %arg1[%101, %c0_54, %c0_55] : memref<100x1x32xf32, #tpu.memory_space<vmem>>, vector<1x1x32xf32>
    %103 = vector.shape_cast %102 : vector<1x1x32xf32> to vector<1x32xf32>
    %c12_56 = arith.constant 12 : index
    %c0_57 = arith.constant 0 : index
    %104 = vector.load %arg6[%c12_56, %c0_57] : memref<16x32xf32, #tpu.memory_space<vmem>>, vector<1x32xf32>
    tpu.vector_store %arg6[%c12_56, %c0_57], %103 {strides = array<i32>} : memref<16x32xf32, #tpu.memory_space<vmem>>, vector<1x32xf32>,
    %c13 = arith.constant 13 : index
    %105 = memref.load %arg0[%c13] : memref<16xi32, #tpu.memory_space<smem>>
    %106 = arith.index_cast %105 : i32 to index
    %c0_58 = arith.constant 0 : index
    %c0_59 = arith.constant 0 : index
    %107 = vector.load %arg1[%106, %c0_58, %c0_59] : memref<100x1x32xf32, #tpu.memory_space<vmem>>, vector<1x1x32xf32>
    %108 = vector.shape_cast %107 : vector<1x1x32xf32> to vector<1x32xf32>
    %c13_60 = arith.constant 13 : index
    %c0_61 = arith.constant 0 : index
    %109 = vector.load %arg6[%c13_60, %c0_61] : memref<16x32xf32, #tpu.memory_space<vmem>>, vector<1x32xf32>
    tpu.vector_store %arg6[%c13_60, %c0_61], %108 {strides = array<i32>} : memref<16x32xf32, #tpu.memory_space<vmem>>, vector<1x32xf32>,
    %c14 = arith.constant 14 : index
    %110 = memref.load %arg0[%c14] : memref<16xi32, #tpu.memory_space<smem>>
    %111 = arith.index_cast %110 : i32 to index
    %c0_62 = arith.constant 0 : index
    %c0_63 = arith.constant 0 : index
    %112 = vector.load %arg1[%111, %c0_62, %c0_63] : memref<100x1x32xf32, #tpu.memory_space<vmem>>, vector<1x1x32xf32>
    %113 = vector.shape_cast %112 : vector<1x1x32xf32> to vector<1x32xf32>
    %c14_64 = arith.constant 14 : index
    %c0_65 = arith.constant 0 : index
    %114 = vector.load %arg6[%c14_64, %c0_65] : memref<16x32xf32, #tpu.memory_space<vmem>>, vector<1x32xf32>
    tpu.vector_store %arg6[%c14_64, %c0_65], %113 {strides = array<i32>} : memref<16x32xf32, #tpu.memory_space<vmem>>, vector<1x32xf32>,
    %c15 = arith.constant 15 : index
    %115 = memref.load %arg0[%c15] : memref<16xi32, #tpu.memory_space<smem>>
    %116 = arith.index_cast %115 : i32 to index
    %c0_66 = arith.constant 0 : index
    %c0_67 = arith.constant 0 : index
    %117 = vector.load %arg1[%116, %c0_66, %c0_67] : memref<100x1x32xf32, #tpu.memory_space<vmem>>, vector<1x1x32xf32>
    %118 = vector.shape_cast %117 : vector<1x1x32xf32> to vector<1x32xf32>
    %c15_68 = arith.constant 15 : index
    %c0_69 = arith.constant 0 : index
    %119 = vector.load %arg6[%c15_68, %c0_69] : memref<16x32xf32, #tpu.memory_space<vmem>>, vector<1x32xf32>
    tpu.vector_store %arg6[%c15_68, %c0_69], %118 {strides = array<i32>} : memref<16x32xf32, #tpu.memory_space<vmem>>, vector<1x32xf32>,
    %c0_70 = arith.constant 0 : index
    %c0_71 = arith.constant 0 : index
    %120 = vector.load %arg6[%c0_70, %c0_71] : memref<16x32xf32, #tpu.memory_space<vmem>>, vector<16x32xf32>
    %c0_72 = arith.constant 0 : index
    %c0_73 = arith.constant 0 : index
    %121 = vector.load %arg2[%c0_72, %c0_73] : memref<16x32xf32, #tpu.memory_space<vmem>>, vector<16x32xf32>
    %122 = arith.addf %120, %121 : vector<16x32xf32>
    %cst = arith.constant dense<0.000000e+00> : vector<16xf32>
    %123 = vector.multi_reduction <add>, %122, %cst [1] : vector<16x32xf32> to vector<16xf32>
    %124 = vector.shape_cast %123 : vector<16xf32> to vector<16x1xf32>
    %cst_74 = arith.constant 3.200000e+01 : f32
    %125 = vector.broadcast %cst_74 : f32 to vector<16x1xf32>
    %126 = arith.divf %124, %125 : vector<16x1xf32>
    %127 = arith.mulf %122, %122 : vector<16x32xf32>
    %cst_75 = arith.constant dense<0.000000e+00> : vector<16xf32>
    %128 = vector.multi_reduction <add>, %127, %cst_75 [1] : vector<16x32xf32> to vector<16xf32>
    %129 = vector.shape_cast %128 : vector<16xf32> to vector<16x1xf32>
    %cst_76 = arith.constant 3.200000e+01 : f32
    %130 = vector.broadcast %cst_76 : f32 to vector<16x1xf32>
    %131 = arith.divf %129, %130 : vector<16x1xf32>
    %132 = arith.mulf %126, %126 : vector<16x1xf32>
    %133 = arith.subf %131, %132 : vector<16x1xf32>
    %134 = vector.broadcast %126 : vector<16x1xf32> to vector<16x32xf32>
    %135 = arith.subf %122, %134 : vector<16x32xf32>
    %cst_77 = arith.constant 9.99999996E-13 : f32
    %136 = vector.broadcast %cst_77 : f32 to vector<16x1xf32>
    %137 = arith.addf %133, %136 : vector<16x1xf32>
    %138 = math.rsqrt %137 : vector<16x1xf32>
    %139 = vector.broadcast %138 : vector<16x1xf32> to vector<16x32xf32>
    %140 = arith.mulf %135, %139 : vector<16x32xf32>
    %141 = arith.mulf %140, %36 : vector<16x32xf32>
    %142 = arith.addf %141, %39 : vector<16x32xf32>
    %c0_78 = arith.constant 0 : index
    %c0_79 = arith.constant 0 : index
    %143 = vector.load %arg6[%c0_78, %c0_79] : memref<16x32xf32, #tpu.memory_space<vmem>>, vector<16x32xf32>
    tpu.vector_store %arg6[%c0_78, %c0_79], %142 {strides = array<i32>} : memref<16x32xf32, #tpu.memory_space<vmem>>, vector<16x32xf32>,
    %144 = arith.truncf %142 : vector<16x32xf32> to vector<16x32xbf16>
    %cst_80 = arith.constant dense<0.000000e+00> : vector<16x96xf32>
    %145 = tpu.matmul %144, %1, %cst_80 {dimension_numbers = #tpu.dot_dimension_numbers<[1], [0], [0], [1], [0, 0, 1, 1], [], []>} : vector<16x32xbf16>, vector<32x96xbf16>, vector<16x96xf32> -> vector<16x96xf32>
    %146 = arith.addf %145, %12 : vector<16x96xf32>
    %147 = vector.extract_strided_slice %146 {offsets = [0, 0], sizes = [16, 32], strides = [1, 1]} : vector<16x96xf32> to vector<16x32xf32>
    %148 = vector.shape_cast %147 : vector<16x32xf32> to vector<2x8x32xf32>
    %149 = vector.extract_strided_slice %146 {offsets = [0, 32], sizes = [16, 32], strides = [1, 1]} : vector<16x96xf32> to vector<16x32xf32>
    %150 = vector.shape_cast %149 : vector<16x32xf32> to vector<2x8x32xf32>
    %151 = vector.extract_strided_slice %146 {offsets = [0, 64], sizes = [16, 32], strides = [1, 1]} : vector<16x96xf32> to vector<16x32xf32>
    %152 = vector.shape_cast %151 : vector<16x32xf32> to vector<2x8x32xf32>
    %153 = arith.truncf %152 : vector<2x8x32xf32> to vector<2x8x32xbf16>
    %154 = vector.extract_strided_slice %148 {offsets = [0, 0, 0], sizes = [2, 8, 8], strides = [1, 1, 1]} : vector<2x8x32xf32> to vector<2x8x8xf32>
    %155 = arith.truncf %154 : vector<2x8x8xf32> to vector<2x8x8xbf16>
    %156 = vector.extract_strided_slice %150 {offsets = [0, 0, 0], sizes = [2, 8, 8], strides = [1, 1, 1]} : vector<2x8x32xf32> to vector<2x8x8xf32>
    %157 = arith.truncf %156 : vector<2x8x8xf32> to vector<2x8x8xbf16>
    %158 = vector.extract_strided_slice %153 {offsets = [0, 0, 0], sizes = [2, 8, 8], strides = [1, 1, 1]} : vector<2x8x32xbf16> to vector<2x8x8xbf16>
    "tpu.trace_start"() <{level = 10 : i32, message = "bqd,bkd->bqk"}> : () -> ()
    %cst_81 = arith.constant dense<0.000000e+00> : vector<2x8x8xf32>
    %159 = tpu.matmul %155, %157, %cst_81 {dimension_numbers = #tpu.dot_dimension_numbers<[2], [2], [1], [1], [0, 0, 0, 1, 1, 1], [0], [0]>} : vector<2x8x8xbf16>, vector<2x8x8xbf16>, vector<2x8x8xf32> -> vector<2x8x8xf32>
    "tpu.trace_stop"() : () -> ()
    %cst_82 = arith.constant dense<0xFF800000> : vector<2x8xf32>
    %160 = vector.multi_reduction <maximumf>, %159, %cst_82 [2] : vector<2x8x8xf32> to vector<2x8xf32>
    %161 = vector.shape_cast %160 : vector<2x8xf32> to vector<2x8x1xf32>
    %162 = vector.broadcast %161 : vector<2x8x1xf32> to vector<2x8x8xf32>
    %163 = arith.subf %159, %162 : vector<2x8x8xf32>
    %164 = math.exp %163 : vector<2x8x8xf32>
    %cst_83 = arith.constant dense<0.000000e+00> : vector<2x8xf32>
    %165 = vector.multi_reduction <add>, %164, %cst_83 [2] : vector<2x8x8xf32> to vector<2x8xf32>
    %166 = vector.shape_cast %165 : vector<2x8xf32> to vector<2x8x1xf32>
    %167 = tpu.reciprocal %166 {approx = true} : vector<2x8x1xf32> -> vector<2x8x1xf32>
    %168 = vector.broadcast %167 : vector<2x8x1xf32> to vector<2x8x8xf32>
    %169 = arith.mulf %164, %168 : vector<2x8x8xf32>
    %170 = arith.truncf %169 : vector<2x8x8xf32> to vector<2x8x8xbf16>
    "tpu.trace_start"() <{level = 10 : i32, message = "bqk,bkd->bqd"}> : () -> ()
    %cst_84 = arith.constant dense<0.000000e+00> : vector<2x8x8xf32>
    %171 = tpu.matmul %170, %158, %cst_84 {dimension_numbers = #tpu.dot_dimension_numbers<[2], [1], [1], [2], [0, 0, 0, 1, 1, 2], [0], [0]>} : vector<2x8x8xbf16>, vector<2x8x8xbf16>, vector<2x8x8xf32> -> vector<2x8x8xf32>
    "tpu.trace_stop"() : () -> ()
    %172 = vector.shape_cast %171 : vector<2x8x8xf32> to vector<16x8xf32>
    %173 = arith.truncf %172 : vector<16x8xf32> to vector<16x8xbf16>
    %cst_85 = arith.constant dense<0.000000e+00> : vector<16x32xf32>
    %174 = tpu.matmul %173, %5, %cst_85 {dimension_numbers = #tpu.dot_dimension_numbers<[1], [0], [0], [1], [0, 0, 1, 1], [], []>} : vector<16x8xbf16>, vector<8x32xbf16>, vector<16x32xf32> -> vector<16x32xf32>
    %175 = vector.extract_strided_slice %148 {offsets = [0, 0, 8], sizes = [2, 8, 8], strides = [1, 1, 1]} : vector<2x8x32xf32> to vector<2x8x8xf32>
    %176 = arith.truncf %175 : vector<2x8x8xf32> to vector<2x8x8xbf16>
    %177 = vector.extract_strided_slice %150 {offsets = [0, 0, 8], sizes = [2, 8, 8], strides = [1, 1, 1]} : vector<2x8x32xf32> to vector<2x8x8xf32>
    %178 = arith.truncf %177 : vector<2x8x8xf32> to vector<2x8x8xbf16>
    %179 = vector.extract_strided_slice %153 {offsets = [0, 0, 8], sizes = [2, 8, 8], strides = [1, 1, 1]} : vector<2x8x32xbf16> to vector<2x8x8xbf16>
    "tpu.trace_start"() <{level = 10 : i32, message = "bqd,bkd->bqk"}> : () -> ()
    %cst_86 = arith.constant dense<0.000000e+00> : vector<2x8x8xf32>
    %180 = tpu.matmul %176, %178, %cst_86 {dimension_numbers = #tpu.dot_dimension_numbers<[2], [2], [1], [1], [0, 0, 0, 1, 1, 1], [0], [0]>} : vector<2x8x8xbf16>, vector<2x8x8xbf16>, vector<2x8x8xf32> -> vector<2x8x8xf32>
    "tpu.trace_stop"() : () -> ()
    %cst_87 = arith.constant dense<0xFF800000> : vector<2x8xf32>
    %181 = vector.multi_reduction <maximumf>, %180, %cst_87 [2] : vector<2x8x8xf32> to vector<2x8xf32>
    %182 = vector.shape_cast %181 : vector<2x8xf32> to vector<2x8x1xf32>
    %183 = vector.broadcast %182 : vector<2x8x1xf32> to vector<2x8x8xf32>
    %184 = arith.subf %180, %183 : vector<2x8x8xf32>
    %185 = math.exp %184 : vector<2x8x8xf32>
    %cst_88 = arith.constant dense<0.000000e+00> : vector<2x8xf32>
    %186 = vector.multi_reduction <add>, %185, %cst_88 [2] : vector<2x8x8xf32> to vector<2x8xf32>
    %187 = vector.shape_cast %186 : vector<2x8xf32> to vector<2x8x1xf32>
    %188 = tpu.reciprocal %187 {approx = true} : vector<2x8x1xf32> -> vector<2x8x1xf32>
    %189 = vector.broadcast %188 : vector<2x8x1xf32> to vector<2x8x8xf32>
    %190 = arith.mulf %185, %189 : vector<2x8x8xf32>
    %191 = arith.truncf %190 : vector<2x8x8xf32> to vector<2x8x8xbf16>
    "tpu.trace_start"() <{level = 10 : i32, message = "bqk,bkd->bqd"}> : () -> ()
    %cst_89 = arith.constant dense<0.000000e+00> : vector<2x8x8xf32>
    %192 = tpu.matmul %191, %179, %cst_89 {dimension_numbers = #tpu.dot_dimension_numbers<[2], [1], [1], [2], [0, 0, 0, 1, 1, 2], [0], [0]>} : vector<2x8x8xbf16>, vector<2x8x8xbf16>, vector<2x8x8xf32> -> vector<2x8x8xf32>
    "tpu.trace_stop"() : () -> ()
    %193 = vector.shape_cast %192 : vector<2x8x8xf32> to vector<16x8xf32>
    %194 = arith.truncf %193 : vector<16x8xf32> to vector<16x8xbf16>
    %cst_90 = arith.constant dense<0.000000e+00> : vector<16x32xf32>
    %195 = tpu.matmul %194, %6, %cst_90 {dimension_numbers = #tpu.dot_dimension_numbers<[1], [0], [0], [1], [0, 0, 1, 1], [], []>} : vector<16x8xbf16>, vector<8x32xbf16>, vector<16x32xf32> -> vector<16x32xf32>
    %196 = arith.addf %174, %195 : vector<16x32xf32>
    %197 = vector.extract_strided_slice %148 {offsets = [0, 0, 16], sizes = [2, 8, 8], strides = [1, 1, 1]} : vector<2x8x32xf32> to vector<2x8x8xf32>
    %198 = arith.truncf %197 : vector<2x8x8xf32> to vector<2x8x8xbf16>
    %199 = vector.extract_strided_slice %150 {offsets = [0, 0, 16], sizes = [2, 8, 8], strides = [1, 1, 1]} : vector<2x8x32xf32> to vector<2x8x8xf32>
    %200 = arith.truncf %199 : vector<2x8x8xf32> to vector<2x8x8xbf16>
    %201 = vector.extract_strided_slice %153 {offsets = [0, 0, 16], sizes = [2, 8, 8], strides = [1, 1, 1]} : vector<2x8x32xbf16> to vector<2x8x8xbf16>
    "tpu.trace_start"() <{level = 10 : i32, message = "bqd,bkd->bqk"}> : () -> ()
    %cst_91 = arith.constant dense<0.000000e+00> : vector<2x8x8xf32>
    %202 = tpu.matmul %198, %200, %cst_91 {dimension_numbers = #tpu.dot_dimension_numbers<[2], [2], [1], [1], [0, 0, 0, 1, 1, 1], [0], [0]>} : vector<2x8x8xbf16>, vector<2x8x8xbf16>, vector<2x8x8xf32> -> vector<2x8x8xf32>
    "tpu.trace_stop"() : () -> ()
    %cst_92 = arith.constant dense<0xFF800000> : vector<2x8xf32>
    %203 = vector.multi_reduction <maximumf>, %202, %cst_92 [2] : vector<2x8x8xf32> to vector<2x8xf32>
    %204 = vector.shape_cast %203 : vector<2x8xf32> to vector<2x8x1xf32>
    %205 = vector.broadcast %204 : vector<2x8x1xf32> to vector<2x8x8xf32>
    %206 = arith.subf %202, %205 : vector<2x8x8xf32>
    %207 = math.exp %206 : vector<2x8x8xf32>
    %cst_93 = arith.constant dense<0.000000e+00> : vector<2x8xf32>
    %208 = vector.multi_reduction <add>, %207, %cst_93 [2] : vector<2x8x8xf32> to vector<2x8xf32>
    %209 = vector.shape_cast %208 : vector<2x8xf32> to vector<2x8x1xf32>
    %210 = tpu.reciprocal %209 {approx = true} : vector<2x8x1xf32> -> vector<2x8x1xf32>
    %211 = vector.broadcast %210 : vector<2x8x1xf32> to vector<2x8x8xf32>
    %212 = arith.mulf %207, %211 : vector<2x8x8xf32>
    %213 = arith.truncf %212 : vector<2x8x8xf32> to vector<2x8x8xbf16>
    "tpu.trace_start"() <{level = 10 : i32, message = "bqk,bkd->bqd"}> : () -> ()
    %cst_94 = arith.constant dense<0.000000e+00> : vector<2x8x8xf32>
    %214 = tpu.matmul %213, %201, %cst_94 {dimension_numbers = #tpu.dot_dimension_numbers<[2], [1], [1], [2], [0, 0, 0, 1, 1, 2], [0], [0]>} : vector<2x8x8xbf16>, vector<2x8x8xbf16>, vector<2x8x8xf32> -> vector<2x8x8xf32>
    "tpu.trace_stop"() : () -> ()
    %215 = vector.shape_cast %214 : vector<2x8x8xf32> to vector<16x8xf32>
    %216 = arith.truncf %215 : vector<16x8xf32> to vector<16x8xbf16>
    %cst_95 = arith.constant dense<0.000000e+00> : vector<16x32xf32>
    %217 = tpu.matmul %216, %7, %cst_95 {dimension_numbers = #tpu.dot_dimension_numbers<[1], [0], [0], [1], [0, 0, 1, 1], [], []>} : vector<16x8xbf16>, vector<8x32xbf16>, vector<16x32xf32> -> vector<16x32xf32>
    %218 = arith.addf %196, %217 : vector<16x32xf32>
    %219 = vector.extract_strided_slice %148 {offsets = [0, 0, 24], sizes = [2, 8, 8], strides = [1, 1, 1]} : vector<2x8x32xf32> to vector<2x8x8xf32>
    %220 = arith.truncf %219 : vector<2x8x8xf32> to vector<2x8x8xbf16>
    %221 = vector.extract_strided_slice %150 {offsets = [0, 0, 24], sizes = [2, 8, 8], strides = [1, 1, 1]} : vector<2x8x32xf32> to vector<2x8x8xf32>
    %222 = arith.truncf %221 : vector<2x8x8xf32> to vector<2x8x8xbf16>
    %223 = vector.extract_strided_slice %153 {offsets = [0, 0, 24], sizes = [2, 8, 8], strides = [1, 1, 1]} : vector<2x8x32xbf16> to vector<2x8x8xbf16>
    "tpu.trace_start"() <{level = 10 : i32, message = "bqd,bkd->bqk"}> : () -> ()
    %cst_96 = arith.constant dense<0.000000e+00> : vector<2x8x8xf32>
    %224 = tpu.matmul %220, %222, %cst_96 {dimension_numbers = #tpu.dot_dimension_numbers<[2], [2], [1], [1], [0, 0, 0, 1, 1, 1], [0], [0]>} : vector<2x8x8xbf16>, vector<2x8x8xbf16>, vector<2x8x8xf32> -> vector<2x8x8xf32>
    "tpu.trace_stop"() : () -> ()
    %cst_97 = arith.constant dense<0xFF800000> : vector<2x8xf32>
    %225 = vector.multi_reduction <maximumf>, %224, %cst_97 [2] : vector<2x8x8xf32> to vector<2x8xf32>
    %226 = vector.shape_cast %225 : vector<2x8xf32> to vector<2x8x1xf32>
    %227 = vector.broadcast %226 : vector<2x8x1xf32> to vector<2x8x8xf32>
    %228 = arith.subf %224, %227 : vector<2x8x8xf32>
    %229 = math.exp %228 : vector<2x8x8xf32>
    %cst_98 = arith.constant dense<0.000000e+00> : vector<2x8xf32>
    %230 = vector.multi_reduction <add>, %229, %cst_98 [2] : vector<2x8x8xf32> to vector<2x8xf32>
    %231 = vector.shape_cast %230 : vector<2x8xf32> to vector<2x8x1xf32>
    %232 = tpu.reciprocal %231 {approx = true} : vector<2x8x1xf32> -> vector<2x8x1xf32>
    %233 = vector.broadcast %232 : vector<2x8x1xf32> to vector<2x8x8xf32>
    %234 = arith.mulf %229, %233 : vector<2x8x8xf32>
    %235 = arith.truncf %234 : vector<2x8x8xf32> to vector<2x8x8xbf16>
    "tpu.trace_start"() <{level = 10 : i32, message = "bqk,bkd->bqd"}> : () -> ()
    %cst_99 = arith.constant dense<0.000000e+00> : vector<2x8x8xf32>
    %236 = tpu.matmul %235, %223, %cst_99 {dimension_numbers = #tpu.dot_dimension_numbers<[2], [1], [1], [2], [0, 0, 0, 1, 1, 2], [0], [0]>} : vector<2x8x8xbf16>, vector<2x8x8xbf16>, vector<2x8x8xf32> -> vector<2x8x8xf32>
    "tpu.trace_stop"() : () -> ()
    %237 = vector.shape_cast %236 : vector<2x8x8xf32> to vector<16x8xf32>
    %238 = arith.truncf %237 : vector<16x8xf32> to vector<16x8xbf16>
    %cst_100 = arith.constant dense<0.000000e+00> : vector<16x32xf32>
    %239 = tpu.matmul %238, %8, %cst_100 {dimension_numbers = #tpu.dot_dimension_numbers<[1], [0], [0], [1], [0, 0, 1, 1], [], []>} : vector<16x8xbf16>, vector<8x32xbf16>, vector<16x32xf32> -> vector<16x32xf32>
    %240 = arith.addf %218, %239 : vector<16x32xf32>
    %241 = arith.addf %240, %15 : vector<16x32xf32>
    %242 = arith.addf %241, %142 : vector<16x32xf32>
    %cst_101 = arith.constant dense<0.000000e+00> : vector<16xf32>
    %243 = vector.multi_reduction <add>, %242, %cst_101 [1] : vector<16x32xf32> to vector<16xf32>
    %244 = vector.shape_cast %243 : vector<16xf32> to vector<16x1xf32>
    %cst_102 = arith.constant 3.200000e+01 : f32
    %245 = vector.broadcast %cst_102 : f32 to vector<16x1xf32>
    %246 = arith.divf %244, %245 : vector<16x1xf32>
    %247 = arith.mulf %242, %242 : vector<16x32xf32>
    %cst_103 = arith.constant dense<0.000000e+00> : vector<16xf32>
    %248 = vector.multi_reduction <add>, %247, %cst_103 [1] : vector<16x32xf32> to vector<16xf32>
    %249 = vector.shape_cast %248 : vector<16xf32> to vector<16x1xf32>
    %cst_104 = arith.constant 3.200000e+01 : f32
    %250 = vector.broadcast %cst_104 : f32 to vector<16x1xf32>
    %251 = arith.divf %249, %250 : vector<16x1xf32>
    %252 = arith.mulf %246, %246 : vector<16x1xf32>
    %253 = arith.subf %251, %252 : vector<16x1xf32>
    %254 = vector.broadcast %246 : vector<16x1xf32> to vector<16x32xf32>
    %255 = arith.subf %242, %254 : vector<16x32xf32>
    %cst_105 = arith.constant 9.99999996E-13 : f32
    %256 = vector.broadcast %cst_105 : f32 to vector<16x1xf32>
    %257 = arith.addf %253, %256 : vector<16x1xf32>
    %258 = math.rsqrt %257 : vector<16x1xf32>
    %259 = vector.broadcast %258 : vector<16x1xf32> to vector<16x32xf32>
    %260 = arith.mulf %255, %259 : vector<16x32xf32>
    %261 = arith.mulf %260, %24 : vector<16x32xf32>
    %262 = arith.addf %261, %27 : vector<16x32xf32>
    %263 = arith.truncf %262 : vector<16x32xf32> to vector<16x32xbf16>
    %cst_106 = arith.constant dense<0.000000e+00> : vector<16x64xf32>
    %264 = tpu.matmul %263, %3, %cst_106 {dimension_numbers = #tpu.dot_dimension_numbers<[1], [0], [0], [1], [0, 0, 1, 1], [], []>} : vector<16x32xbf16>, vector<32x64xbf16>, vector<16x64xf32> -> vector<16x64xf32>
    %265 = arith.addf %264, %18 : vector<16x64xf32>
    %cst_107 = arith.constant 5.000000e-01 : f32
    %266 = vector.broadcast %cst_107 : f32 to vector<16x64xf32>
    %267 = arith.mulf %266, %265 : vector<16x64xf32>
    %cst_108 = arith.constant 4.471500e-02 : f32
    %268 = vector.broadcast %cst_108 : f32 to vector<16x64xf32>
    %269 = arith.mulf %268, %265 : vector<16x64xf32>
    %270 = arith.mulf %269, %265 : vector<16x64xf32>
    %271 = arith.mulf %270, %265 : vector<16x64xf32>
    %272 = arith.addf %265, %271 : vector<16x64xf32>
    %cst_109 = arith.constant 0.797884583 : f32
    %273 = vector.broadcast %cst_109 : f32 to vector<16x64xf32>
    %274 = arith.mulf %273, %272 : vector<16x64xf32>
    %275 = math.tanh %274 : vector<16x64xf32>
    %cst_110 = arith.constant 1.000000e+00 : f32
    %276 = vector.broadcast %cst_110 : f32 to vector<16x64xf32>
    %277 = arith.addf %276, %275 : vector<16x64xf32>
    %278 = arith.mulf %267, %277 : vector<16x64xf32>
    %279 = arith.truncf %278 : vector<16x64xf32> to vector<16x64xbf16>
    %cst_111 = arith.constant dense<0.000000e+00> : vector<16x32xf32>
    %280 = tpu.matmul %279, %4, %cst_111 {dimension_numbers = #tpu.dot_dimension_numbers<[1], [0], [0], [1], [0, 0, 1, 1], [], []>} : vector<16x64xbf16>, vector<64x32xbf16>, vector<16x32xf32> -> vector<16x32xf32>
    %281 = arith.addf %280, %21 : vector<16x32xf32>
    %282 = arith.addf %281, %262 : vector<16x32xf32>
    %cst_112 = arith.constant dense<0.000000e+00> : vector<16xf32>
    %283 = vector.multi_reduction <add>, %282, %cst_112 [1] : vector<16x32xf32> to vector<16xf32>
    %284 = vector.shape_cast %283 : vector<16xf32> to vector<16x1xf32>
    %cst_113 = arith.constant 3.200000e+01 : f32
    %285 = vector.broadcast %cst_113 : f32 to vector<16x1xf32>
    %286 = arith.divf %284, %285 : vector<16x1xf32>
    %287 = arith.mulf %282, %282 : vector<16x32xf32>
    %cst_114 = arith.constant dense<0.000000e+00> : vector<16xf32>
    %288 = vector.multi_reduction <add>, %287, %cst_114 [1] : vector<16x32xf32> to vector<16xf32>
    %289 = vector.shape_cast %288 : vector<16xf32> to vector<16x1xf32>
    %cst_115 = arith.constant 3.200000e+01 : f32
    %290 = vector.broadcast %cst_115 : f32 to vector<16x1xf32>
    %291 = arith.divf %289, %290 : vector<16x1xf32>
    %292 = arith.mulf %286, %286 : vector<16x1xf32>
    %293 = arith.subf %291, %292 : vector<16x1xf32>
    %294 = vector.broadcast %286 : vector<16x1xf32> to vector<16x32xf32>
    %295 = arith.subf %282, %294 : vector<16x32xf32>
    %cst_116 = arith.constant 9.99999996E-13 : f32
    %296 = vector.broadcast %cst_116 : f32 to vector<16x1xf32>
    %297 = arith.addf %293, %296 : vector<16x1xf32>
    %298 = math.rsqrt %297 : vector<16x1xf32>
    %299 = vector.broadcast %298 : vector<16x1xf32> to vector<16x32xf32>
    %300 = arith.mulf %295, %299 : vector<16x32xf32>
    %301 = arith.mulf %300, %30 : vector<16x32xf32>
    %302 = arith.addf %301, %33 : vector<16x32xf32>
    %c0_117 = arith.constant 0 : index
    %c0_118 = arith.constant 0 : index
    %303 = vector.load %arg7[%c0_117, %c0_118] : memref<16x32xf32, #tpu.memory_space<vmem>>, vector<16x32xf32>
    tpu.vector_store %arg7[%c0_117, %c0_118], %302 {strides = array<i32>} : memref<16x32xf32, #tpu.memory_space<vmem>>, vector<16x32xf32>,
    %304 = arith.truncf %302 : vector<16x32xf32> to vector<16x32xbf16>
    %cst_119 = arith.constant dense<0.000000e+00> : vector<16x96xf32>
    %305 = tpu.matmul %304, %1, %cst_119 {dimension_numbers = #tpu.dot_dimension_numbers<[1], [0], [0], [1], [0, 0, 1, 1], [], []>} : vector<16x32xbf16>, vector<32x96xbf16>, vector<16x96xf32> -> vector<16x96xf32>
    %306 = arith.addf %305, %12 : vector<16x96xf32>
    %307 = vector.extract_strided_slice %306 {offsets = [0, 0], sizes = [16, 32], strides = [1, 1]} : vector<16x96xf32> to vector<16x32xf32>
    %308 = vector.shape_cast %307 : vector<16x32xf32> to vector<2x8x32xf32>
    %309 = vector.extract_strided_slice %306 {offsets = [0, 32], sizes = [16, 32], strides = [1, 1]} : vector<16x96xf32> to vector<16x32xf32>
    %310 = vector.shape_cast %309 : vector<16x32xf32> to vector<2x8x32xf32>
    %311 = vector.extract_strided_slice %306 {offsets = [0, 64], sizes = [16, 32], strides = [1, 1]} : vector<16x96xf32> to vector<16x32xf32>
    %312 = vector.shape_cast %311 : vector<16x32xf32> to vector<2x8x32xf32>
    %313 = arith.truncf %312 : vector<2x8x32xf32> to vector<2x8x32xbf16>
    %314 = vector.extract_strided_slice %308 {offsets = [0, 0, 0], sizes = [2, 8, 8], strides = [1, 1, 1]} : vector<2x8x32xf32> to vector<2x8x8xf32>
    %315 = arith.truncf %314 : vector<2x8x8xf32> to vector<2x8x8xbf16>
    %316 = vector.extract_strided_slice %310 {offsets = [0, 0, 0], sizes = [2, 8, 8], strides = [1, 1, 1]} : vector<2x8x32xf32> to vector<2x8x8xf32>
    %317 = arith.truncf %316 : vector<2x8x8xf32> to vector<2x8x8xbf16>
    %318 = vector.extract_strided_slice %313 {offsets = [0, 0, 0], sizes = [2, 8, 8], strides = [1, 1, 1]} : vector<2x8x32xbf16> to vector<2x8x8xbf16>
    "tpu.trace_start"() <{level = 10 : i32, message = "bqd,bkd->bqk"}> : () -> ()
    %cst_120 = arith.constant dense<0.000000e+00> : vector<2x8x8xf32>
    %319 = tpu.matmul %315, %317, %cst_120 {dimension_numbers = #tpu.dot_dimension_numbers<[2], [2], [1], [1], [0, 0, 0, 1, 1, 1], [0], [0]>} : vector<2x8x8xbf16>, vector<2x8x8xbf16>, vector<2x8x8xf32> -> vector<2x8x8xf32>
    "tpu.trace_stop"() : () -> ()
    %cst_121 = arith.constant dense<0xFF800000> : vector<2x8xf32>
    %320 = vector.multi_reduction <maximumf>, %319, %cst_121 [2] : vector<2x8x8xf32> to vector<2x8xf32>
    %321 = vector.shape_cast %320 : vector<2x8xf32> to vector<2x8x1xf32>
    %322 = vector.broadcast %321 : vector<2x8x1xf32> to vector<2x8x8xf32>
    %323 = arith.subf %319, %322 : vector<2x8x8xf32>
    %324 = math.exp %323 : vector<2x8x8xf32>
    %cst_122 = arith.constant dense<0.000000e+00> : vector<2x8xf32>
    %325 = vector.multi_reduction <add>, %324, %cst_122 [2] : vector<2x8x8xf32> to vector<2x8xf32>
    %326 = vector.shape_cast %325 : vector<2x8xf32> to vector<2x8x1xf32>
    %327 = tpu.reciprocal %326 {approx = true} : vector<2x8x1xf32> -> vector<2x8x1xf32>
    %328 = vector.broadcast %327 : vector<2x8x1xf32> to vector<2x8x8xf32>
    %329 = arith.mulf %324, %328 : vector<2x8x8xf32>
    %330 = arith.truncf %329 : vector<2x8x8xf32> to vector<2x8x8xbf16>
    "tpu.trace_start"() <{level = 10 : i32, message = "bqk,bkd->bqd"}> : () -> ()
    %cst_123 = arith.constant dense<0.000000e+00> : vector<2x8x8xf32>
    %331 = tpu.matmul %330, %318, %cst_123 {dimension_numbers = #tpu.dot_dimension_numbers<[2], [1], [1], [2], [0, 0, 0, 1, 1, 2], [0], [0]>} : vector<2x8x8xbf16>, vector<2x8x8xbf16>, vector<2x8x8xf32> -> vector<2x8x8xf32>
    "tpu.trace_stop"() : () -> ()
    %332 = vector.shape_cast %331 : vector<2x8x8xf32> to vector<16x8xf32>
    %333 = arith.truncf %332 : vector<16x8xf32> to vector<16x8xbf16>
    %cst_124 = arith.constant dense<0.000000e+00> : vector<16x32xf32>
    %334 = tpu.matmul %333, %5, %cst_124 {dimension_numbers = #tpu.dot_dimension_numbers<[1], [0], [0], [1], [0, 0, 1, 1], [], []>} : vector<16x8xbf16>, vector<8x32xbf16>, vector<16x32xf32> -> vector<16x32xf32>
    %335 = vector.extract_strided_slice %308 {offsets = [0, 0, 8], sizes = [2, 8, 8], strides = [1, 1, 1]} : vector<2x8x32xf32> to vector<2x8x8xf32>
    %336 = arith.truncf %335 : vector<2x8x8xf32> to vector<2x8x8xbf16>
    %337 = vector.extract_strided_slice %310 {offsets = [0, 0, 8], sizes = [2, 8, 8], strides = [1, 1, 1]} : vector<2x8x32xf32> to vector<2x8x8xf32>
    %338 = arith.truncf %337 : vector<2x8x8xf32> to vector<2x8x8xbf16>
    %339 = vector.extract_strided_slice %313 {offsets = [0, 0, 8], sizes = [2, 8, 8], strides = [1, 1, 1]} : vector<2x8x32xbf16> to vector<2x8x8xbf16>
    "tpu.trace_start"() <{level = 10 : i32, message = "bqd,bkd->bqk"}> : () -> ()
    %cst_125 = arith.constant dense<0.000000e+00> : vector<2x8x8xf32>
    %340 = tpu.matmul %336, %338, %cst_125 {dimension_numbers = #tpu.dot_dimension_numbers<[2], [2], [1], [1], [0, 0, 0, 1, 1, 1], [0], [0]>} : vector<2x8x8xbf16>, vector<2x8x8xbf16>, vector<2x8x8xf32> -> vector<2x8x8xf32>
    "tpu.trace_stop"() : () -> ()
    %cst_126 = arith.constant dense<0xFF800000> : vector<2x8xf32>
    %341 = vector.multi_reduction <maximumf>, %340, %cst_126 [2] : vector<2x8x8xf32> to vector<2x8xf32>
    %342 = vector.shape_cast %341 : vector<2x8xf32> to vector<2x8x1xf32>
    %343 = vector.broadcast %342 : vector<2x8x1xf32> to vector<2x8x8xf32>
    %344 = arith.subf %340, %343 : vector<2x8x8xf32>
    %345 = math.exp %344 : vector<2x8x8xf32>
    %cst_127 = arith.constant dense<0.000000e+00> : vector<2x8xf32>
    %346 = vector.multi_reduction <add>, %345, %cst_127 [2] : vector<2x8x8xf32> to vector<2x8xf32>
    %347 = vector.shape_cast %346 : vector<2x8xf32> to vector<2x8x1xf32>
    %348 = tpu.reciprocal %347 {approx = true} : vector<2x8x1xf32> -> vector<2x8x1xf32>
    %349 = vector.broadcast %348 : vector<2x8x1xf32> to vector<2x8x8xf32>
    %350 = arith.mulf %345, %349 : vector<2x8x8xf32>
    %351 = arith.truncf %350 : vector<2x8x8xf32> to vector<2x8x8xbf16>
    "tpu.trace_start"() <{level = 10 : i32, message = "bqk,bkd->bqd"}> : () -> ()
    %cst_128 = arith.constant dense<0.000000e+00> : vector<2x8x8xf32>
    %352 = tpu.matmul %351, %339, %cst_128 {dimension_numbers = #tpu.dot_dimension_numbers<[2], [1], [1], [2], [0, 0, 0, 1, 1, 2], [0], [0]>} : vector<2x8x8xbf16>, vector<2x8x8xbf16>, vector<2x8x8xf32> -> vector<2x8x8xf32>
    "tpu.trace_stop"() : () -> ()
    %353 = vector.shape_cast %352 : vector<2x8x8xf32> to vector<16x8xf32>
    %354 = arith.truncf %353 : vector<16x8xf32> to vector<16x8xbf16>
    %cst_129 = arith.constant dense<0.000000e+00> : vector<16x32xf32>
    %355 = tpu.matmul %354, %6, %cst_129 {dimension_numbers = #tpu.dot_dimension_numbers<[1], [0], [0], [1], [0, 0, 1, 1], [], []>} : vector<16x8xbf16>, vector<8x32xbf16>, vector<16x32xf32> -> vector<16x32xf32>
    %356 = arith.addf %334, %355 : vector<16x32xf32>
    %357 = vector.extract_strided_slice %308 {offsets = [0, 0, 16], sizes = [2, 8, 8], strides = [1, 1, 1]} : vector<2x8x32xf32> to vector<2x8x8xf32>
    %358 = arith.truncf %357 : vector<2x8x8xf32> to vector<2x8x8xbf16>
    %359 = vector.extract_strided_slice %310 {offsets = [0, 0, 16], sizes = [2, 8, 8], strides = [1, 1, 1]} : vector<2x8x32xf32> to vector<2x8x8xf32>
    %360 = arith.truncf %359 : vector<2x8x8xf32> to vector<2x8x8xbf16>
    %361 = vector.extract_strided_slice %313 {offsets = [0, 0, 16], sizes = [2, 8, 8], strides = [1, 1, 1]} : vector<2x8x32xbf16> to vector<2x8x8xbf16>
    "tpu.trace_start"() <{level = 10 : i32, message = "bqd,bkd->bqk"}> : () -> ()
    %cst_130 = arith.constant dense<0.000000e+00> : vector<2x8x8xf32>
    %362 = tpu.matmul %358, %360, %cst_130 {dimension_numbers = #tpu.dot_dimension_numbers<[2], [2], [1], [1], [0, 0, 0, 1, 1, 1], [0], [0]>} : vector<2x8x8xbf16>, vector<2x8x8xbf16>, vector<2x8x8xf32> -> vector<2x8x8xf32>
    "tpu.trace_stop"() : () -> ()
    %cst_131 = arith.constant dense<0xFF800000> : vector<2x8xf32>
    %363 = vector.multi_reduction <maximumf>, %362, %cst_131 [2] : vector<2x8x8xf32> to vector<2x8xf32>
    %364 = vector.shape_cast %363 : vector<2x8xf32> to vector<2x8x1xf32>
    %365 = vector.broadcast %364 : vector<2x8x1xf32> to vector<2x8x8xf32>
    %366 = arith.subf %362, %365 : vector<2x8x8xf32>
    %367 = math.exp %366 : vector<2x8x8xf32>
    %cst_132 = arith.constant dense<0.000000e+00> : vector<2x8xf32>
    %368 = vector.multi_reduction <add>, %367, %cst_132 [2] : vector<2x8x8xf32> to vector<2x8xf32>
    %369 = vector.shape_cast %368 : vector<2x8xf32> to vector<2x8x1xf32>
    %370 = tpu.reciprocal %369 {approx = true} : vector<2x8x1xf32> -> vector<2x8x1xf32>
    %371 = vector.broadcast %370 : vector<2x8x1xf32> to vector<2x8x8xf32>
    %372 = arith.mulf %367, %371 : vector<2x8x8xf32>
    %373 = arith.truncf %372 : vector<2x8x8xf32> to vector<2x8x8xbf16>
    "tpu.trace_start"() <{level = 10 : i32, message = "bqk,bkd->bqd"}> : () -> ()
    %cst_133 = arith.constant dense<0.000000e+00> : vector<2x8x8xf32>
    %374 = tpu.matmul %373, %361, %cst_133 {dimension_numbers = #tpu.dot_dimension_numbers<[2], [1], [1], [2], [0, 0, 0, 1, 1, 2], [0], [0]>} : vector<2x8x8xbf16>, vector<2x8x8xbf16>, vector<2x8x8xf32> -> vector<2x8x8xf32>
    "tpu.trace_stop"() : () -> ()
    %375 = vector.shape_cast %374 : vector<2x8x8xf32> to vector<16x8xf32>
    %376 = arith.truncf %375 : vector<16x8xf32> to vector<16x8xbf16>
    %cst_134 = arith.constant dense<0.000000e+00> : vector<16x32xf32>
    %377 = tpu.matmul %376, %7, %cst_134 {dimension_numbers = #tpu.dot_dimension_numbers<[1], [0], [0], [1], [0, 0, 1, 1], [], []>} : vector<16x8xbf16>, vector<8x32xbf16>, vector<16x32xf32> -> vector<16x32xf32>
    %378 = arith.addf %356, %377 : vector<16x32xf32>
    %379 = vector.extract_strided_slice %308 {offsets = [0, 0, 24], sizes = [2, 8, 8], strides = [1, 1, 1]} : vector<2x8x32xf32> to vector<2x8x8xf32>
    %380 = arith.truncf %379 : vector<2x8x8xf32> to vector<2x8x8xbf16>
    %381 = vector.extract_strided_slice %310 {offsets = [0, 0, 24], sizes = [2, 8, 8], strides = [1, 1, 1]} : vector<2x8x32xf32> to vector<2x8x8xf32>
    %382 = arith.truncf %381 : vector<2x8x8xf32> to vector<2x8x8xbf16>
    %383 = vector.extract_strided_slice %313 {offsets = [0, 0, 24], sizes = [2, 8, 8], strides = [1, 1, 1]} : vector<2x8x32xbf16> to vector<2x8x8xbf16>
    "tpu.trace_start"() <{level = 10 : i32, message = "bqd,bkd->bqk"}> : () -> ()
    %cst_135 = arith.constant dense<0.000000e+00> : vector<2x8x8xf32>
    %384 = tpu.matmul %380, %382, %cst_135 {dimension_numbers = #tpu.dot_dimension_numbers<[2], [2], [1], [1], [0, 0, 0, 1, 1, 1], [0], [0]>} : vector<2x8x8xbf16>, vector<2x8x8xbf16>, vector<2x8x8xf32> -> vector<2x8x8xf32>
    "tpu.trace_stop"() : () -> ()
    %cst_136 = arith.constant dense<0xFF800000> : vector<2x8xf32>
    %385 = vector.multi_reduction <maximumf>, %384, %cst_136 [2] : vector<2x8x8xf32> to vector<2x8xf32>
    %386 = vector.shape_cast %385 : vector<2x8xf32> to vector<2x8x1xf32>
    %387 = vector.broadcast %386 : vector<2x8x1xf32> to vector<2x8x8xf32>
    %388 = arith.subf %384, %387 : vector<2x8x8xf32>
    %389 = math.exp %388 : vector<2x8x8xf32>
    %cst_137 = arith.constant dense<0.000000e+00> : vector<2x8xf32>
    %390 = vector.multi_reduction <add>, %389, %cst_137 [2] : vector<2x8x8xf32> to vector<2x8xf32>
    %391 = vector.shape_cast %390 : vector<2x8xf32> to vector<2x8x1xf32>
    %392 = tpu.reciprocal %391 {approx = true} : vector<2x8x1xf32> -> vector<2x8x1xf32>
    %393 = vector.broadcast %392 : vector<2x8x1xf32> to vector<2x8x8xf32>
    %394 = arith.mulf %389, %393 : vector<2x8x8xf32>
    %395 = arith.truncf %394 : vector<2x8x8xf32> to vector<2x8x8xbf16>
    "tpu.trace_start"() <{level = 10 : i32, message = "bqk,bkd->bqd"}> : () -> ()
    %cst_138 = arith.constant dense<0.000000e+00> : vector<2x8x8xf32>
    %396 = tpu.matmul %395, %383, %cst_138 {dimension_numbers = #tpu.dot_dimension_numbers<[2], [1], [1], [2], [0, 0, 0, 1, 1, 2], [0], [0]>} : vector<2x8x8xbf16>, vector<2x8x8xbf16>, vector<2x8x8xf32> -> vector<2x8x8xf32>
    "tpu.trace_stop"() : () -> ()
    %397 = vector.shape_cast %396 : vector<2x8x8xf32> to vector<16x8xf32>
    %398 = arith.truncf %397 : vector<16x8xf32> to vector<16x8xbf16>
    %cst_139 = arith.constant dense<0.000000e+00> : vector<16x32xf32>
    %399 = tpu.matmul %398, %8, %cst_139 {dimension_numbers = #tpu.dot_dimension_numbers<[1], [0], [0], [1], [0, 0, 1, 1], [], []>} : vector<16x8xbf16>, vector<8x32xbf16>, vector<16x32xf32> -> vector<16x32xf32>
    %400 = arith.addf %378, %399 : vector<16x32xf32>
    %401 = arith.addf %400, %15 : vector<16x32xf32>
    %402 = arith.addf %401, %302 : vector<16x32xf32>
    %cst_140 = arith.constant dense<0.000000e+00> : vector<16xf32>
    %403 = vector.multi_reduction <add>, %402, %cst_140 [1] : vector<16x32xf32> to vector<16xf32>
    %404 = vector.shape_cast %403 : vector<16xf32> to vector<16x1xf32>
    %cst_141 = arith.constant 3.200000e+01 : f32
    %405 = vector.broadcast %cst_141 : f32 to vector<16x1xf32>
    %406 = arith.divf %404, %405 : vector<16x1xf32>
    %407 = arith.mulf %402, %402 : vector<16x32xf32>
    %cst_142 = arith.constant dense<0.000000e+00> : vector<16xf32>
    %408 = vector.multi_reduction <add>, %407, %cst_142 [1] : vector<16x32xf32> to vector<16xf32>
    %409 = vector.shape_cast %408 : vector<16xf32> to vector<16x1xf32>
    %cst_143 = arith.constant 3.200000e+01 : f32
    %410 = vector.broadcast %cst_143 : f32 to vector<16x1xf32>
    %411 = arith.divf %409, %410 : vector<16x1xf32>
    %412 = arith.mulf %406, %406 : vector<16x1xf32>
    %413 = arith.subf %411, %412 : vector<16x1xf32>
    %414 = vector.broadcast %406 : vector<16x1xf32> to vector<16x32xf32>
    %415 = arith.subf %402, %414 : vector<16x32xf32>
    %cst_144 = arith.constant 9.99999996E-13 : f32
    %416 = vector.broadcast %cst_144 : f32 to vector<16x1xf32>
    %417 = arith.addf %413, %416 : vector<16x1xf32>
    %418 = math.rsqrt %417 : vector<16x1xf32>
    %419 = vector.broadcast %418 : vector<16x1xf32> to vector<16x32xf32>
    %420 = arith.mulf %415, %419 : vector<16x32xf32>
    %421 = arith.mulf %420, %24 : vector<16x32xf32>
    %422 = arith.addf %421, %27 : vector<16x32xf32>
    %423 = arith.truncf %422 : vector<16x32xf32> to vector<16x32xbf16>
    %cst_145 = arith.constant dense<0.000000e+00> : vector<16x64xf32>
    %424 = tpu.matmul %423, %3, %cst_145 {dimension_numbers = #tpu.dot_dimension_numbers<[1], [0], [0], [1], [0, 0, 1, 1], [], []>} : vector<16x32xbf16>, vector<32x64xbf16>, vector<16x64xf32> -> vector<16x64xf32>
    %425 = arith.addf %424, %18 : vector<16x64xf32>
    %cst_146 = arith.constant 5.000000e-01 : f32
    %426 = vector.broadcast %cst_146 : f32 to vector<16x64xf32>
    %427 = arith.mulf %426, %425 : vector<16x64xf32>
    %cst_147 = arith.constant 4.471500e-02 : f32
    %428 = vector.broadcast %cst_147 : f32 to vector<16x64xf32>
    %429 = arith.mulf %428, %425 : vector<16x64xf32>
    %430 = arith.mulf %429, %425 : vector<16x64xf32>
    %431 = arith.mulf %430, %425 : vector<16x64xf32>
    %432 = arith.addf %425, %431 : vector<16x64xf32>
    %cst_148 = arith.constant 0.797884583 : f32
    %433 = vector.broadcast %cst_148 : f32 to vector<16x64xf32>
    %434 = arith.mulf %433, %432 : vector<16x64xf32>
    %435 = math.tanh %434 : vector<16x64xf32>
    %cst_149 = arith.constant 1.000000e+00 : f32
    %436 = vector.broadcast %cst_149 : f32 to vector<16x64xf32>
    %437 = arith.addf %436, %435 : vector<16x64xf32>
    %438 = arith.mulf %427, %437 : vector<16x64xf32>
    %439 = arith.truncf %438 : vector<16x64xf32> to vector<16x64xbf16>
    %cst_150 = arith.constant dense<0.000000e+00> : vector<16x32xf32>
    %440 = tpu.matmul %439, %4, %cst_150 {dimension_numbers = #tpu.dot_dimension_numbers<[1], [0], [0], [1], [0, 0, 1, 1], [], []>} : vector<16x64xbf16>, vector<64x32xbf16>, vector<16x32xf32> -> vector<16x32xf32>
    %441 = arith.addf %440, %21 : vector<16x32xf32>
    %442 = arith.addf %441, %422 : vector<16x32xf32>
    %cst_151 = arith.constant dense<0.000000e+00> : vector<16xf32>
    %443 = vector.multi_reduction <add>, %442, %cst_151 [1] : vector<16x32xf32> to vector<16xf32>
    %444 = vector.shape_cast %443 : vector<16xf32> to vector<16x1xf32>
    %cst_152 = arith.constant 3.200000e+01 : f32
    %445 = vector.broadcast %cst_152 : f32 to vector<16x1xf32>
    %446 = arith.divf %444, %445 : vector<16x1xf32>
    %447 = arith.mulf %442, %442 : vector<16x32xf32>
    %cst_153 = arith.constant dense<0.000000e+00> : vector<16xf32>
    %448 = vector.multi_reduction <add>, %447, %cst_153 [1] : vector<16x32xf32> to vector<16xf32>
    %449 = vector.shape_cast %448 : vector<16xf32> to vector<16x1xf32>
    %cst_154 = arith.constant 3.200000e+01 : f32
    %450 = vector.broadcast %cst_154 : f32 to vector<16x1xf32>
    %451 = arith.divf %449, %450 : vector<16x1xf32>
    %452 = arith.mulf %446, %446 : vector<16x1xf32>
    %453 = arith.subf %451, %452 : vector<16x1xf32>
    %454 = vector.broadcast %446 : vector<16x1xf32> to vector<16x32xf32>
    %455 = arith.subf %442, %454 : vector<16x32xf32>
    %cst_155 = arith.constant 9.99999996E-13 : f32
    %456 = vector.broadcast %cst_155 : f32 to vector<16x1xf32>
    %457 = arith.addf %453, %456 : vector<16x1xf32>
    %458 = math.rsqrt %457 : vector<16x1xf32>
    %459 = vector.broadcast %458 : vector<16x1xf32> to vector<16x32xf32>
    %460 = arith.mulf %455, %459 : vector<16x32xf32>
    %461 = arith.mulf %460, %30 : vector<16x32xf32>
    %462 = arith.addf %461, %33 : vector<16x32xf32>
    %c0_156 = arith.constant 0 : index
    %c0_157 = arith.constant 0 : index
    %463 = vector.load %arg8[%c0_156, %c0_157] : memref<16x32xf32, #tpu.memory_space<vmem>>, vector<16x32xf32>
    tpu.vector_store %arg8[%c0_156, %c0_157], %462 {strides = array<i32>} : memref<16x32xf32, #tpu.memory_space<vmem>>, vector<16x32xf32>,
    return
  }
}

</mosaic_0001>

<llo_original>
// kernel: raw_bert_transformer_forward.1
$region0: #{raw_bert_transformer_forward.1}
  #allocation0 [shape = 'u32[]', space=smem, size = 0x4, offset = 0x4, fixed_abs, tag = 'smem constant byte address 0x4 - core index']
  #allocation1 [shape = 'u32[144,128]{1,0:T(1,128)}', space=vmem, size = 0x12000, scoped, tag = 'internal scratch']
  %s0 = inlined_call_operand.vmem [shape: s32[16], index: 0, kind: input, shape index: {}]
  %s1 = inlined_call_operand.vmem [shape: f32[100,1,32], index: 1, kind: input, shape index: {}]
  %s2 = inlined_call_operand.vmem [shape: f32[16,32], index: 2, kind: input, shape index: {}]
  %s3 = inlined_call_operand.vmem [shape: bf16[32,192], index: 3, kind: input, shape index: {}]
  %s4 = inlined_call_operand.vmem [shape: bf16[64,32], index: 4, kind: input, shape index: {}]
  %s5 = inlined_call_operand.vmem [shape: f32[10,128], index: 5, kind: input, shape index: {}]
  %s6 = inlined_call_operand.hbm [shape: f32[16,32], index: 6, kind: output, shape index: {0}]
  %s7 = inlined_call_operand.hbm [shape: f32[16,32], index: 7, kind: output, shape index: {1}]
  %s8 = inlined_call_operand.vmem [shape: f32[16,32], index: 8, kind: output, shape index: {2}]
  %9 = xla_tuple %s6, %s7, %s8
  %s10 = sld [smem:[#allocation0]]
  $region54: #{raw_bert_transformer_forward.1} parent=0
    _
  %s12 = ssub.s32 1, %s10
  %s13 = scalar_select 0, %s12, %s10
  $region1: #{raw_bert_transformer_forward.1} parent=0
    #allocation2 [shape = 'u8[512]{0}', space=smem, size = 0x200, scoped, tag = 'input window, operand 0, single buffered']
    #allocation3 [shape = 's32[1]{0}', space=sflag, size = 0x4, scoped, tag = 'scoped memory for raw_bert_transformer_forward.1']
    #allocation4 [shape = 's32[1]{0}', space=sflag, size = 0x4, scoped, tag = 'scoped memory for raw_bert_transformer_forward.1']
    #allocation5 [shape = 'u8[8192]{0}', space=vmem, size = 0x2000, scoped, tag = 'output window, operand 0, single buffered']
    #allocation6 [shape = 'u8[8192]{0}', space=vmem, size = 0x2000, scoped, tag = 'output window, operand 1, single buffered']
    #allocation7 [shape = 's32[1]{0}', space=sflag, size = 0x4, scoped, tag = 'scoped memory for raw_bert_transformer_forward.1']
    %14 = vsyncpa [#allocation4], 0
    %15 = vsyncpa [#allocation3], 0
    %16 = vsyncpa [#allocation7], 0
    // Predicated region
    $region2: #{raw_bert_transformer_forward.1} parent=1 // pred_check
      _
    $region3: #{raw_bert_transformer_forward.1} parent=1 // pred_check_branch
      %18 = sbr.rel (0) target = $region5
    $region4: #{raw_bert_transformer_forward.1} parent=1 // pred_region
      %s20 = ssub.s32 16, 16
      %21 = vsyncadd [#allocation4], %s20
      %s23 = sshll.u32 %s0, 4
      %s24 = int_to_ptr.vmem [resolvable:$true] %s23
      %26 = dma.vmem_to_smem %s24, 16, [#allocation2], [#allocation4]
    $region5: #{raw_bert_transformer_forward.1} parent=1 // pred_fallthru
      _
    // Predicated region
    $region6: #{raw_bert_transformer_forward.1} parent=1 // pred_check
      _
    $region7: #{raw_bert_transformer_forward.1} parent=1 // pred_check_branch
      %28 = sbr.rel (0) target = $region9
    $region8: #{raw_bert_transformer_forward.1} parent=1 // pred_region
      _
    $region9: #{raw_bert_transformer_forward.1} parent=1 // pred_fallthru
      _
    // Predicated region
    $region10: #{raw_bert_transformer_forward.1} parent=1 // pred_check
      _
    $region11: #{raw_bert_transformer_forward.1} parent=1 // pred_check_branch
      %30 = sbr.rel (0) target = $region13
    $region12: #{raw_bert_transformer_forward.1} parent=1 // pred_region
      _
    $region13: #{raw_bert_transformer_forward.1} parent=1 // pred_fallthru
      _
    // Predicated region
    $region14: #{raw_bert_transformer_forward.1} parent=1 // pred_check
      _
    $region15: #{raw_bert_transformer_forward.1} parent=1 // pred_check_branch
      %32 = sbr.rel (0) target = $region17
    $region16: #{raw_bert_transformer_forward.1} parent=1 // pred_region
      _
    $region17: #{raw_bert_transformer_forward.1} parent=1 // pred_fallthru
      _
    // Predicated region
    $region18: #{raw_bert_transformer_forward.1} parent=1 // pred_check
      _
    $region19: #{raw_bert_transformer_forward.1} parent=1 // pred_check_branch
      %34 = sbr.rel (0) target = $region21
    $region20: #{raw_bert_transformer_forward.1} parent=1 // pred_region
      _
    $region21: #{raw_bert_transformer_forward.1} parent=1 // pred_fallthru
      _
    // Predicated region
    $region22: #{raw_bert_transformer_forward.1} parent=1 // pred_check
      _
    $region23: #{raw_bert_transformer_forward.1} parent=1 // pred_check_branch
      %36 = sbr.rel (0) target = $region25
    $region24: #{raw_bert_transformer_forward.1} parent=1 // pred_region
      _
    $region25: #{raw_bert_transformer_forward.1} parent=1 // pred_fallthru
      _
    // Predicated region
    $region26: #{raw_bert_transformer_forward.1} parent=1 // pred_check
      _
    $region27: #{raw_bert_transformer_forward.1} parent=1 // pred_check_branch
      %38 = sbr.rel (0) target = $region29
    $region28: #{raw_bert_transformer_forward.1} parent=1 // pred_region
      %39 = dma.done [#allocation4], 16
    $region29: #{raw_bert_transformer_forward.1} parent=1 // pred_fallthru
      _
    %40 = sfence
    %v42 = vld [vmem:[%s3] sm:$0xff]
    %v43 = vld [vmem:[%s3 + $0x8] sm:$0xff]
    %v44 = vld [vmem:[%s3 + $0x10] sm:$0xff]
    %v45 = vld [vmem:[%s3 + $0x18] sm:$0xff]
    %v46 = vld [vmem:[%s4] sm:$0xf]
    %v47 = vld [vmem:[%s4 + $0x4] sm:$0xf]
    %v48 = vld [vmem:[%s4 + $0x8] sm:$0xf]
    %v49 = vld [vmem:[%s4 + $0xc] sm:$0xf]
    %v50 = vld [vmem:[%s4 + $0x10] sm:$0xf]
    %v51 = vld [vmem:[%s4 + $0x14] sm:$0xf]
    %v52 = vld [vmem:[%s4 + $0x18] sm:$0xf]
    %v53 = vld [vmem:[%s4 + $0x1c] sm:$0xf]
    %v54 = vld [vmem:[%s5] sm:$0xff]
    %v55 = vld [vmem:[%s5 + $0x8] sm:$0x3]
    %v56 = vlaneseq
    %v57 = vshrl.u32 %v56, 7
    %v58 = vsub.s32 0, %v57
    %v59 = vrot.slane %v54, %v58
    %v60 = vlaneseq
    %v61 = vshrl.u32 %v60, 7
    %v62 = vsub.s32 1, %v61
    %v63 = vrot.slane %v54, %v62
    %v64 = vlaneseq
    %v65 = vshrl.u32 %v64, 7
    %v66 = vsub.s32 2, %v65
    %v67 = vrot.slane %v54, %v66
    %v68 = vlaneseq
    %v69 = vshrl.u32 %v68, 7
    %v70 = vsub.s32 3, %v69
    %v71 = vrot.slane %v54, %v70
    %v72 = vlaneseq
    %v73 = vshrl.u32 %v72, 7
    %v74 = vsub.s32 4, %v73
    %v75 = vrot.slane %v54, %v74
    %v76 = vlaneseq
    %v77 = vshrl.u32 %v76, 7
    %v78 = vsub.s32 5, %v77
    %v79 = vrot.slane %v54, %v78
    %v80 = vlaneseq
    %v81 = vshrl.u32 %v80, 7
    %v82 = vsub.s32 6, %v81
    %v83 = vrot.slane %v54, %v82
    %v84 = vlaneseq
    %v85 = vshrl.u32 %v84, 7
    %v86 = vsub.s32 7, %v85
    %v87 = vrot.slane %v54, %v86
    %v88 = vlaneseq
    %v89 = vshrl.u32 %v88, 7
    %v90 = vsub.s32 0, %v89
    %v91 = vrot.slane %v55, %v90
    %v92 = vlaneseq
    %v93 = vshrl.u32 %v92, 7
    %v94 = vsub.s32 1, %v93
    %v95 = vrot.slane %v55, %v94
    %s96 = sld [smem:[#allocation2]]
    %s97 = scalar_lea.vmem %s1, %s96
    %v98 = vld [vmem:[%s97] sm:$0x1]
    %vm99 = vcmask 253952
    %100 = vst.msk [vmem:[#allocation5] sm:$0x1] %vm99, %v98
    %s101 = sld [smem:[#allocation2 + $0x1]]
    %s102 = scalar_lea.vmem %s1, %s101
    %v103 = vld [vmem:[%s102] sm:$0x1]
    %104 = vst.msk [vmem:[#allocation5 + $0x1] sm:$0x1] %vm99, %v103
    %s105 = sld [smem:[#allocation2 + $0x2]]
    %s106 = scalar_lea.vmem %s1, %s105
    %v107 = vld [vmem:[%s106] sm:$0x1]
    %108 = vst.msk [vmem:[#allocation5 + $0x2] sm:$0x1] %vm99, %v107
    %s109 = sld [smem:[#allocation2 + $0x3]]
    %s110 = scalar_lea.vmem %s1, %s109
    %v111 = vld [vmem:[%s110] sm:$0x1]
    %112 = vst.msk [vmem:[#allocation5 + $0x3] sm:$0x1] %vm99, %v111
    %s113 = sld [smem:[#allocation2 + $0x4]]
    %s114 = scalar_lea.vmem %s1, %s113
    %v115 = vld [vmem:[%s114] sm:$0x1]
    %116 = vst.msk [vmem:[#allocation5 + $0x4] sm:$0x1] %vm99, %v115
    %s117 = sld [smem:[#allocation2 + $0x5]]
    %s118 = scalar_lea.vmem %s1, %s117
    %v119 = vld [vmem:[%s118] sm:$0x1]
    %120 = vst.msk [vmem:[#allocation5 + $0x5] sm:$0x1] %vm99, %v119
    %s121 = sld [smem:[#allocation2 + $0x6]]
    %s122 = scalar_lea.vmem %s1, %s121
    %v123 = vld [vmem:[%s122] sm:$0x1]
    %124 = vst.msk [vmem:[#allocation5 + $0x6] sm:$0x1] %vm99, %v123
    %s125 = sld [smem:[#allocation2 + $0x7]]
    %s126 = scalar_lea.vmem %s1, %s125
    %v127 = vld [vmem:[%s126] sm:$0x1]
    %128 = vst.msk [vmem:[#allocation5 + $0x7] sm:$0x1] %vm99, %v127
    %s129 = sld [smem:[#allocation2 + $0x8]]
    %s130 = scalar_lea.vmem %s1, %s129
    %v131 = vld [vmem:[%s130] sm:$0x1]
    %132 = vst.msk [vmem:[#allocation5 + $0x8] sm:$0x1] %vm99, %v131
    %s133 = sld [smem:[#allocation2 + $0x9]]
    %s134 = scalar_lea.vmem %s1, %s133
    %v135 = vld [vmem:[%s134] sm:$0x1]
    %136 = vst.msk [vmem:[#allocation5 + $0x9] sm:$0x1] %vm99, %v135
    %s137 = sld [smem:[#allocation2 + $0xa]]
    %s138 = scalar_lea.vmem %s1, %s137
    %v139 = vld [vmem:[%s138] sm:$0x1]
    %140 = vst.msk [vmem:[#allocation5 + $0xa] sm:$0x1] %vm99, %v139
    %s141 = sld [smem:[#allocation2 + $0xb]]
    %s142 = scalar_lea.vmem %s1, %s141
    %v143 = vld [vmem:[%s142] sm:$0x1]
    %144 = vst.msk [vmem:[#allocation5 + $0xb] sm:$0x1] %vm99, %v143
    %s145 = sld [smem:[#allocation2 + $0xc]]
    %s146 = scalar_lea.vmem %s1, %s145
    %v147 = vld [vmem:[%s146] sm:$0x1]
    %148 = vst.msk [vmem:[#allocation5 + $0xc] sm:$0x1] %vm99, %v147
    %s149 = sld [smem:[#allocation2 + $0xd]]
    %s150 = scalar_lea.vmem %s1, %s149
    %v151 = vld [vmem:[%s150] sm:$0x1]
    %152 = vst.msk [vmem:[#allocation5 + $0xd] sm:$0x1] %vm99, %v151
    %s153 = sld [smem:[#allocation2 + $0xe]]
    %s154 = scalar_lea.vmem %s1, %s153
    %v155 = vld [vmem:[%s154] sm:$0x1]
    %156 = vst.msk [vmem:[#allocation5 + $0xe] sm:$0x1] %vm99, %v155
    %s157 = sld [smem:[#allocation2 + $0xf]]
    %s158 = scalar_lea.vmem %s1, %s157
    %v159 = vld [vmem:[%s158] sm:$0x1]
    %160 = vst.msk [vmem:[#allocation5 + $0xf] sm:$0x1] %vm99, %v159
    %v161 = vld [vmem:[#allocation5] sm:$0xff]
    %v162 = vld [vmem:[#allocation5 + $0x8] sm:$0xff]
    %v163 = vld [vmem:[%s2] sm:$0xff]
    %v164 = vld [vmem:[%s2 + $0x8] sm:$0xff]
    %v165 = vadd.f32 %v161, %v163
    %v166 = vadd.f32 %v162, %v164
    %vm167 = vcmask 261120
    %v168 = vsel %vm167, %v165, 0.0
    %169 = vadd.xlane.f32.xlu0 %v168
    %v170 = vpop.xlane.xlu0 %169
    %v171 = vsel %vm167, %v166, 0.0
    %172 = vadd.xlane.f32.xlu0 %v171
    %v173 = vpop.xlane.xlu0 %172
    %v174 = vrcp.pop 32.0
    %v175 = vmul.f32 %v170, %v174
    %v176 = vmul.f32 %v173, %v174
    %v177 = vmul.f32 %v165, %v165
    %v178 = vmul.f32 %v166, %v166
    %v179 = vsel %vm167, %v177, 0.0
    %180 = vadd.xlane.f32.xlu0 %v179
    %v181 = vpop.xlane.xlu0 %180
    %v182 = vsel %vm167, %v178, 0.0
    %183 = vadd.xlane.f32.xlu0 %v182
    %v184 = vpop.xlane.xlu0 %183
    %v185 = vmul.f32 %v181, %v174
    %v186 = vmul.f32 %v184, %v174
    %v187 = vmul.f32 %v175, %v175
    %v188 = vmul.f32 %v176, %v176
    %v189 = vsub.f32 %v185, %v187
    %v190 = vsub.f32 %v186, %v188
    %v191 = vsub.f32 %v165, %v175
    %v192 = vsub.f32 %v166, %v176
    %v193 = vadd.f32 %v189, 1e-12
    %v194 = vadd.f32 %v190, 1e-12
    %v195 = vrsqrt.pop %v193
    %v196 = vrsqrt.pop %v194
    %v197 = vmul.f32 %v191, %v195
    %v198 = vmul.f32 %v192, %v196
    %v199 = vmul.f32 %v197, %v91
    %v200 = vmul.f32 %v198, %v91
    %v201 = vadd.f32 %v199, %v95
    %v202 = vadd.f32 %v200, %v95
    %203 = vst.msk [vmem:[#allocation5] sm:$0xff] %vm167, %v201
    %204 = vst.msk [vmem:[#allocation5 + $0x8] sm:$0xff] %vm167, %v202
    %v205 = vpack.c.bf16 %v202, %v201
    %v210 = vunpack.c.l.b16 %v42
    %v211 = vunpack.c.l.b16 %v43
    %v212 = vunpack.c.l.b16 %v44
    %v213 = vunpack.c.l.b16 %v45
    %v214 = vpack.c.b16 %v211, %v210
    %v215 = vpack.c.b16 %v213, %v212
    %v219 = vsel %vm167, %v205, 0
    %221 = vmatprep.subr.bf16.mxu0 0
    %222 = vmatpush1.bf16.msra.mxu0 %v214
    %223 = vmatprep.subr.bf16.mxu0 0
    %224 = vmatpush1.bf16.msra.mxu0 %v215
    %225 = vmatprep.subr.bf16.mxu0 0
    %226 = vmatpush1.bf16.msra.mxu0 0
    %227 = vmatprep.subr.bf16.mxu0 0
    %228 = vmatpush1.bf16.msra.mxu0 0
    %229 = vmatprep.subr.bf16.mxu0 0
    %230 = vmatpush1.bf16.msra.mxu0 0
    %231 = vmatprep.subr.bf16.mxu0 0
    %232 = vmatpush1.bf16.msra.mxu0 0
    %233 = vmatprep.subr.bf16.mxu0 0
    %234 = vmatpush1.bf16.msra.mxu0 0
    %235 = vmatprep.subr.bf16.mxu0 0
    %236 = vmatpush1.bf16.msra.mxu0 0
    %237 = vmatprep.subr.bf16.mxu0 0
    %238 = vmatpush1.bf16.msra.mxu0 0
    %239 = vmatprep.subr.bf16.mxu0 0
    %240 = vmatpush1.bf16.msra.mxu0 0
    %241 = vmatprep.subr.bf16.mxu0 0
    %242 = vmatpush1.bf16.msra.mxu0 0
    %243 = vmatprep.subr.bf16.mxu0 0
    %244 = vmatpush1.bf16.msra.mxu0 0
    %245 = vmatprep.subr.bf16.mxu0 0
    %246 = vmatpush1.bf16.msra.mxu0 0
    %247 = vmatprep.subr.bf16.mxu0 0
    %248 = vmatpush1.bf16.msra.mxu0 0
    %249 = vmatprep.subr.bf16.mxu0 0
    %250 = vmatpush1.bf16.msra.mxu0 0
    %251 = vmatprep.subr.bf16.mxu0 0
    %252 = vmatpush1.bf16.msra.mxu0 0
    %253 = vmatprep.mubr.bf16.mxu0 0
    %254 = vmatmul.mubr.bf16.gmra.mrb[0].mxu0 %v219
    %v255 = vpop.f32.mrb[0].mxu0
    %v256 = vadd.f32 %v59, %v255
    %v257 = vpop.f32.mrb[0].mxu0
    %v258 = vpop.f32.mrb[0].mxu0
    %v259 = vadd.f32 %v59, %v258
    %v260 = vpop.f32.mrb[0].mxu0
    %261 = vdwg.mxu0
    %v262 = vpack.c.bf16 %v256, %v256
    %v263 = vpack.c.bf16 %v259, %v259
    %265 = vrot.lane.b32.xlu0 %v262, 96
    %v266 = vpop.permute.xlu0 %265
    %vm267 = vcmask 64512
    %v269 = vsel %vm267, %v262, 0
    %v272 = vsel %vm267, %v266, 0
    %274 = vmatprep.subr.bf16.mxu0 0
    %275 = vmatpush1.bf16.xpose.msra.mxu0 %v272
    %276 = vmatprep.subr.bf16.mxu0 0
    %277 = vmatpush1.bf16.xpose.msra.mxu0 0
    %278 = vmatprep.subr.bf16.mxu0 0
    %279 = vmatpush1.bf16.xpose.msra.mxu0 0
    %280 = vmatprep.subr.bf16.mxu0 0
    %281 = vmatpush1.bf16.xpose.msra.mxu0 0
    %282 = vmatprep.subr.bf16.mxu0 0
    %283 = vmatpush1.bf16.xpose.msra.mxu0 0
    %284 = vmatprep.subr.bf16.mxu0 0
    %285 = vmatpush1.bf16.xpose.msra.mxu0 0
    %286 = vmatprep.subr.bf16.mxu0 0
    %287 = vmatpush1.bf16.xpose.msra.mxu0 0
    %288 = vmatprep.subr.bf16.mxu0 0
    %289 = vmatpush1.bf16.xpose.msra.mxu0 0
    %290 = vmatprep.subr.bf16.mxu0 0
    %291 = vmatpush1.bf16.xpose.msra.mxu0 0
    %292 = vmatprep.subr.bf16.mxu0 0
    %293 = vmatpush1.bf16.xpose.msra.mxu0 0
    %294 = vmatprep.subr.bf16.mxu0 0
    %295 = vmatpush1.bf16.xpose.msra.mxu0 0
    %296 = vmatprep.subr.bf16.mxu0 0
    %297 = vmatpush1.bf16.xpose.msra.mxu0 0
    %298 = vmatprep.subr.bf16.mxu0 0
    %299 = vmatpush1.bf16.xpose.msra.mxu0 0
    %300 = vmatprep.subr.bf16.mxu0 0
    %301 = vmatpush1.bf16.xpose.msra.mxu0 0
    %302 = vmatprep.subr.bf16.mxu0 0
    %303 = vmatpush1.bf16.xpose.msra.mxu0 0
    %304 = vmatprep.subr.bf16.mxu0 0
    %305 = vmatpush1.bf16.xpose.msra.mxu0 0
    %306 = vmatprep.mubr.bf16.mxu0 0
    %307 = vmatmul.mubr.bf16.gmra.mrb[0].mxu0 %v269
    %v308 = vpop.f32.mrb[0].mxu0
    %v309 = vadd.f32 0.0, %v308
    %v310 = vpop.f32.mrb[0].mxu0
    %v311 = vpop.f32.mrb[0].mxu0
    %v312 = vpop.f32.mrb[0].mxu0
    %313 = vdwg.mxu0
    %315 = vrot.lane.b32.xlu0 %v263, 96
    %v316 = vpop.permute.xlu0 %315
    %v318 = vsel %vm267, %v263, 0
    %v321 = vsel %vm267, %v316, 0
    %323 = vmatprep.subr.bf16.mxu0 0
    %324 = vmatpush1.bf16.xpose.msra.mxu0 %v321
    %325 = vmatprep.subr.bf16.mxu0 0
    %326 = vmatpush1.bf16.xpose.msra.mxu0 0
    %327 = vmatprep.subr.bf16.mxu0 0
    %328 = vmatpush1.bf16.xpose.msra.mxu0 0
    %329 = vmatprep.subr.bf16.mxu0 0
    %330 = vmatpush1.bf16.xpose.msra.mxu0 0
    %331 = vmatprep.subr.bf16.mxu0 0
    %332 = vmatpush1.bf16.xpose.msra.mxu0 0
    %333 = vmatprep.subr.bf16.mxu0 0
    %334 = vmatpush1.bf16.xpose.msra.mxu0 0
    %335 = vmatprep.subr.bf16.mxu0 0
    %336 = vmatpush1.bf16.xpose.msra.mxu0 0
    %337 = vmatprep.subr.bf16.mxu0 0
    %338 = vmatpush1.bf16.xpose.msra.mxu0 0
    %339 = vmatprep.subr.bf16.mxu0 0
    %340 = vmatpush1.bf16.xpose.msra.mxu0 0
    %341 = vmatprep.subr.bf16.mxu0 0
    %342 = vmatpush1.bf16.xpose.msra.mxu0 0
    %343 = vmatprep.subr.bf16.mxu0 0
    %344 = vmatpush1.bf16.xpose.msra.mxu0 0
    %345 = vmatprep.subr.bf16.mxu0 0
    %346 = vmatpush1.bf16.xpose.msra.mxu0 0
    %347 = vmatprep.subr.bf16.mxu0 0
    %348 = vmatpush1.bf16.xpose.msra.mxu0 0
    %349 = vmatprep.subr.bf16.mxu0 0
    %350 = vmatpush1.bf16.xpose.msra.mxu0 0
    %351 = vmatprep.subr.bf16.mxu0 0
    %352 = vmatpush1.bf16.xpose.msra.mxu0 0
    %353 = vmatprep.subr.bf16.mxu0 0
    %354 = vmatpush1.bf16.xpose.msra.mxu0 0
    %355 = vmatprep.mubr.bf16.mxu0 0
    %356 = vmatmul.mubr.bf16.gmra.mrb[0].mxu0 %v318
    %v357 = vpop.f32.mrb[0].mxu0
    %v358 = vadd.f32 0.0, %v357
    %v359 = vpop.f32.mrb[0].mxu0
    %v360 = vpop.f32.mrb[0].mxu0
    %v361 = vpop.f32.mrb[0].mxu0
    %362 = vdwg.mxu0
    %v363 = vsel %vm267, %v309, -inf
    %364 = vmax.xlane.f32.xlu0 %v363
    %v365 = vpop.xlane.xlu0 %364
    %v366 = vsel %vm267, %v358, -inf
    %367 = vmax.xlane.f32.xlu0 %v366
    %v368 = vpop.xlane.xlu0 %367
    %v369 = vsub.f32 %v309, %v365
    %v370 = vsub.f32 %v358, %v368
    %v371 = vmul.f32 %v369, 1.442695
    %v372 = vpow.pop %v371
    %v373 = vmul.f32 %v370, 1.442695
    %v374 = vpow.pop %v373
    %v375 = vsel %vm267, %v372, 0.0
    %376 = vadd.xlane.f32.xlu0 %v375
    %v377 = vpop.xlane.xlu0 %376
    %v378 = vsel %vm267, %v374, 0.0
    %379 = vadd.xlane.f32.xlu0 %v378
    %v380 = vpop.xlane.xlu0 %379
    %v381 = vrcp.pop %v377
    %v382 = vrcp.pop %v380
    %v383 = vmul.f32 %v372, %v381
    %v384 = vmul.f32 %v374, %v382
    %v385 = vpack.c.bf16 %v383, %v383
    %v386 = vpack.c.bf16 %v384, %v384
    %387 = vrot.lane.b32.xlu0 %v262, 64
    %v388 = vpop.permute.xlu0 %387
    %v390 = vsel %vm267, %v385, 0
    %vm392 = vcmask 1043456
    %v394 = vsel %vm392, %v388, 0
    %396 = vmatprep.subr.bf16.mxu0 0
    %397 = vmatpush1.bf16.msra.mxu0 %v394
    %398 = vmatprep.subr.bf16.mxu0 0
    %399 = vmatpush1.bf16.msra.mxu0 0
    %400 = vmatprep.subr.bf16.mxu0 0
    %401 = vmatpush1.bf16.msra.mxu0 0
    %402 = vmatprep.subr.bf16.mxu0 0
    %403 = vmatpush1.bf16.msra.mxu0 0
    %404 = vmatprep.subr.bf16.mxu0 0
    %405 = vmatpush1.bf16.msra.mxu0 0
    %406 = vmatprep.subr.bf16.mxu0 0
    %407 = vmatpush1.bf16.msra.mxu0 0
    %408 = vmatprep.subr.bf16.mxu0 0
    %409 = vmatpush1.bf16.msra.mxu0 0
    %410 = vmatprep.subr.bf16.mxu0 0
    %411 = vmatpush1.bf16.msra.mxu0 0
    %412 = vmatprep.subr.bf16.mxu0 0
    %413 = vmatpush1.bf16.msra.mxu0 0
    %414 = vmatprep.subr.bf16.mxu0 0
    %415 = vmatpush1.bf16.msra.mxu0 0
    %416 = vmatprep.subr.bf16.mxu0 0
    %417 = vmatpush1.bf16.msra.mxu0 0
    %418 = vmatprep.subr.bf16.mxu0 0
    %419 = vmatpush1.bf16.msra.mxu0 0
    %420 = vmatprep.subr.bf16.mxu0 0
    %421 = vmatpush1.bf16.msra.mxu0 0
    %422 = vmatprep.subr.bf16.mxu0 0
    %423 = vmatpush1.bf16.msra.mxu0 0
    %424 = vmatprep.subr.bf16.mxu0 0
    %425 = vmatpush1.bf16.msra.mxu0 0
    %426 = vmatprep.subr.bf16.mxu0 0
    %427 = vmatpush1.bf16.msra.mxu0 0
    %428 = vmatprep.mubr.bf16.mxu0 0
    %429 = vmatmul.mubr.bf16.gmra.mrb[0].mxu0 %v390
    %v430 = vpop.f32.mrb[0].mxu0
    %v431 = vadd.f32 0.0, %v430
    %v432 = vpop.f32.mrb[0].mxu0
    %v433 = vpop.f32.mrb[0].mxu0
    %v434 = vpop.f32.mrb[0].mxu0
    %435 = vdwg.mxu0
    %436 = vrot.lane.b32.xlu0 %v263, 64
    %v437 = vpop.permute.xlu0 %436
    %v439 = vsel %vm267, %v386, 0
    %v442 = vsel %vm392, %v437, 0
    %444 = vmatprep.subr.bf16.mxu0 0
    %445 = vmatpush1.bf16.msra.mxu0 %v442
    %446 = vmatprep.subr.bf16.mxu0 0
    %447 = vmatpush1.bf16.msra.mxu0 0
    %448 = vmatprep.subr.bf16.mxu0 0
    %449 = vmatpush1.bf16.msra.mxu0 0
    %450 = vmatprep.subr.bf16.mxu0 0
    %451 = vmatpush1.bf16.msra.mxu0 0
    %452 = vmatprep.subr.bf16.mxu0 0
    %453 = vmatpush1.bf16.msra.mxu0 0
    %454 = vmatprep.subr.bf16.mxu0 0
    %455 = vmatpush1.bf16.msra.mxu0 0
    %456 = vmatprep.subr.bf16.mxu0 0
    %457 = vmatpush1.bf16.msra.mxu0 0
    %458 = vmatprep.subr.bf16.mxu0 0
    %459 = vmatpush1.bf16.msra.mxu0 0
    %460 = vmatprep.subr.bf16.mxu0 0
    %461 = vmatpush1.bf16.msra.mxu0 0
    %462 = vmatprep.subr.bf16.mxu0 0
    %463 = vmatpush1.bf16.msra.mxu0 0
    %464 = vmatprep.subr.bf16.mxu0 0
    %465 = vmatpush1.bf16.msra.mxu0 0
    %466 = vmatprep.subr.bf16.mxu0 0
    %467 = vmatpush1.bf16.msra.mxu0 0
    %468 = vmatprep.subr.bf16.mxu0 0
    %469 = vmatpush1.bf16.msra.mxu0 0
    %470 = vmatprep.subr.bf16.mxu0 0
    %471 = vmatpush1.bf16.msra.mxu0 0
    %472 = vmatprep.subr.bf16.mxu0 0
    %473 = vmatpush1.bf16.msra.mxu0 0
    %474 = vmatprep.subr.bf16.mxu0 0
    %475 = vmatpush1.bf16.msra.mxu0 0
    %476 = vmatprep.mubr.bf16.mxu0 0
    %477 = vmatmul.mubr.bf16.gmra.mrb[0].mxu0 %v439
    %v478 = vpop.f32.mrb[0].mxu0
    %v479 = vadd.f32 0.0, %v478
    %v480 = vpop.f32.mrb[0].mxu0
    %v481 = vpop.f32.mrb[0].mxu0
    %v482 = vpop.f32.mrb[0].mxu0
    %483 = vdwg.mxu0
    %v484 = vpack.c.bf16 %v479, %v431
    %485 = vrot.lane.b32.xlu0 %v262, 120
    %v486 = vpop.permute.xlu0 %485
    %487 = vrot.lane.b32.xlu0 %v262, 88
    %v488 = vpop.permute.xlu0 %487
    %v490 = vsel %vm267, %v486, 0
    %v493 = vsel %vm267, %v488, 0
    %495 = vmatprep.subr.bf16.mxu0 0
    %496 = vmatpush1.bf16.xpose.msra.mxu0 %v493
    %497 = vmatprep.subr.bf16.mxu0 0
    %498 = vmatpush1.bf16.xpose.msra.mxu0 0
    %499 = vmatprep.subr.bf16.mxu0 0
    %500 = vmatpush1.bf16.xpose.msra.mxu0 0
    %501 = vmatprep.subr.bf16.mxu0 0
    %502 = vmatpush1.bf16.xpose.msra.mxu0 0
    %503 = vmatprep.subr.bf16.mxu0 0
    %504 = vmatpush1.bf16.xpose.msra.mxu0 0
    %505 = vmatprep.subr.bf16.mxu0 0
    %506 = vmatpush1.bf16.xpose.msra.mxu0 0
    %507 = vmatprep.subr.bf16.mxu0 0
    %508 = vmatpush1.bf16.xpose.msra.mxu0 0
    %509 = vmatprep.subr.bf16.mxu0 0
    %510 = vmatpush1.bf16.xpose.msra.mxu0 0
    %511 = vmatprep.subr.bf16.mxu0 0
    %512 = vmatpush1.bf16.xpose.msra.mxu0 0
    %513 = vmatprep.subr.bf16.mxu0 0
    %514 = vmatpush1.bf16.xpose.msra.mxu0 0
    %515 = vmatprep.subr.bf16.mxu0 0
    %516 = vmatpush1.bf16.xpose.msra.mxu0 0
    %517 = vmatprep.subr.bf16.mxu0 0
    %518 = vmatpush1.bf16.xpose.msra.mxu0 0
    %519 = vmatprep.subr.bf16.mxu0 0
    %520 = vmatpush1.bf16.xpose.msra.mxu0 0
    %521 = vmatprep.subr.bf16.mxu0 0
    %522 = vmatpush1.bf16.xpose.msra.mxu0 0
    %523 = vmatprep.subr.bf16.mxu0 0
    %524 = vmatpush1.bf16.xpose.msra.mxu0 0
    %525 = vmatprep.subr.bf16.mxu0 0
    %526 = vmatpush1.bf16.xpose.msra.mxu0 0
    %527 = vmatprep.mubr.bf16.mxu0 0
    %528 = vmatmul.mubr.bf16.gmra.mrb[0].mxu0 %v490
    %v529 = vpop.f32.mrb[0].mxu0
    %v530 = vadd.f32 0.0, %v529
    %v531 = vpop.f32.mrb[0].mxu0
    %v532 = vpop.f32.mrb[0].mxu0
    %v533 = vpop.f32.mrb[0].mxu0
    %534 = vdwg.mxu0
    %535 = vrot.lane.b32.xlu0 %v263, 120
    %v536 = vpop.permute.xlu0 %535
    %537 = vrot.lane.b32.xlu0 %v263, 88
    %v538 = vpop.permute.xlu0 %537
    %v540 = vsel %vm267, %v536, 0
    %v543 = vsel %vm267, %v538, 0
    %545 = vmatprep.subr.bf16.mxu0 0
    %546 = vmatpush1.bf16.xpose.msra.mxu0 %v543
    %547 = vmatprep.subr.bf16.mxu0 0
    %548 = vmatpush1.bf16.xpose.msra.mxu0 0
    %549 = vmatprep.subr.bf16.mxu0 0
    %550 = vmatpush1.bf16.xpose.msra.mxu0 0
    %551 = vmatprep.subr.bf16.mxu0 0
    %552 = vmatpush1.bf16.xpose.msra.mxu0 0
    %553 = vmatprep.subr.bf16.mxu0 0
    %554 = vmatpush1.bf16.xpose.msra.mxu0 0
    %555 = vmatprep.subr.bf16.mxu0 0
    %556 = vmatpush1.bf16.xpose.msra.mxu0 0
    %557 = vmatprep.subr.bf16.mxu0 0
    %558 = vmatpush1.bf16.xpose.msra.mxu0 0
    %559 = vmatprep.subr.bf16.mxu0 0
    %560 = vmatpush1.bf16.xpose.msra.mxu0 0
    %561 = vmatprep.subr.bf16.mxu0 0
    %562 = vmatpush1.bf16.xpose.msra.mxu0 0
    %563 = vmatprep.subr.bf16.mxu0 0
    %564 = vmatpush1.bf16.xpose.msra.mxu0 0
    %565 = vmatprep.subr.bf16.mxu0 0
    %566 = vmatpush1.bf16.xpose.msra.mxu0 0
    %567 = vmatprep.subr.bf16.mxu0 0
    %568 = vmatpush1.bf16.xpose.msra.mxu0 0
    %569 = vmatprep.subr.bf16.mxu0 0
    %570 = vmatpush1.bf16.xpose.msra.mxu0 0
    %571 = vmatprep.subr.bf16.mxu0 0
    %572 = vmatpush1.bf16.xpose.msra.mxu0 0
    %573 = vmatprep.subr.bf16.mxu0 0
    %574 = vmatpush1.bf16.xpose.msra.mxu0 0
    %575 = vmatprep.subr.bf16.mxu0 0
    %576 = vmatpush1.bf16.xpose.msra.mxu0 0
    %577 = vmatprep.mubr.bf16.mxu0 0
    %578 = vmatmul.mubr.bf16.gmra.mrb[0].mxu0 %v540
    %v579 = vpop.f32.mrb[0].mxu0
    %v580 = vadd.f32 0.0, %v579
    %v581 = vpop.f32.mrb[0].mxu0
    %v582 = vpop.f32.mrb[0].mxu0
    %v583 = vpop.f32.mrb[0].mxu0
    %584 = vdwg.mxu0
    %v585 = vsel %vm267, %v530, -inf
    %586 = vmax.xlane.f32.xlu0 %v585
    %v587 = vpop.xlane.xlu0 %586
    %v588 = vsel %vm267, %v580, -inf
    %589 = vmax.xlane.f32.xlu0 %v588
    %v590 = vpop.xlane.xlu0 %589
    %v591 = vsub.f32 %v530, %v587
    %v592 = vsub.f32 %v580, %v590
    %v593 = vmul.f32 %v591, 1.442695
    %v594 = vpow.pop %v593
    %v595 = vmul.f32 %v592, 1.442695
    %v596 = vpow.pop %v595
    %v597 = vsel %vm267, %v594, 0.0
    %598 = vadd.xlane.f32.xlu0 %v597
    %v599 = vpop.xlane.xlu0 %598
    %v600 = vsel %vm267, %v596, 0.0
    %601 = vadd.xlane.f32.xlu0 %v600
    %v602 = vpop.xlane.xlu0 %601
    %v603 = vrcp.pop %v599
    %v604 = vrcp.pop %v602
    %v605 = vmul.f32 %v594, %v603
    %v606 = vmul.f32 %v596, %v604
    %v607 = vpack.c.bf16 %v605, %v605
    %v608 = vpack.c.bf16 %v606, %v606
    %609 = vrot.lane.b32.xlu0 %v262, 56
    %v610 = vpop.permute.xlu0 %609
    %v612 = vsel %vm267, %v607, 0
    %v615 = vsel %vm392, %v610, 0
    %617 = vmatprep.subr.bf16.mxu0 0
    %618 = vmatpush1.bf16.msra.mxu0 %v615
    %619 = vmatprep.subr.bf16.mxu0 0
    %620 = vmatpush1.bf16.msra.mxu0 0
    %621 = vmatprep.subr.bf16.mxu0 0
    %622 = vmatpush1.bf16.msra.mxu0 0
    %623 = vmatprep.subr.bf16.mxu0 0
    %624 = vmatpush1.bf16.msra.mxu0 0
    %625 = vmatprep.subr.bf16.mxu0 0
    %626 = vmatpush1.bf16.msra.mxu0 0
    %627 = vmatprep.subr.bf16.mxu0 0
    %628 = vmatpush1.bf16.msra.mxu0 0
    %629 = vmatprep.subr.bf16.mxu0 0
    %630 = vmatpush1.bf16.msra.mxu0 0
    %631 = vmatprep.subr.bf16.mxu0 0
    %632 = vmatpush1.bf16.msra.mxu0 0
    %633 = vmatprep.subr.bf16.mxu0 0
    %634 = vmatpush1.bf16.msra.mxu0 0
    %635 = vmatprep.subr.bf16.mxu0 0
    %636 = vmatpush1.bf16.msra.mxu0 0
    %637 = vmatprep.subr.bf16.mxu0 0
    %638 = vmatpush1.bf16.msra.mxu0 0
    %639 = vmatprep.subr.bf16.mxu0 0
    %640 = vmatpush1.bf16.msra.mxu0 0
    %641 = vmatprep.subr.bf16.mxu0 0
    %642 = vmatpush1.bf16.msra.mxu0 0
    %643 = vmatprep.subr.bf16.mxu0 0
    %644 = vmatpush1.bf16.msra.mxu0 0
    %645 = vmatprep.subr.bf16.mxu0 0
    %646 = vmatpush1.bf16.msra.mxu0 0
    %647 = vmatprep.subr.bf16.mxu0 0
    %648 = vmatpush1.bf16.msra.mxu0 0
    %649 = vmatprep.mubr.bf16.mxu0 0
    %650 = vmatmul.mubr.bf16.gmra.mrb[0].mxu0 %v612
    %v651 = vpop.f32.mrb[0].mxu0
    %v652 = vadd.f32 0.0, %v651
    %v653 = vpop.f32.mrb[0].mxu0
    %v654 = vpop.f32.mrb[0].mxu0
    %v655 = vpop.f32.mrb[0].mxu0
    %656 = vdwg.mxu0
    %657 = vrot.lane.b32.xlu0 %v263, 56
    %v658 = vpop.permute.xlu0 %657
    %v660 = vsel %vm267, %v608, 0
    %v663 = vsel %vm392, %v658, 0
    %665 = vmatprep.subr.bf16.mxu0 0
    %666 = vmatpush1.bf16.msra.mxu0 %v663
    %667 = vmatprep.subr.bf16.mxu0 0
    %668 = vmatpush1.bf16.msra.mxu0 0
    %669 = vmatprep.subr.bf16.mxu0 0
    %670 = vmatpush1.bf16.msra.mxu0 0
    %671 = vmatprep.subr.bf16.mxu0 0
    %672 = vmatpush1.bf16.msra.mxu0 0
    %673 = vmatprep.subr.bf16.mxu0 0
    %674 = vmatpush1.bf16.msra.mxu0 0
    %675 = vmatprep.subr.bf16.mxu0 0
    %676 = vmatpush1.bf16.msra.mxu0 0
    %677 = vmatprep.subr.bf16.mxu0 0
    %678 = vmatpush1.bf16.msra.mxu0 0
    %679 = vmatprep.subr.bf16.mxu0 0
    %680 = vmatpush1.bf16.msra.mxu0 0
    %681 = vmatprep.subr.bf16.mxu0 0
    %682 = vmatpush1.bf16.msra.mxu0 0
    %683 = vmatprep.subr.bf16.mxu0 0
    %684 = vmatpush1.bf16.msra.mxu0 0
    %685 = vmatprep.subr.bf16.mxu0 0
    %686 = vmatpush1.bf16.msra.mxu0 0
    %687 = vmatprep.subr.bf16.mxu0 0
    %688 = vmatpush1.bf16.msra.mxu0 0
    %689 = vmatprep.subr.bf16.mxu0 0
    %690 = vmatpush1.bf16.msra.mxu0 0
    %691 = vmatprep.subr.bf16.mxu0 0
    %692 = vmatpush1.bf16.msra.mxu0 0
    %693 = vmatprep.subr.bf16.mxu0 0
    %694 = vmatpush1.bf16.msra.mxu0 0
    %695 = vmatprep.subr.bf16.mxu0 0
    %696 = vmatpush1.bf16.msra.mxu0 0
    %697 = vmatprep.mubr.bf16.mxu0 0
    %698 = vmatmul.mubr.bf16.gmra.mrb[0].mxu0 %v660
    %v699 = vpop.f32.mrb[0].mxu0
    %v700 = vadd.f32 0.0, %v699
    %v701 = vpop.f32.mrb[0].mxu0
    %v702 = vpop.f32.mrb[0].mxu0
    %v703 = vpop.f32.mrb[0].mxu0
    %704 = vdwg.mxu0
    %v705 = vpack.c.bf16 %v700, %v652
    %v706 = vpack.c.b16 %v211, %v211
    %707 = vrot.lane.b32.xlu0 %v706, 32
    %v708 = vpop.permute.xlu0 %707
    %v710 = vsel %vm267, %v705, 0
    %v713 = vsel %vm392, %v708, 0
    %715 = vmatprep.subr.bf16.mxu0 0
    %716 = vmatpush1.bf16.msra.mxu0 %v713
    %717 = vmatprep.subr.bf16.mxu0 0
    %718 = vmatpush1.bf16.msra.mxu0 0
    %719 = vmatprep.subr.bf16.mxu0 0
    %720 = vmatpush1.bf16.msra.mxu0 0
    %721 = vmatprep.subr.bf16.mxu0 0
    %722 = vmatpush1.bf16.msra.mxu0 0
    %723 = vmatprep.subr.bf16.mxu0 0
    %724 = vmatpush1.bf16.msra.mxu0 0
    %725 = vmatprep.subr.bf16.mxu0 0
    %726 = vmatpush1.bf16.msra.mxu0 0
    %727 = vmatprep.subr.bf16.mxu0 0
    %728 = vmatpush1.bf16.msra.mxu0 0
    %729 = vmatprep.subr.bf16.mxu0 0
    %730 = vmatpush1.bf16.msra.mxu0 0
    %731 = vmatprep.subr.bf16.mxu0 0
    %732 = vmatpush1.bf16.msra.mxu0 0
    %733 = vmatprep.subr.bf16.mxu0 0
    %734 = vmatpush1.bf16.msra.mxu0 0
    %735 = vmatprep.subr.bf16.mxu0 0
    %736 = vmatpush1.bf16.msra.mxu0 0
    %737 = vmatprep.subr.bf16.mxu0 0
    %738 = vmatpush1.bf16.msra.mxu0 0
    %739 = vmatprep.subr.bf16.mxu0 0
    %740 = vmatpush1.bf16.msra.mxu0 0
    %741 = vmatprep.subr.bf16.mxu0 0
    %742 = vmatpush1.bf16.msra.mxu0 0
    %743 = vmatprep.subr.bf16.mxu0 0
    %744 = vmatpush1.bf16.msra.mxu0 0
    %745 = vmatprep.subr.bf16.mxu0 0
    %746 = vmatpush1.bf16.msra.mxu0 0
    %747 = vmatprep.mubr.bf16.mxu0 0
    %748 = vmatmul.mubr.bf16.gmra.mrb[0].mxu0 %v710
    %v749 = vpop.f32.mrb[0].mxu0
    %v750 = vadd.f32 0.0, %v749
    %v751 = vpop.f32.mrb[0].mxu0
    %v752 = vpop.f32.mrb[0].mxu0
    %v753 = vadd.f32 0.0, %v752
    %v754 = vpop.f32.mrb[0].mxu0
    %755 = vdwg.mxu0
    %v756 = vpack.c.b16 %v210, %v210
    %757 = vrot.lane.b32.xlu0 %v756, 32
    %v758 = vpop.permute.xlu0 %757
    %v760 = vsel %vm267, %v484, 0
    %v763 = vsel %vm392, %v758, 0
    %765 = vmatprep.subr.bf16.mxu0 0
    %766 = vmatpush1.bf16.msra.mxu0 %v763
    %767 = vmatprep.subr.bf16.mxu0 0
    %768 = vmatpush1.bf16.msra.mxu0 0
    %769 = vmatprep.subr.bf16.mxu0 0
    %770 = vmatpush1.bf16.msra.mxu0 0
    %771 = vmatprep.subr.bf16.mxu0 0
    %772 = vmatpush1.bf16.msra.mxu0 0
    %773 = vmatprep.subr.bf16.mxu0 0
    %774 = vmatpush1.bf16.msra.mxu0 0
    %775 = vmatprep.subr.bf16.mxu0 0
    %776 = vmatpush1.bf16.msra.mxu0 0
    %777 = vmatprep.subr.bf16.mxu0 0
    %778 = vmatpush1.bf16.msra.mxu0 0
    %779 = vmatprep.subr.bf16.mxu0 0
    %780 = vmatpush1.bf16.msra.mxu0 0
    %781 = vmatprep.subr.bf16.mxu0 0
    %782 = vmatpush1.bf16.msra.mxu0 0
    %783 = vmatprep.subr.bf16.mxu0 0
    %784 = vmatpush1.bf16.msra.mxu0 0
    %785 = vmatprep.subr.bf16.mxu0 0
    %786 = vmatpush1.bf16.msra.mxu0 0
    %787 = vmatprep.subr.bf16.mxu0 0
    %788 = vmatpush1.bf16.msra.mxu0 0
    %789 = vmatprep.subr.bf16.mxu0 0
    %790 = vmatpush1.bf16.msra.mxu0 0
    %791 = vmatprep.subr.bf16.mxu0 0
    %792 = vmatpush1.bf16.msra.mxu0 0
    %793 = vmatprep.subr.bf16.mxu0 0
    %794 = vmatpush1.bf16.msra.mxu0 0
    %795 = vmatprep.subr.bf16.mxu0 0
    %796 = vmatpush1.bf16.msra.mxu0 0
    %797 = vmatprep.mubr.bf16.mxu0 0
    %798 = vmatmul.mubr.bf16.gmra.mrb[0].mxu0 %v760
    %v799 = vpop.f32.mrb[0].mxu0
    %v800 = vadd.f32 %v750, %v799
    %v801 = vpop.f32.mrb[0].mxu0
    %v802 = vpop.f32.mrb[0].mxu0
    %v803 = vadd.f32 %v753, %v802
    %v804 = vpop.f32.mrb[0].mxu0
    %805 = vdwg.mxu0
    %806 = vrot.lane.b32.xlu0 %v262, 112
    %v807 = vpop.permute.xlu0 %806
    %808 = vrot.lane.b32.xlu0 %v262, 80
    %v809 = vpop.permute.xlu0 %808
    %v811 = vsel %vm267, %v807, 0
    %v814 = vsel %vm267, %v809, 0
    %816 = vmatprep.subr.bf16.mxu0 0
    %817 = vmatpush1.bf16.xpose.msra.mxu0 %v814
    %818 = vmatprep.subr.bf16.mxu0 0
    %819 = vmatpush1.bf16.xpose.msra.mxu0 0
    %820 = vmatprep.subr.bf16.mxu0 0
    %821 = vmatpush1.bf16.xpose.msra.mxu0 0
    %822 = vmatprep.subr.bf16.mxu0 0
    %823 = vmatpush1.bf16.xpose.msra.mxu0 0
    %824 = vmatprep.subr.bf16.mxu0 0
    %825 = vmatpush1.bf16.xpose.msra.mxu0 0
    %826 = vmatprep.subr.bf16.mxu0 0
    %827 = vmatpush1.bf16.xpose.msra.mxu0 0
    %828 = vmatprep.subr.bf16.mxu0 0
    %829 = vmatpush1.bf16.xpose.msra.mxu0 0
    %830 = vmatprep.subr.bf16.mxu0 0
    %831 = vmatpush1.bf16.xpose.msra.mxu0 0
    %832 = vmatprep.subr.bf16.mxu0 0
    %833 = vmatpush1.bf16.xpose.msra.mxu0 0
    %834 = vmatprep.subr.bf16.mxu0 0
    %835 = vmatpush1.bf16.xpose.msra.mxu0 0
    %836 = vmatprep.subr.bf16.mxu0 0
    %837 = vmatpush1.bf16.xpose.msra.mxu0 0
    %838 = vmatprep.subr.bf16.mxu0 0
    %839 = vmatpush1.bf16.xpose.msra.mxu0 0
    %840 = vmatprep.subr.bf16.mxu0 0
    %841 = vmatpush1.bf16.xpose.msra.mxu0 0
    %842 = vmatprep.subr.bf16.mxu0 0
    %843 = vmatpush1.bf16.xpose.msra.mxu0 0
    %844 = vmatprep.subr.bf16.mxu0 0
    %845 = vmatpush1.bf16.xpose.msra.mxu0 0
    %846 = vmatprep.subr.bf16.mxu0 0
    %847 = vmatpush1.bf16.xpose.msra.mxu0 0
    %848 = vmatprep.mubr.bf16.mxu0 0
    %849 = vmatmul.mubr.bf16.gmra.mrb[0].mxu0 %v811
    %v850 = vpop.f32.mrb[0].mxu0
    %v851 = vadd.f32 0.0, %v850
    %v852 = vpop.f32.mrb[0].mxu0
    %v853 = vpop.f32.mrb[0].mxu0
    %v854 = vpop.f32.mrb[0].mxu0
    %855 = vdwg.mxu0
    %856 = vrot.lane.b32.xlu0 %v263, 112
    %v857 = vpop.permute.xlu0 %856
    %858 = vrot.lane.b32.xlu0 %v263, 80
    %v859 = vpop.permute.xlu0 %858
    %v861 = vsel %vm267, %v857, 0
    %v864 = vsel %vm267, %v859, 0
    %866 = vmatprep.subr.bf16.mxu0 0
    %867 = vmatpush1.bf16.xpose.msra.mxu0 %v864
    %868 = vmatprep.subr.bf16.mxu0 0
    %869 = vmatpush1.bf16.xpose.msra.mxu0 0
    %870 = vmatprep.subr.bf16.mxu0 0
    %871 = vmatpush1.bf16.xpose.msra.mxu0 0
    %872 = vmatprep.subr.bf16.mxu0 0
    %873 = vmatpush1.bf16.xpose.msra.mxu0 0
    %874 = vmatprep.subr.bf16.mxu0 0
    %875 = vmatpush1.bf16.xpose.msra.mxu0 0
    %876 = vmatprep.subr.bf16.mxu0 0
    %877 = vmatpush1.bf16.xpose.msra.mxu0 0
    %878 = vmatprep.subr.bf16.mxu0 0
    %879 = vmatpush1.bf16.xpose.msra.mxu0 0
    %880 = vmatprep.subr.bf16.mxu0 0
    %881 = vmatpush1.bf16.xpose.msra.mxu0 0
    %882 = vmatprep.subr.bf16.mxu0 0
    %883 = vmatpush1.bf16.xpose.msra.mxu0 0
    %884 = vmatprep.subr.bf16.mxu0 0
    %885 = vmatpush1.bf16.xpose.msra.mxu0 0
    %886 = vmatprep.subr.bf16.mxu0 0
    %887 = vmatpush1.bf16.xpose.msra.mxu0 0
    %888 = vmatprep.subr.bf16.mxu0 0
    %889 = vmatpush1.bf16.xpose.msra.mxu0 0
    %890 = vmatprep.subr.bf16.mxu0 0
    %891 = vmatpush1.bf16.xpose.msra.mxu0 0
    %892 = vmatprep.subr.bf16.mxu0 0
    %893 = vmatpush1.bf16.xpose.msra.mxu0 0
    %894 = vmatprep.subr.bf16.mxu0 0
    %895 = vmatpush1.bf16.xpose.msra.mxu0 0
    %896 = vmatprep.subr.bf16.mxu0 0
    %897 = vmatpush1.bf16.xpose.msra.mxu0 0
    %898 = vmatprep.mubr.bf16.mxu0 0
    %899 = vmatmul.mubr.bf16.gmra.mrb[0].mxu0 %v861
    %v900 = vpop.f32.mrb[0].mxu0
    %v901 = vadd.f32 0.0, %v900
    %v902 = vpop.f32.mrb[0].mxu0
    %v903 = vpop.f32.mrb[0].mxu0
    %v904 = vpop.f32.mrb[0].mxu0
    %905 = vdwg.mxu0
    %v906 = vsel %vm267, %v851, -inf
    %907 = vmax.xlane.f32.xlu0 %v906
    %v908 = vpop.xlane.xlu0 %907
    %v909 = vsel %vm267, %v901, -inf
    %910 = vmax.xlane.f32.xlu0 %v909
    %v911 = vpop.xlane.xlu0 %910
    %v912 = vsub.f32 %v851, %v908
    %v913 = vsub.f32 %v901, %v911
    %v914 = vmul.f32 %v912, 1.442695
    %v915 = vpow.pop %v914
    %v916 = vmul.f32 %v913, 1.442695
    %v917 = vpow.pop %v916
    %v918 = vsel %vm267, %v915, 0.0
    %919 = vadd.xlane.f32.xlu0 %v918
    %v920 = vpop.xlane.xlu0 %919
    %v921 = vsel %vm267, %v917, 0.0
    %922 = vadd.xlane.f32.xlu0 %v921
    %v923 = vpop.xlane.xlu0 %922
    %v924 = vrcp.pop %v920
    %v925 = vrcp.pop %v923
    %v926 = vmul.f32 %v915, %v924
    %v927 = vmul.f32 %v917, %v925
    %v928 = vpack.c.bf16 %v926, %v926
    %v929 = vpack.c.bf16 %v927, %v927
    %930 = vrot.lane.b32.xlu0 %v262, 48
    %v931 = vpop.permute.xlu0 %930
    %v933 = vsel %vm267, %v928, 0
    %v936 = vsel %vm392, %v931, 0
    %938 = vmatprep.subr.bf16.mxu0 0
    %939 = vmatpush1.bf16.msra.mxu0 %v936
    %940 = vmatprep.subr.bf16.mxu0 0
    %941 = vmatpush1.bf16.msra.mxu0 0
    %942 = vmatprep.subr.bf16.mxu0 0
    %943 = vmatpush1.bf16.msra.mxu0 0
    %944 = vmatprep.subr.bf16.mxu0 0
    %945 = vmatpush1.bf16.msra.mxu0 0
    %946 = vmatprep.subr.bf16.mxu0 0
    %947 = vmatpush1.bf16.msra.mxu0 0
    %948 = vmatprep.subr.bf16.mxu0 0
    %949 = vmatpush1.bf16.msra.mxu0 0
    %950 = vmatprep.subr.bf16.mxu0 0
    %951 = vmatpush1.bf16.msra.mxu0 0
    %952 = vmatprep.subr.bf16.mxu0 0
    %953 = vmatpush1.bf16.msra.mxu0 0
    %954 = vmatprep.subr.bf16.mxu0 0
    %955 = vmatpush1.bf16.msra.mxu0 0
    %956 = vmatprep.subr.bf16.mxu0 0
    %957 = vmatpush1.bf16.msra.mxu0 0
    %958 = vmatprep.subr.bf16.mxu0 0
    %959 = vmatpush1.bf16.msra.mxu0 0
    %960 = vmatprep.subr.bf16.mxu0 0
    %961 = vmatpush1.bf16.msra.mxu0 0
    %962 = vmatprep.subr.bf16.mxu0 0
    %963 = vmatpush1.bf16.msra.mxu0 0
    %964 = vmatprep.subr.bf16.mxu0 0
    %965 = vmatpush1.bf16.msra.mxu0 0
    %966 = vmatprep.subr.bf16.mxu0 0
    %967 = vmatpush1.bf16.msra.mxu0 0
    %968 = vmatprep.subr.bf16.mxu0 0
    %969 = vmatpush1.bf16.msra.mxu0 0
    %970 = vmatprep.mubr.bf16.mxu0 0
    %971 = vmatmul.mubr.bf16.gmra.mrb[0].mxu0 %v933
    %v972 = vpop.f32.mrb[0].mxu0
    %v973 = vadd.f32 0.0, %v972
    %v974 = vpop.f32.mrb[0].mxu0
    %v975 = vpop.f32.mrb[0].mxu0
    %v976 = vpop.f32.mrb[0].mxu0
    %977 = vdwg.mxu0
    %978 = vrot.lane.b32.xlu0 %v263, 48
    %v979 = vpop.permute.xlu0 %978
    %v981 = vsel %vm267, %v929, 0
    %v984 = vsel %vm392, %v979, 0
    %986 = vmatprep.subr.bf16.mxu0 0
    %987 = vmatpush1.bf16.msra.mxu0 %v984
    %988 = vmatprep.subr.bf16.mxu0 0
    %989 = vmatpush1.bf16.msra.mxu0 0
    %990 = vmatprep.subr.bf16.mxu0 0
    %991 = vmatpush1.bf16.msra.mxu0 0
    %992 = vmatprep.subr.bf16.mxu0 0
    %993 = vmatpush1.bf16.msra.mxu0 0
    %994 = vmatprep.subr.bf16.mxu0 0
    %995 = vmatpush1.bf16.msra.mxu0 0
    %996 = vmatprep.subr.bf16.mxu0 0
    %997 = vmatpush1.bf16.msra.mxu0 0
    %998 = vmatprep.subr.bf16.mxu0 0
    %999 = vmatpush1.bf16.msra.mxu0 0
    %1000 = vmatprep.subr.bf16.mxu0 0
    %1001 = vmatpush1.bf16.msra.mxu0 0
    %1002 = vmatprep.subr.bf16.mxu0 0
    %1003 = vmatpush1.bf16.msra.mxu0 0
    %1004 = vmatprep.subr.bf16.mxu0 0
    %1005 = vmatpush1.bf16.msra.mxu0 0
    %1006 = vmatprep.subr.bf16.mxu0 0
    %1007 = vmatpush1.bf16.msra.mxu0 0
    %1008 = vmatprep.subr.bf16.mxu0 0
    %1009 = vmatpush1.bf16.msra.mxu0 0
    %1010 = vmatprep.subr.bf16.mxu0 0
    %1011 = vmatpush1.bf16.msra.mxu0 0
    %1012 = vmatprep.subr.bf16.mxu0 0
    %1013 = vmatpush1.bf16.msra.mxu0 0
    %1014 = vmatprep.subr.bf16.mxu0 0
    %1015 = vmatpush1.bf16.msra.mxu0 0
    %1016 = vmatprep.subr.bf16.mxu0 0
    %1017 = vmatpush1.bf16.msra.mxu0 0
    %1018 = vmatprep.mubr.bf16.mxu0 0
    %1019 = vmatmul.mubr.bf16.gmra.mrb[0].mxu0 %v981
    %v1020 = vpop.f32.mrb[0].mxu0
    %v1021 = vadd.f32 0.0, %v1020
    %v1022 = vpop.f32.mrb[0].mxu0
    %v1023 = vpop.f32.mrb[0].mxu0
    %v1024 = vpop.f32.mrb[0].mxu0
    %1025 = vdwg.mxu0
    %v1026 = vpack.c.bf16 %v1021, %v973
    %v1027 = vpack.c.b16 %v212, %v212
    %1028 = vrot.lane.b32.xlu0 %v1027, 32
    %v1029 = vpop.permute.xlu0 %1028
    %v1031 = vsel %vm267, %v1026, 0
    %v1034 = vsel %vm392, %v1029, 0
    %1036 = vmatprep.subr.bf16.mxu0 0
    %1037 = vmatpush1.bf16.msra.mxu0 %v1034
    %1038 = vmatprep.subr.bf16.mxu0 0
    %1039 = vmatpush1.bf16.msra.mxu0 0
    %1040 = vmatprep.subr.bf16.mxu0 0
    %1041 = vmatpush1.bf16.msra.mxu0 0
    %1042 = vmatprep.subr.bf16.mxu0 0
    %1043 = vmatpush1.bf16.msra.mxu0 0
    %1044 = vmatprep.subr.bf16.mxu0 0
    %1045 = vmatpush1.bf16.msra.mxu0 0
    %1046 = vmatprep.subr.bf16.mxu0 0
    %1047 = vmatpush1.bf16.msra.mxu0 0
    %1048 = vmatprep.subr.bf16.mxu0 0
    %1049 = vmatpush1.bf16.msra.mxu0 0
    %1050 = vmatprep.subr.bf16.mxu0 0
    %1051 = vmatpush1.bf16.msra.mxu0 0
    %1052 = vmatprep.subr.bf16.mxu0 0
    %1053 = vmatpush1.bf16.msra.mxu0 0
    %1054 = vmatprep.subr.bf16.mxu0 0
    %1055 = vmatpush1.bf16.msra.mxu0 0
    %1056 = vmatprep.subr.bf16.mxu0 0
    %1057 = vmatpush1.bf16.msra.mxu0 0
    %1058 = vmatprep.subr.bf16.mxu0 0
    %1059 = vmatpush1.bf16.msra.mxu0 0
    %1060 = vmatprep.subr.bf16.mxu0 0
    %1061 = vmatpush1.bf16.msra.mxu0 0
    %1062 = vmatprep.subr.bf16.mxu0 0
    %1063 = vmatpush1.bf16.msra.mxu0 0
    %1064 = vmatprep.subr.bf16.mxu0 0
    %1065 = vmatpush1.bf16.msra.mxu0 0
    %1066 = vmatprep.subr.bf16.mxu0 0
    %1067 = vmatpush1.bf16.msra.mxu0 0
    %1068 = vmatprep.mubr.bf16.mxu0 0
    %1069 = vmatmul.mubr.bf16.gmra.mrb[0].mxu0 %v1031
    %v1070 = vpop.f32.mrb[0].mxu0
    %v1071 = vadd.f32 0.0, %v1070
    %v1072 = vpop.f32.mrb[0].mxu0
    %v1073 = vpop.f32.mrb[0].mxu0
    %v1074 = vadd.f32 0.0, %v1073
    %v1075 = vpop.f32.mrb[0].mxu0
    %1076 = vdwg.mxu0
    %v1077 = vadd.f32 %v800, %v1071
    %v1078 = vadd.f32 %v803, %v1074
    %1079 = vrot.lane.b32.xlu0 %v262, 104
    %v1080 = vpop.permute.xlu0 %1079
    %1081 = vrot.lane.b32.xlu0 %v262, 72
    %v1082 = vpop.permute.xlu0 %1081
    %v1084 = vsel %vm267, %v1080, 0
    %v1087 = vsel %vm267, %v1082, 0
    %1089 = vmatprep.subr.bf16.mxu0 0
    %1090 = vmatpush1.bf16.xpose.msra.mxu0 %v1087
    %1091 = vmatprep.subr.bf16.mxu0 0
    %1092 = vmatpush1.bf16.xpose.msra.mxu0 0
    %1093 = vmatprep.subr.bf16.mxu0 0
    %1094 = vmatpush1.bf16.xpose.msra.mxu0 0
    %1095 = vmatprep.subr.bf16.mxu0 0
    %1096 = vmatpush1.bf16.xpose.msra.mxu0 0
    %1097 = vmatprep.subr.bf16.mxu0 0
    %1098 = vmatpush1.bf16.xpose.msra.mxu0 0
    %1099 = vmatprep.subr.bf16.mxu0 0
    %1100 = vmatpush1.bf16.xpose.msra.mxu0 0
    %1101 = vmatprep.subr.bf16.mxu0 0
    %1102 = vmatpush1.bf16.xpose.msra.mxu0 0
    %1103 = vmatprep.subr.bf16.mxu0 0
    %1104 = vmatpush1.bf16.xpose.msra.mxu0 0
    %1105 = vmatprep.subr.bf16.mxu0 0
    %1106 = vmatpush1.bf16.xpose.msra.mxu0 0
    %1107 = vmatprep.subr.bf16.mxu0 0
    %1108 = vmatpush1.bf16.xpose.msra.mxu0 0
    %1109 = vmatprep.subr.bf16.mxu0 0
    %1110 = vmatpush1.bf16.xpose.msra.mxu0 0
    %1111 = vmatprep.subr.bf16.mxu0 0
    %1112 = vmatpush1.bf16.xpose.msra.mxu0 0
    %1113 = vmatprep.subr.bf16.mxu0 0
    %1114 = vmatpush1.bf16.xpose.msra.mxu0 0
    %1115 = vmatprep.subr.bf16.mxu0 0
    %1116 = vmatpush1.bf16.xpose.msra.mxu0 0
    %1117 = vmatprep.subr.bf16.mxu0 0
    %1118 = vmatpush1.bf16.xpose.msra.mxu0 0
    %1119 = vmatprep.subr.bf16.mxu0 0
    %1120 = vmatpush1.bf16.xpose.msra.mxu0 0
    %1121 = vmatprep.mubr.bf16.mxu0 0
    %1122 = vmatmul.mubr.bf16.gmra.mrb[0].mxu0 %v1084
    %v1123 = vpop.f32.mrb[0].mxu0
    %v1124 = vadd.f32 0.0, %v1123
    %v1125 = vpop.f32.mrb[0].mxu0
    %v1126 = vpop.f32.mrb[0].mxu0
    %v1127 = vpop.f32.mrb[0].mxu0
    %1128 = vdwg.mxu0
    %1129 = vrot.lane.b32.xlu0 %v263, 104
    %v1130 = vpop.permute.xlu0 %1129
    %1131 = vrot.lane.b32.xlu0 %v263, 72
    %v1132 = vpop.permute.xlu0 %1131
    %v1134 = vsel %vm267, %v1130, 0
    %v1137 = vsel %vm267, %v1132, 0
    %1139 = vmatprep.subr.bf16.mxu0 0
    %1140 = vmatpush1.bf16.xpose.msra.mxu0 %v1137
    %1141 = vmatprep.subr.bf16.mxu0 0
    %1142 = vmatpush1.bf16.xpose.msra.mxu0 0
    %1143 = vmatprep.subr.bf16.mxu0 0
    %1144 = vmatpush1.bf16.xpose.msra.mxu0 0
    %1145 = vmatprep.subr.bf16.mxu0 0
    %1146 = vmatpush1.bf16.xpose.msra.mxu0 0
    %1147 = vmatprep.subr.bf16.mxu0 0
    %1148 = vmatpush1.bf16.xpose.msra.mxu0 0
    %1149 = vmatprep.subr.bf16.mxu0 0
    %1150 = vmatpush1.bf16.xpose.msra.mxu0 0
    %1151 = vmatprep.subr.bf16.mxu0 0
    %1152 = vmatpush1.bf16.xpose.msra.mxu0 0
    %1153 = vmatprep.subr.bf16.mxu0 0
    %1154 = vmatpush1.bf16.xpose.msra.mxu0 0
    %1155 = vmatprep.subr.bf16.mxu0 0
    %1156 = vmatpush1.bf16.xpose.msra.mxu0 0
    %1157 = vmatprep.subr.bf16.mxu0 0
    %1158 = vmatpush1.bf16.xpose.msra.mxu0 0
    %1159 = vmatprep.subr.bf16.mxu0 0
    %1160 = vmatpush1.bf16.xpose.msra.mxu0 0
    %1161 = vmatprep.subr.bf16.mxu0 0
    %1162 = vmatpush1.bf16.xpose.msra.mxu0 0
    %1163 = vmatprep.subr.bf16.mxu0 0
    %1164 = vmatpush1.bf16.xpose.msra.mxu0 0
    %1165 = vmatprep.subr.bf16.mxu0 0
    %1166 = vmatpush1.bf16.xpose.msra.mxu0 0
    %1167 = vmatprep.subr.bf16.mxu0 0
    %1168 = vmatpush1.bf16.xpose.msra.mxu0 0
    %1169 = vmatprep.subr.bf16.mxu0 0
    %1170 = vmatpush1.bf16.xpose.msra.mxu0 0
    %1171 = vmatprep.mubr.bf16.mxu0 0
    %1172 = vmatmul.mubr.bf16.gmra.mrb[0].mxu0 %v1134
    %v1173 = vpop.f32.mrb[0].mxu0
    %v1174 = vadd.f32 0.0, %v1173
    %v1175 = vpop.f32.mrb[0].mxu0
    %v1176 = vpop.f32.mrb[0].mxu0
    %v1177 = vpop.f32.mrb[0].mxu0
    %1178 = vdwg.mxu0
    %v1179 = vsel %vm267, %v1124, -inf
    %1180 = vmax.xlane.f32.xlu0 %v1179
    %v1181 = vpop.xlane.xlu0 %1180
    %v1182 = vsel %vm267, %v1174, -inf
    %1183 = vmax.xlane.f32.xlu0 %v1182
    %v1184 = vpop.xlane.xlu0 %1183
    %v1185 = vsub.f32 %v1124, %v1181
    %v1186 = vsub.f32 %v1174, %v1184
    %v1187 = vmul.f32 %v1185, 1.442695
    %v1188 = vpow.pop %v1187
    %v1189 = vmul.f32 %v1186, 1.442695
    %v1190 = vpow.pop %v1189
    %v1191 = vsel %vm267, %v1188, 0.0
    %1192 = vadd.xlane.f32.xlu0 %v1191
    %v1193 = vpop.xlane.xlu0 %1192
    %v1194 = vsel %vm267, %v1190, 0.0
    %1195 = vadd.xlane.f32.xlu0 %v1194
    %v1196 = vpop.xlane.xlu0 %1195
    %v1197 = vrcp.pop %v1193
    %v1198 = vrcp.pop %v1196
    %v1199 = vmul.f32 %v1188, %v1197
    %v1200 = vmul.f32 %v1190, %v1198
    %v1201 = vpack.c.bf16 %v1199, %v1199
    %v1202 = vpack.c.bf16 %v1200, %v1200
    %1203 = vrot.lane.b32.xlu0 %v262, 40
    %v1204 = vpop.permute.xlu0 %1203
    %v1206 = vsel %vm267, %v1201, 0
    %v1209 = vsel %vm392, %v1204, 0
    %1211 = vmatprep.subr.bf16.mxu0 0
    %1212 = vmatpush1.bf16.msra.mxu0 %v1209
    %1213 = vmatprep.subr.bf16.mxu0 0
    %1214 = vmatpush1.bf16.msra.mxu0 0
    %1215 = vmatprep.subr.bf16.mxu0 0
    %1216 = vmatpush1.bf16.msra.mxu0 0
    %1217 = vmatprep.subr.bf16.mxu0 0
    %1218 = vmatpush1.bf16.msra.mxu0 0
    %1219 = vmatprep.subr.bf16.mxu0 0
    %1220 = vmatpush1.bf16.msra.mxu0 0
    %1221 = vmatprep.subr.bf16.mxu0 0
    %1222 = vmatpush1.bf16.msra.mxu0 0
    %1223 = vmatprep.subr.bf16.mxu0 0
    %1224 = vmatpush1.bf16.msra.mxu0 0
    %1225 = vmatprep.subr.bf16.mxu0 0
    %1226 = vmatpush1.bf16.msra.mxu0 0
    %1227 = vmatprep.subr.bf16.mxu0 0
    %1228 = vmatpush1.bf16.msra.mxu0 0
    %1229 = vmatprep.subr.bf16.mxu0 0
    %1230 = vmatpush1.bf16.msra.mxu0 0
    %1231 = vmatprep.subr.bf16.mxu0 0
    %1232 = vmatpush1.bf16.msra.mxu0 0
    %1233 = vmatprep.subr.bf16.mxu0 0
    %1234 = vmatpush1.bf16.msra.mxu0 0
    %1235 = vmatprep.subr.bf16.mxu0 0
    %1236 = vmatpush1.bf16.msra.mxu0 0
    %1237 = vmatprep.subr.bf16.mxu0 0
    %1238 = vmatpush1.bf16.msra.mxu0 0
    %1239 = vmatprep.subr.bf16.mxu0 0
    %1240 = vmatpush1.bf16.msra.mxu0 0
    %1241 = vmatprep.subr.bf16.mxu0 0
    %1242 = vmatpush1.bf16.msra.mxu0 0
    %1243 = vmatprep.mubr.bf16.mxu0 0
    %1244 = vmatmul.mubr.bf16.gmra.mrb[0].mxu0 %v1206
    %v1245 = vpop.f32.mrb[0].mxu0
    %v1246 = vadd.f32 0.0, %v1245
    %v1247 = vpop.f32.mrb[0].mxu0
    %v1248 = vpop.f32.mrb[0].mxu0
    %v1249 = vpop.f32.mrb[0].mxu0
    %1250 = vdwg.mxu0
    %1251 = vrot.lane.b32.xlu0 %v263, 40
    %v1252 = vpop.permute.xlu0 %1251
    %v1254 = vsel %vm267, %v1202, 0
    %v1257 = vsel %vm392, %v1252, 0
    %1259 = vmatprep.subr.bf16.mxu0 0
    %1260 = vmatpush1.bf16.msra.mxu0 %v1257
    %1261 = vmatprep.subr.bf16.mxu0 0
    %1262 = vmatpush1.bf16.msra.mxu0 0
    %1263 = vmatprep.subr.bf16.mxu0 0
    %1264 = vmatpush1.bf16.msra.mxu0 0
    %1265 = vmatprep.subr.bf16.mxu0 0
    %1266 = vmatpush1.bf16.msra.mxu0 0
    %1267 = vmatprep.subr.bf16.mxu0 0
    %1268 = vmatpush1.bf16.msra.mxu0 0
    %1269 = vmatprep.subr.bf16.mxu0 0
    %1270 = vmatpush1.bf16.msra.mxu0 0
    %1271 = vmatprep.subr.bf16.mxu0 0
    %1272 = vmatpush1.bf16.msra.mxu0 0
    %1273 = vmatprep.subr.bf16.mxu0 0
    %1274 = vmatpush1.bf16.msra.mxu0 0
    %1275 = vmatprep.subr.bf16.mxu0 0
    %1276 = vmatpush1.bf16.msra.mxu0 0
    %1277 = vmatprep.subr.bf16.mxu0 0
    %1278 = vmatpush1.bf16.msra.mxu0 0
    %1279 = vmatprep.subr.bf16.mxu0 0
    %1280 = vmatpush1.bf16.msra.mxu0 0
    %1281 = vmatprep.subr.bf16.mxu0 0
    %1282 = vmatpush1.bf16.msra.mxu0 0
    %1283 = vmatprep.subr.bf16.mxu0 0
    %1284 = vmatpush1.bf16.msra.mxu0 0
    %1285 = vmatprep.subr.bf16.mxu0 0
    %1286 = vmatpush1.bf16.msra.mxu0 0
    %1287 = vmatprep.subr.bf16.mxu0 0
    %1288 = vmatpush1.bf16.msra.mxu0 0
    %1289 = vmatprep.subr.bf16.mxu0 0
    %1290 = vmatpush1.bf16.msra.mxu0 0
    %1291 = vmatprep.mubr.bf16.mxu0 0
    %1292 = vmatmul.mubr.bf16.gmra.mrb[0].mxu0 %v1254
    %v1293 = vpop.f32.mrb[0].mxu0
    %v1294 = vadd.f32 0.0, %v1293
    %v1295 = vpop.f32.mrb[0].mxu0
    %v1296 = vpop.f32.mrb[0].mxu0
    %v1297 = vpop.f32.mrb[0].mxu0
    %1298 = vdwg.mxu0
    %v1299 = vpack.c.bf16 %v1294, %v1246
    %v1300 = vpack.c.b16 %v213, %v213
    %1301 = vrot.lane.b32.xlu0 %v1300, 32
    %v1302 = vpop.permute.xlu0 %1301
    %v1304 = vsel %vm267, %v1299, 0
    %v1307 = vsel %vm392, %v1302, 0
    %1309 = vmatprep.subr.bf16.mxu0 0
    %1310 = vmatpush1.bf16.msra.mxu0 %v1307
    %1311 = vmatprep.subr.bf16.mxu0 0
    %1312 = vmatpush1.bf16.msra.mxu0 0
    %1313 = vmatprep.subr.bf16.mxu0 0
    %1314 = vmatpush1.bf16.msra.mxu0 0
    %1315 = vmatprep.subr.bf16.mxu0 0
    %1316 = vmatpush1.bf16.msra.mxu0 0
    %1317 = vmatprep.subr.bf16.mxu0 0
    %1318 = vmatpush1.bf16.msra.mxu0 0
    %1319 = vmatprep.subr.bf16.mxu0 0
    %1320 = vmatpush1.bf16.msra.mxu0 0
    %1321 = vmatprep.subr.bf16.mxu0 0
    %1322 = vmatpush1.bf16.msra.mxu0 0
    %1323 = vmatprep.subr.bf16.mxu0 0
    %1324 = vmatpush1.bf16.msra.mxu0 0
    %1325 = vmatprep.subr.bf16.mxu0 0
    %1326 = vmatpush1.bf16.msra.mxu0 0
    %1327 = vmatprep.subr.bf16.mxu0 0
    %1328 = vmatpush1.bf16.msra.mxu0 0
    %1329 = vmatprep.subr.bf16.mxu0 0
    %1330 = vmatpush1.bf16.msra.mxu0 0
    %1331 = vmatprep.subr.bf16.mxu0 0
    %1332 = vmatpush1.bf16.msra.mxu0 0
    %1333 = vmatprep.subr.bf16.mxu0 0
    %1334 = vmatpush1.bf16.msra.mxu0 0
    %1335 = vmatprep.subr.bf16.mxu0 0
    %1336 = vmatpush1.bf16.msra.mxu0 0
    %1337 = vmatprep.subr.bf16.mxu0 0
    %1338 = vmatpush1.bf16.msra.mxu0 0
    %1339 = vmatprep.subr.bf16.mxu0 0
    %1340 = vmatpush1.bf16.msra.mxu0 0
    %1341 = vmatprep.mubr.bf16.mxu0 0
    %1342 = vmatmul.mubr.bf16.gmra.mrb[0].mxu0 %v1304
    %v1343 = vpop.f32.mrb[0].mxu0
    %v1344 = vadd.f32 0.0, %v1343
    %v1345 = vpop.f32.mrb[0].mxu0
    %v1346 = vpop.f32.mrb[0].mxu0
    %v1347 = vadd.f32 0.0, %v1346
    %v1348 = vpop.f32.mrb[0].mxu0
    %1349 = vdwg.mxu0
    %v1350 = vadd.f32 %v1077, %v1344
    %v1351 = vadd.f32 %v1078, %v1347
    %v1352 = vadd.f32 %v1350, %v63
    %v1353 = vadd.f32 %v1351, %v63
    %v1354 = vadd.f32 %v1352, %v201
    %v1355 = vadd.f32 %v1353, %v202
    %v1356 = vsel %vm167, %v1354, 0.0
    %1357 = vadd.xlane.f32.xlu0 %v1356
    %v1358 = vpop.xlane.xlu0 %1357
    %v1359 = vsel %vm167, %v1355, 0.0
    %1360 = vadd.xlane.f32.xlu0 %v1359
    %v1361 = vpop.xlane.xlu0 %1360
    %v1362 = vmul.f32 %v1358, %v174
    %v1363 = vmul.f32 %v1361, %v174
    %v1364 = vmul.f32 %v1354, %v1354
    %v1365 = vmul.f32 %v1355, %v1355
    %v1366 = vsel %vm167, %v1364, 0.0
    %1367 = vadd.xlane.f32.xlu0 %v1366
    %v1368 = vpop.xlane.xlu0 %1367
    %v1369 = vsel %vm167, %v1365, 0.0
    %1370 = vadd.xlane.f32.xlu0 %v1369
    %v1371 = vpop.xlane.xlu0 %1370
    %v1372 = vmul.f32 %v1368, %v174
    %v1373 = vmul.f32 %v1371, %v174
    %v1374 = vmul.f32 %v1362, %v1362
    %v1375 = vmul.f32 %v1363, %v1363
    %v1376 = vsub.f32 %v1372, %v1374
    %v1377 = vsub.f32 %v1373, %v1375
    %v1378 = vsub.f32 %v1354, %v1362
    %v1379 = vsub.f32 %v1355, %v1363
    %v1380 = vadd.f32 %v1376, 1e-12
    %v1381 = vadd.f32 %v1377, 1e-12
    %v1382 = vrsqrt.pop %v1380
    %v1383 = vrsqrt.pop %v1381
    %v1384 = vmul.f32 %v1378, %v1382
    %v1385 = vmul.f32 %v1379, %v1383
    %v1386 = vmul.f32 %v1384, %v75
    %v1387 = vmul.f32 %v1385, %v75
    %v1388 = vadd.f32 %v1386, %v79
    %v1389 = vadd.f32 %v1387, %v79
    %v1390 = vpack.c.bf16 %v1389, %v1388
    %v1391 = vunpack.c.h.b16 %v42
    %v1392 = vunpack.c.h.b16 %v43
    %v1393 = vunpack.c.h.b16 %v44
    %v1394 = vunpack.c.h.b16 %v45
    %v1395 = vpack.c.b16 %v1392, %v1391
    %v1396 = vpack.c.b16 %v1394, %v1393
    %v1400 = vsel %vm167, %v1390, 0
    %1402 = vmatprep.subr.bf16.mxu0 0
    %1403 = vmatpush1.bf16.msra.mxu0 %v1395
    %1404 = vmatprep.subr.bf16.mxu0 0
    %1405 = vmatpush1.bf16.msra.mxu0 %v1396
    %1406 = vmatprep.subr.bf16.mxu0 0
    %1407 = vmatpush1.bf16.msra.mxu0 0
    %1408 = vmatprep.subr.bf16.mxu0 0
    %1409 = vmatpush1.bf16.msra.mxu0 0
    %1410 = vmatprep.subr.bf16.mxu0 0
    %1411 = vmatpush1.bf16.msra.mxu0 0
    %1412 = vmatprep.subr.bf16.mxu0 0
    %1413 = vmatpush1.bf16.msra.mxu0 0
    %1414 = vmatprep.subr.bf16.mxu0 0
    %1415 = vmatpush1.bf16.msra.mxu0 0
    %1416 = vmatprep.subr.bf16.mxu0 0
    %1417 = vmatpush1.bf16.msra.mxu0 0
    %1418 = vmatprep.subr.bf16.mxu0 0
    %1419 = vmatpush1.bf16.msra.mxu0 0
    %1420 = vmatprep.subr.bf16.mxu0 0
    %1421 = vmatpush1.bf16.msra.mxu0 0
    %1422 = vmatprep.subr.bf16.mxu0 0
    %1423 = vmatpush1.bf16.msra.mxu0 0
    %1424 = vmatprep.subr.bf16.mxu0 0
    %1425 = vmatpush1.bf16.msra.mxu0 0
    %1426 = vmatprep.subr.bf16.mxu0 0
    %1427 = vmatpush1.bf16.msra.mxu0 0
    %1428 = vmatprep.subr.bf16.mxu0 0
    %1429 = vmatpush1.bf16.msra.mxu0 0
    %1430 = vmatprep.subr.bf16.mxu0 0
    %1431 = vmatpush1.bf16.msra.mxu0 0
    %1432 = vmatprep.subr.bf16.mxu0 0
    %1433 = vmatpush1.bf16.msra.mxu0 0
    %1434 = vmatprep.mubr.bf16.mxu0 0
    %1435 = vmatmul.mubr.bf16.gmra.mrb[0].mxu0 %v1400
    %v1436 = vpop.f32.mrb[0].mxu0
    %v1437 = vadd.f32 %v67, %v1436
    %v1438 = vpop.f32.mrb[0].mxu0
    %v1439 = vpop.f32.mrb[0].mxu0
    %v1440 = vadd.f32 %v67, %v1439
    %v1441 = vpop.f32.mrb[0].mxu0
    %1442 = vdwg.mxu0
    %v1443 = vmul.f32 %v1437, 0.5
    %v1444 = vmul.f32 %v1440, 0.5
    %v1445 = vmul.f32 %v1437, 0.044715
    %v1446 = vmul.f32 %v1440, 0.044715
    %v1447 = vmul.f32 %v1445, %v1437
    %v1448 = vmul.f32 %v1446, %v1440
    %v1449 = vmul.f32 %v1447, %v1437
    %v1450 = vmul.f32 %v1448, %v1440
    %v1451 = vadd.f32 %v1437, %v1449
    %v1452 = vadd.f32 %v1440, %v1450
    %v1453 = vmul.f32 %v1451, 0.7978846
    %v1454 = vmul.f32 %v1452, 0.7978846
    %v1455 = vtanh.pop %v1453
    %v1456 = vtanh.pop %v1454
    %v1457 = vadd.f32 %v1455, 1.0
    %v1458 = vadd.f32 %v1456, 1.0
    %v1459 = vmul.f32 %v1443, %v1457
    %v1460 = vmul.f32 %v1444, %v1458
    %v1461 = vpack.c.bf16 %v1460, %v1459
    %v1470 = vunpack.c.l.b16 %v46
    %v1471 = vunpack.c.l.b16 %v47
    %v1472 = vunpack.c.l.b16 %v48
    %v1473 = vunpack.c.l.b16 %v49
    %v1474 = vunpack.c.l.b16 %v50
    %v1475 = vunpack.c.l.b16 %v51
    %v1476 = vunpack.c.l.b16 %v52
    %v1477 = vunpack.c.l.b16 %v53
    %v1478 = vpack.c.b16 %v1471, %v1470
    %v1479 = vpack.c.b16 %v1473, %v1472
    %v1480 = vpack.c.b16 %v1475, %v1474
    %v1481 = vpack.c.b16 %v1477, %v1476
    %vm1486 = vcmask 523264
    %v1488 = vsel %vm1486, %v1461, 0
    %1490 = vmatprep.subr.bf16.mxu0 0
    %1491 = vmatpush1.bf16.msra.mxu0 %v1478
    %1492 = vmatprep.subr.bf16.mxu0 0
    %1493 = vmatpush1.bf16.msra.mxu0 %v1479
    %1494 = vmatprep.subr.bf16.mxu0 0
    %1495 = vmatpush1.bf16.msra.mxu0 %v1480
    %1496 = vmatprep.subr.bf16.mxu0 0
    %1497 = vmatpush1.bf16.msra.mxu0 %v1481
    %1498 = vmatprep.subr.bf16.mxu0 0
    %1499 = vmatpush1.bf16.msra.mxu0 0
    %1500 = vmatprep.subr.bf16.mxu0 0
    %1501 = vmatpush1.bf16.msra.mxu0 0
    %1502 = vmatprep.subr.bf16.mxu0 0
    %1503 = vmatpush1.bf16.msra.mxu0 0
    %1504 = vmatprep.subr.bf16.mxu0 0
    %1505 = vmatpush1.bf16.msra.mxu0 0
    %1506 = vmatprep.subr.bf16.mxu0 0
    %1507 = vmatpush1.bf16.msra.mxu0 0
    %1508 = vmatprep.subr.bf16.mxu0 0
    %1509 = vmatpush1.bf16.msra.mxu0 0
    %1510 = vmatprep.subr.bf16.mxu0 0
    %1511 = vmatpush1.bf16.msra.mxu0 0
    %1512 = vmatprep.subr.bf16.mxu0 0
    %1513 = vmatpush1.bf16.msra.mxu0 0
    %1514 = vmatprep.subr.bf16.mxu0 0
    %1515 = vmatpush1.bf16.msra.mxu0 0
    %1516 = vmatprep.subr.bf16.mxu0 0
    %1517 = vmatpush1.bf16.msra.mxu0 0
    %1518 = vmatprep.subr.bf16.mxu0 0
    %1519 = vmatpush1.bf16.msra.mxu0 0
    %1520 = vmatprep.subr.bf16.mxu0 0
    %1521 = vmatpush1.bf16.msra.mxu0 0
    %1522 = vmatprep.mubr.bf16.mxu0 0
    %1523 = vmatmul.mubr.bf16.gmra.mrb[0].mxu0 %v1488
    %v1524 = vpop.f32.mrb[0].mxu0
    %v1525 = vadd.f32 %v71, %v1524
    %v1526 = vpop.f32.mrb[0].mxu0
    %v1527 = vpop.f32.mrb[0].mxu0
    %v1528 = vadd.f32 %v71, %v1527
    %v1529 = vpop.f32.mrb[0].mxu0
    %1530 = vdwg.mxu0
    %v1531 = vadd.f32 %v1525, %v1388
    %v1532 = vadd.f32 %v1528, %v1389
    %v1533 = vsel %vm167, %v1531, 0.0
    %1534 = vadd.xlane.f32.xlu0 %v1533
    %v1535 = vpop.xlane.xlu0 %1534
    %v1536 = vsel %vm167, %v1532, 0.0
    %1537 = vadd.xlane.f32.xlu0 %v1536
    %v1538 = vpop.xlane.xlu0 %1537
    %v1539 = vmul.f32 %v1535, %v174
    %v1540 = vmul.f32 %v1538, %v174
    %v1541 = vmul.f32 %v1531, %v1531
    %v1542 = vmul.f32 %v1532, %v1532
    %v1543 = vsel %vm167, %v1541, 0.0
    %1544 = vadd.xlane.f32.xlu0 %v1543
    %v1545 = vpop.xlane.xlu0 %1544
    %v1546 = vsel %vm167, %v1542, 0.0
    %1547 = vadd.xlane.f32.xlu0 %v1546
    %v1548 = vpop.xlane.xlu0 %1547
    %v1549 = vmul.f32 %v1545, %v174
    %v1550 = vmul.f32 %v1548, %v174
    %v1551 = vmul.f32 %v1539, %v1539
    %v1552 = vmul.f32 %v1540, %v1540
    %v1553 = vsub.f32 %v1549, %v1551
    %v1554 = vsub.f32 %v1550, %v1552
    %v1555 = vsub.f32 %v1531, %v1539
    %v1556 = vsub.f32 %v1532, %v1540
    %v1557 = vadd.f32 %v1553, 1e-12
    %v1558 = vadd.f32 %v1554, 1e-12
    %v1559 = vrsqrt.pop %v1557
    %v1560 = vrsqrt.pop %v1558
    %v1561 = vmul.f32 %v1555, %v1559
    %v1562 = vmul.f32 %v1556, %v1560
    %v1563 = vmul.f32 %v1561, %v83
    %v1564 = vmul.f32 %v1562, %v83
    %v1565 = vadd.f32 %v1563, %v87
    %v1566 = vadd.f32 %v1564, %v87
    %1567 = vst.msk [vmem:[#allocation6] sm:$0xff] %vm167, %v1565
    %1568 = vst.msk [vmem:[#allocation6 + $0x8] sm:$0xff] %vm167, %v1566
    %v1569 = vpack.c.bf16 %v1566, %v1565
    %v1571 = vsel %vm167, %v1569, 0
    %1573 = vmatprep.subr.bf16.mxu0 0
    %1574 = vmatpush1.bf16.msra.mxu0 %v214
    %1575 = vmatprep.subr.bf16.mxu0 0
    %1576 = vmatpush1.bf16.msra.mxu0 %v215
    %1577 = vmatprep.subr.bf16.mxu0 0
    %1578 = vmatpush1.bf16.msra.mxu0 0
    %1579 = vmatprep.subr.bf16.mxu0 0
    %1580 = vmatpush1.bf16.msra.mxu0 0
    %1581 = vmatprep.subr.bf16.mxu0 0
    %1582 = vmatpush1.bf16.msra.mxu0 0
    %1583 = vmatprep.subr.bf16.mxu0 0
    %1584 = vmatpush1.bf16.msra.mxu0 0
    %1585 = vmatprep.subr.bf16.mxu0 0
    %1586 = vmatpush1.bf16.msra.mxu0 0
    %1587 = vmatprep.subr.bf16.mxu0 0
    %1588 = vmatpush1.bf16.msra.mxu0 0
    %1589 = vmatprep.subr.bf16.mxu0 0
    %1590 = vmatpush1.bf16.msra.mxu0 0
    %1591 = vmatprep.subr.bf16.mxu0 0
    %1592 = vmatpush1.bf16.msra.mxu0 0
    %1593 = vmatprep.subr.bf16.mxu0 0
    %1594 = vmatpush1.bf16.msra.mxu0 0
    %1595 = vmatprep.subr.bf16.mxu0 0
    %1596 = vmatpush1.bf16.msra.mxu0 0
    %1597 = vmatprep.subr.bf16.mxu0 0
    %1598 = vmatpush1.bf16.msra.mxu0 0
    %1599 = vmatprep.subr.bf16.mxu0 0
    %1600 = vmatpush1.bf16.msra.mxu0 0
    %1601 = vmatprep.subr.bf16.mxu0 0
    %1602 = vmatpush1.bf16.msra.mxu0 0
    %1603 = vmatprep.subr.bf16.mxu0 0
    %1604 = vmatpush1.bf16.msra.mxu0 0
    %1605 = vmatprep.mubr.bf16.mxu0 0
    %1606 = vmatmul.mubr.bf16.gmra.mrb[0].mxu0 %v1571
    %v1607 = vpop.f32.mrb[0].mxu0
    %v1608 = vadd.f32 %v59, %v1607
    %v1609 = vpop.f32.mrb[0].mxu0
    %v1610 = vpop.f32.mrb[0].mxu0
    %v1611 = vadd.f32 %v59, %v1610
    %v1612 = vpop.f32.mrb[0].mxu0
    %1613 = vdwg.mxu0
    %v1614 = vpack.c.bf16 %v1608, %v1608
    %v1615 = vpack.c.bf16 %v1611, %v1611
    %1617 = vrot.lane.b32.xlu0 %v1614, 96
    %v1618 = vpop.permute.xlu0 %1617
    %v1620 = vsel %vm267, %v1614, 0
    %v1623 = vsel %vm267, %v1618, 0
    %1625 = vmatprep.subr.bf16.mxu0 0
    %1626 = vmatpush1.bf16.xpose.msra.mxu0 %v1623
    %1627 = vmatprep.subr.bf16.mxu0 0
    %1628 = vmatpush1.bf16.xpose.msra.mxu0 0
    %1629 = vmatprep.subr.bf16.mxu0 0
    %1630 = vmatpush1.bf16.xpose.msra.mxu0 0
    %1631 = vmatprep.subr.bf16.mxu0 0
    %1632 = vmatpush1.bf16.xpose.msra.mxu0 0
    %1633 = vmatprep.subr.bf16.mxu0 0
    %1634 = vmatpush1.bf16.xpose.msra.mxu0 0
    %1635 = vmatprep.subr.bf16.mxu0 0
    %1636 = vmatpush1.bf16.xpose.msra.mxu0 0
    %1637 = vmatprep.subr.bf16.mxu0 0
    %1638 = vmatpush1.bf16.xpose.msra.mxu0 0
    %1639 = vmatprep.subr.bf16.mxu0 0
    %1640 = vmatpush1.bf16.xpose.msra.mxu0 0
    %1641 = vmatprep.subr.bf16.mxu0 0
    %1642 = vmatpush1.bf16.xpose.msra.mxu0 0
    %1643 = vmatprep.subr.bf16.mxu0 0
    %1644 = vmatpush1.bf16.xpose.msra.mxu0 0
    %1645 = vmatprep.subr.bf16.mxu0 0
    %1646 = vmatpush1.bf16.xpose.msra.mxu0 0
    %1647 = vmatprep.subr.bf16.mxu0 0
    %1648 = vmatpush1.bf16.xpose.msra.mxu0 0
    %1649 = vmatprep.subr.bf16.mxu0 0
    %1650 = vmatpush1.bf16.xpose.msra.mxu0 0
    %1651 = vmatprep.subr.bf16.mxu0 0
    %1652 = vmatpush1.bf16.xpose.msra.mxu0 0
    %1653 = vmatprep.subr.bf16.mxu0 0
    %1654 = vmatpush1.bf16.xpose.msra.mxu0 0
    %1655 = vmatprep.subr.bf16.mxu0 0
    %1656 = vmatpush1.bf16.xpose.msra.mxu0 0
    %1657 = vmatprep.mubr.bf16.mxu0 0
    %1658 = vmatmul.mubr.bf16.gmra.mrb[0].mxu0 %v1620
    %v1659 = vpop.f32.mrb[0].mxu0
    %v1660 = vadd.f32 0.0, %v1659
    %v1661 = vpop.f32.mrb[0].mxu0
    %v1662 = vpop.f32.mrb[0].mxu0
    %v1663 = vpop.f32.mrb[0].mxu0
    %1664 = vdwg.mxu0
    %1666 = vrot.lane.b32.xlu0 %v1615, 96
    %v1667 = vpop.permute.xlu0 %1666
    %v1669 = vsel %vm267, %v1615, 0
    %v1672 = vsel %vm267, %v1667, 0
    %1674 = vmatprep.subr.bf16.mxu0 0
    %1675 = vmatpush1.bf16.xpose.msra.mxu0 %v1672
    %1676 = vmatprep.subr.bf16.mxu0 0
    %1677 = vmatpush1.bf16.xpose.msra.mxu0 0
    %1678 = vmatprep.subr.bf16.mxu0 0
    %1679 = vmatpush1.bf16.xpose.msra.mxu0 0
    %1680 = vmatprep.subr.bf16.mxu0 0
    %1681 = vmatpush1.bf16.xpose.msra.mxu0 0
    %1682 = vmatprep.subr.bf16.mxu0 0
    %1683 = vmatpush1.bf16.xpose.msra.mxu0 0
    %1684 = vmatprep.subr.bf16.mxu0 0
    %1685 = vmatpush1.bf16.xpose.msra.mxu0 0
    %1686 = vmatprep.subr.bf16.mxu0 0
    %1687 = vmatpush1.bf16.xpose.msra.mxu0 0
    %1688 = vmatprep.subr.bf16.mxu0 0
    %1689 = vmatpush1.bf16.xpose.msra.mxu0 0
    %1690 = vmatprep.subr.bf16.mxu0 0
    %1691 = vmatpush1.bf16.xpose.msra.mxu0 0
    %1692 = vmatprep.subr.bf16.mxu0 0
    %1693 = vmatpush1.bf16.xpose.msra.mxu0 0
    %1694 = vmatprep.subr.bf16.mxu0 0
    %1695 = vmatpush1.bf16.xpose.msra.mxu0 0
    %1696 = vmatprep.subr.bf16.mxu0 0
    %1697 = vmatpush1.bf16.xpose.msra.mxu0 0
    %1698 = vmatprep.subr.bf16.mxu0 0
    %1699 = vmatpush1.bf16.xpose.msra.mxu0 0
    %1700 = vmatprep.subr.bf16.mxu0 0
    %1701 = vmatpush1.bf16.xpose.msra.mxu0 0
    %1702 = vmatprep.subr.bf16.mxu0 0
    %1703 = vmatpush1.bf16.xpose.msra.mxu0 0
    %1704 = vmatprep.subr.bf16.mxu0 0
    %1705 = vmatpush1.bf16.xpose.msra.mxu0 0
    %1706 = vmatprep.mubr.bf16.mxu0 0
    %1707 = vmatmul.mubr.bf16.gmra.mrb[0].mxu0 %v1669
    %v1708 = vpop.f32.mrb[0].mxu0
    %v1709 = vadd.f32 0.0, %v1708
    %v1710 = vpop.f32.mrb[0].mxu0
    %v1711 = vpop.f32.mrb[0].mxu0
    %v1712 = vpop.f32.mrb[0].mxu0
    %1713 = vdwg.mxu0
    %v1714 = vsel %vm267, %v1660, -inf
    %1715 = vmax.xlane.f32.xlu0 %v1714
    %v1716 = vpop.xlane.xlu0 %1715
    %v1717 = vsel %vm267, %v1709, -inf
    %1718 = vmax.xlane.f32.xlu0 %v1717
    %v1719 = vpop.xlane.xlu0 %1718
    %v1720 = vsub.f32 %v1660, %v1716
    %v1721 = vsub.f32 %v1709, %v1719
    %v1722 = vmul.f32 %v1720, 1.442695
    %v1723 = vpow.pop %v1722
    %v1724 = vmul.f32 %v1721, 1.442695
    %v1725 = vpow.pop %v1724
    %v1726 = vsel %vm267, %v1723, 0.0
    %1727 = vadd.xlane.f32.xlu0 %v1726
    %v1728 = vpop.xlane.xlu0 %1727
    %v1729 = vsel %vm267, %v1725, 0.0
    %1730 = vadd.xlane.f32.xlu0 %v1729
    %v1731 = vpop.xlane.xlu0 %1730
    %v1732 = vrcp.pop %v1728
    %v1733 = vrcp.pop %v1731
    %v1734 = vmul.f32 %v1723, %v1732
    %v1735 = vmul.f32 %v1725, %v1733
    %v1736 = vpack.c.bf16 %v1734, %v1734
    %v1737 = vpack.c.bf16 %v1735, %v1735
    %1738 = vrot.lane.b32.xlu0 %v1614, 64
    %v1739 = vpop.permute.xlu0 %1738
    %v1741 = vsel %vm267, %v1736, 0
    %v1744 = vsel %vm392, %v1739, 0
    %1746 = vmatprep.subr.bf16.mxu0 0
    %1747 = vmatpush1.bf16.msra.mxu0 %v1744
    %1748 = vmatprep.subr.bf16.mxu0 0
    %1749 = vmatpush1.bf16.msra.mxu0 0
    %1750 = vmatprep.subr.bf16.mxu0 0
    %1751 = vmatpush1.bf16.msra.mxu0 0
    %1752 = vmatprep.subr.bf16.mxu0 0
    %1753 = vmatpush1.bf16.msra.mxu0 0
    %1754 = vmatprep.subr.bf16.mxu0 0
    %1755 = vmatpush1.bf16.msra.mxu0 0
    %1756 = vmatprep.subr.bf16.mxu0 0
    %1757 = vmatpush1.bf16.msra.mxu0 0
    %1758 = vmatprep.subr.bf16.mxu0 0
    %1759 = vmatpush1.bf16.msra.mxu0 0
    %1760 = vmatprep.subr.bf16.mxu0 0
    %1761 = vmatpush1.bf16.msra.mxu0 0
    %1762 = vmatprep.subr.bf16.mxu0 0
    %1763 = vmatpush1.bf16.msra.mxu0 0
    %1764 = vmatprep.subr.bf16.mxu0 0
    %1765 = vmatpush1.bf16.msra.mxu0 0
    %1766 = vmatprep.subr.bf16.mxu0 0
    %1767 = vmatpush1.bf16.msra.mxu0 0
    %1768 = vmatprep.subr.bf16.mxu0 0
    %1769 = vmatpush1.bf16.msra.mxu0 0
    %1770 = vmatprep.subr.bf16.mxu0 0
    %1771 = vmatpush1.bf16.msra.mxu0 0
    %1772 = vmatprep.subr.bf16.mxu0 0
    %1773 = vmatpush1.bf16.msra.mxu0 0
    %1774 = vmatprep.subr.bf16.mxu0 0
    %1775 = vmatpush1.bf16.msra.mxu0 0
    %1776 = vmatprep.subr.bf16.mxu0 0
    %1777 = vmatpush1.bf16.msra.mxu0 0
    %1778 = vmatprep.mubr.bf16.mxu0 0
    %1779 = vmatmul.mubr.bf16.gmra.mrb[0].mxu0 %v1741
    %v1780 = vpop.f32.mrb[0].mxu0
    %v1781 = vadd.f32 0.0, %v1780
    %v1782 = vpop.f32.mrb[0].mxu0
    %v1783 = vpop.f32.mrb[0].mxu0
    %v1784 = vpop.f32.mrb[0].mxu0
    %1785 = vdwg.mxu0
    %1786 = vrot.lane.b32.xlu0 %v1615, 64
    %v1787 = vpop.permute.xlu0 %1786
    %v1789 = vsel %vm267, %v1737, 0
    %v1792 = vsel %vm392, %v1787, 0
    %1794 = vmatprep.subr.bf16.mxu0 0
    %1795 = vmatpush1.bf16.msra.mxu0 %v1792
    %1796 = vmatprep.subr.bf16.mxu0 0
    %1797 = vmatpush1.bf16.msra.mxu0 0
    %1798 = vmatprep.subr.bf16.mxu0 0
    %1799 = vmatpush1.bf16.msra.mxu0 0
    %1800 = vmatprep.subr.bf16.mxu0 0
    %1801 = vmatpush1.bf16.msra.mxu0 0
    %1802 = vmatprep.subr.bf16.mxu0 0
    %1803 = vmatpush1.bf16.msra.mxu0 0
    %1804 = vmatprep.subr.bf16.mxu0 0
    %1805 = vmatpush1.bf16.msra.mxu0 0
    %1806 = vmatprep.subr.bf16.mxu0 0
    %1807 = vmatpush1.bf16.msra.mxu0 0
    %1808 = vmatprep.subr.bf16.mxu0 0
    %1809 = vmatpush1.bf16.msra.mxu0 0
    %1810 = vmatprep.subr.bf16.mxu0 0
    %1811 = vmatpush1.bf16.msra.mxu0 0
    %1812 = vmatprep.subr.bf16.mxu0 0
    %1813 = vmatpush1.bf16.msra.mxu0 0
    %1814 = vmatprep.subr.bf16.mxu0 0
    %1815 = vmatpush1.bf16.msra.mxu0 0
    %1816 = vmatprep.subr.bf16.mxu0 0
    %1817 = vmatpush1.bf16.msra.mxu0 0
    %1818 = vmatprep.subr.bf16.mxu0 0
    %1819 = vmatpush1.bf16.msra.mxu0 0
    %1820 = vmatprep.subr.bf16.mxu0 0
    %1821 = vmatpush1.bf16.msra.mxu0 0
    %1822 = vmatprep.subr.bf16.mxu0 0
    %1823 = vmatpush1.bf16.msra.mxu0 0
    %1824 = vmatprep.subr.bf16.mxu0 0
    %1825 = vmatpush1.bf16.msra.mxu0 0
    %1826 = vmatprep.mubr.bf16.mxu0 0
    %1827 = vmatmul.mubr.bf16.gmra.mrb[0].mxu0 %v1789
    %v1828 = vpop.f32.mrb[0].mxu0
    %v1829 = vadd.f32 0.0, %v1828
    %v1830 = vpop.f32.mrb[0].mxu0
    %v1831 = vpop.f32.mrb[0].mxu0
    %v1832 = vpop.f32.mrb[0].mxu0
    %1833 = vdwg.mxu0
    %v1834 = vpack.c.bf16 %v1829, %v1781
    %1835 = vrot.lane.b32.xlu0 %v1614, 120
    %v1836 = vpop.permute.xlu0 %1835
    %1837 = vrot.lane.b32.xlu0 %v1614, 88
    %v1838 = vpop.permute.xlu0 %1837
    %v1840 = vsel %vm267, %v1836, 0
    %v1843 = vsel %vm267, %v1838, 0
    %1845 = vmatprep.subr.bf16.mxu0 0
    %1846 = vmatpush1.bf16.xpose.msra.mxu0 %v1843
    %1847 = vmatprep.subr.bf16.mxu0 0
    %1848 = vmatpush1.bf16.xpose.msra.mxu0 0
    %1849 = vmatprep.subr.bf16.mxu0 0
    %1850 = vmatpush1.bf16.xpose.msra.mxu0 0
    %1851 = vmatprep.subr.bf16.mxu0 0
    %1852 = vmatpush1.bf16.xpose.msra.mxu0 0
    %1853 = vmatprep.subr.bf16.mxu0 0
    %1854 = vmatpush1.bf16.xpose.msra.mxu0 0
    %1855 = vmatprep.subr.bf16.mxu0 0
    %1856 = vmatpush1.bf16.xpose.msra.mxu0 0
    %1857 = vmatprep.subr.bf16.mxu0 0
    %1858 = vmatpush1.bf16.xpose.msra.mxu0 0
    %1859 = vmatprep.subr.bf16.mxu0 0
    %1860 = vmatpush1.bf16.xpose.msra.mxu0 0
    %1861 = vmatprep.subr.bf16.mxu0 0
    %1862 = vmatpush1.bf16.xpose.msra.mxu0 0
    %1863 = vmatprep.subr.bf16.mxu0 0
    %1864 = vmatpush1.bf16.xpose.msra.mxu0 0
    %1865 = vmatprep.subr.bf16.mxu0 0
    %1866 = vmatpush1.bf16.xpose.msra.mxu0 0
    %1867 = vmatprep.subr.bf16.mxu0 0
    %1868 = vmatpush1.bf16.xpose.msra.mxu0 0
    %1869 = vmatprep.subr.bf16.mxu0 0
    %1870 = vmatpush1.bf16.xpose.msra.mxu0 0
    %1871 = vmatprep.subr.bf16.mxu0 0
    %1872 = vmatpush1.bf16.xpose.msra.mxu0 0
    %1873 = vmatprep.subr.bf16.mxu0 0
    %1874 = vmatpush1.bf16.xpose.msra.mxu0 0
    %1875 = vmatprep.subr.bf16.mxu0 0
    %1876 = vmatpush1.bf16.xpose.msra.mxu0 0
    %1877 = vmatprep.mubr.bf16.mxu0 0
    %1878 = vmatmul.mubr.bf16.gmra.mrb[0].mxu0 %v1840
    %v1879 = vpop.f32.mrb[0].mxu0
    %v1880 = vadd.f32 0.0, %v1879
    %v1881 = vpop.f32.mrb[0].mxu0
    %v1882 = vpop.f32.mrb[0].mxu0
    %v1883 = vpop.f32.mrb[0].mxu0
    %1884 = vdwg.mxu0
    %1885 = vrot.lane.b32.xlu0 %v1615, 120
    %v1886 = vpop.permute.xlu0 %1885
    %1887 = vrot.lane.b32.xlu0 %v1615, 88
    %v1888 = vpop.permute.xlu0 %1887
    %v1890 = vsel %vm267, %v1886, 0
    %v1893 = vsel %vm267, %v1888, 0
    %1895 = vmatprep.subr.bf16.mxu0 0
    %1896 = vmatpush1.bf16.xpose.msra.mxu0 %v1893
    %1897 = vmatprep.subr.bf16.mxu0 0
    %1898 = vmatpush1.bf16.xpose.msra.mxu0 0
    %1899 = vmatprep.subr.bf16.mxu0 0
    %1900 = vmatpush1.bf16.xpose.msra.mxu0 0
    %1901 = vmatprep.subr.bf16.mxu0 0
    %1902 = vmatpush1.bf16.xpose.msra.mxu0 0
    %1903 = vmatprep.subr.bf16.mxu0 0
    %1904 = vmatpush1.bf16.xpose.msra.mxu0 0
    %1905 = vmatprep.subr.bf16.mxu0 0
    %1906 = vmatpush1.bf16.xpose.msra.mxu0 0
    %1907 = vmatprep.subr.bf16.mxu0 0
    %1908 = vmatpush1.bf16.xpose.msra.mxu0 0
    %1909 = vmatprep.subr.bf16.mxu0 0
    %1910 = vmatpush1.bf16.xpose.msra.mxu0 0
    %1911 = vmatprep.subr.bf16.mxu0 0
    %1912 = vmatpush1.bf16.xpose.msra.mxu0 0
    %1913 = vmatprep.subr.bf16.mxu0 0
    %1914 = vmatpush1.bf16.xpose.msra.mxu0 0
    %1915 = vmatprep.subr.bf16.mxu0 0
    %1916 = vmatpush1.bf16.xpose.msra.mxu0 0
    %1917 = vmatprep.subr.bf16.mxu0 0
    %1918 = vmatpush1.bf16.xpose.msra.mxu0 0
    %1919 = vmatprep.subr.bf16.mxu0 0
    %1920 = vmatpush1.bf16.xpose.msra.mxu0 0
    %1921 = vmatprep.subr.bf16.mxu0 0
    %1922 = vmatpush1.bf16.xpose.msra.mxu0 0
    %1923 = vmatprep.subr.bf16.mxu0 0
    %1924 = vmatpush1.bf16.xpose.msra.mxu0 0
    %1925 = vmatprep.subr.bf16.mxu0 0
    %1926 = vmatpush1.bf16.xpose.msra.mxu0 0
    %1927 = vmatprep.mubr.bf16.mxu0 0
    %1928 = vmatmul.mubr.bf16.gmra.mrb[0].mxu0 %v1890
    %v1929 = vpop.f32.mrb[0].mxu0
    %v1930 = vadd.f32 0.0, %v1929
    %v1931 = vpop.f32.mrb[0].mxu0
    %v1932 = vpop.f32.mrb[0].mxu0
    %v1933 = vpop.f32.mrb[0].mxu0
    %1934 = vdwg.mxu0
    %v1935 = vsel %vm267, %v1880, -inf
    %1936 = vmax.xlane.f32.xlu0 %v1935
    %v1937 = vpop.xlane.xlu0 %1936
    %v1938 = vsel %vm267, %v1930, -inf
    %1939 = vmax.xlane.f32.xlu0 %v1938
    %v1940 = vpop.xlane.xlu0 %1939
    %v1941 = vsub.f32 %v1880, %v1937
    %v1942 = vsub.f32 %v1930, %v1940
    %v1943 = vmul.f32 %v1941, 1.442695
    %v1944 = vpow.pop %v1943
    %v1945 = vmul.f32 %v1942, 1.442695
    %v1946 = vpow.pop %v1945
    %v1947 = vsel %vm267, %v1944, 0.0
    %1948 = vadd.xlane.f32.xlu0 %v1947
    %v1949 = vpop.xlane.xlu0 %1948
    %v1950 = vsel %vm267, %v1946, 0.0
    %1951 = vadd.xlane.f32.xlu0 %v1950
    %v1952 = vpop.xlane.xlu0 %1951
    %v1953 = vrcp.pop %v1949
    %v1954 = vrcp.pop %v1952
    %v1955 = vmul.f32 %v1944, %v1953
    %v1956 = vmul.f32 %v1946, %v1954
    %v1957 = vpack.c.bf16 %v1955, %v1955
    %v1958 = vpack.c.bf16 %v1956, %v1956
    %1959 = vrot.lane.b32.xlu0 %v1614, 56
    %v1960 = vpop.permute.xlu0 %1959
    %v1962 = vsel %vm267, %v1957, 0
    %v1965 = vsel %vm392, %v1960, 0
    %1967 = vmatprep.subr.bf16.mxu0 0
    %1968 = vmatpush1.bf16.msra.mxu0 %v1965
    %1969 = vmatprep.subr.bf16.mxu0 0
    %1970 = vmatpush1.bf16.msra.mxu0 0
    %1971 = vmatprep.subr.bf16.mxu0 0
    %1972 = vmatpush1.bf16.msra.mxu0 0
    %1973 = vmatprep.subr.bf16.mxu0 0
    %1974 = vmatpush1.bf16.msra.mxu0 0
    %1975 = vmatprep.subr.bf16.mxu0 0
    %1976 = vmatpush1.bf16.msra.mxu0 0
    %1977 = vmatprep.subr.bf16.mxu0 0
    %1978 = vmatpush1.bf16.msra.mxu0 0
    %1979 = vmatprep.subr.bf16.mxu0 0
    %1980 = vmatpush1.bf16.msra.mxu0 0
    %1981 = vmatprep.subr.bf16.mxu0 0
    %1982 = vmatpush1.bf16.msra.mxu0 0
    %1983 = vmatprep.subr.bf16.mxu0 0
    %1984 = vmatpush1.bf16.msra.mxu0 0
    %1985 = vmatprep.subr.bf16.mxu0 0
    %1986 = vmatpush1.bf16.msra.mxu0 0
    %1987 = vmatprep.subr.bf16.mxu0 0
    %1988 = vmatpush1.bf16.msra.mxu0 0
    %1989 = vmatprep.subr.bf16.mxu0 0
    %1990 = vmatpush1.bf16.msra.mxu0 0
    %1991 = vmatprep.subr.bf16.mxu0 0
    %1992 = vmatpush1.bf16.msra.mxu0 0
    %1993 = vmatprep.subr.bf16.mxu0 0
    %1994 = vmatpush1.bf16.msra.mxu0 0
    %1995 = vmatprep.subr.bf16.mxu0 0
    %1996 = vmatpush1.bf16.msra.mxu0 0
    %1997 = vmatprep.subr.bf16.mxu0 0
    %1998 = vmatpush1.bf16.msra.mxu0 0
    %1999 = vmatprep.mubr.bf16.mxu0 0
    %2000 = vmatmul.mubr.bf16.gmra.mrb[0].mxu0 %v1962
    %v2001 = vpop.f32.mrb[0].mxu0
    %v2002 = vadd.f32 0.0, %v2001
    %v2003 = vpop.f32.mrb[0].mxu0
    %v2004 = vpop.f32.mrb[0].mxu0
    %v2005 = vpop.f32.mrb[0].mxu0
    %2006 = vdwg.mxu0
    %2007 = vrot.lane.b32.xlu0 %v1615, 56
    %v2008 = vpop.permute.xlu0 %2007
    %v2010 = vsel %vm267, %v1958, 0
    %v2013 = vsel %vm392, %v2008, 0
    %2015 = vmatprep.subr.bf16.mxu0 0
    %2016 = vmatpush1.bf16.msra.mxu0 %v2013
    %2017 = vmatprep.subr.bf16.mxu0 0
    %2018 = vmatpush1.bf16.msra.mxu0 0
    %2019 = vmatprep.subr.bf16.mxu0 0
    %2020 = vmatpush1.bf16.msra.mxu0 0
    %2021 = vmatprep.subr.bf16.mxu0 0
    %2022 = vmatpush1.bf16.msra.mxu0 0
    %2023 = vmatprep.subr.bf16.mxu0 0
    %2024 = vmatpush1.bf16.msra.mxu0 0
    %2025 = vmatprep.subr.bf16.mxu0 0
    %2026 = vmatpush1.bf16.msra.mxu0 0
    %2027 = vmatprep.subr.bf16.mxu0 0
    %2028 = vmatpush1.bf16.msra.mxu0 0
    %2029 = vmatprep.subr.bf16.mxu0 0
    %2030 = vmatpush1.bf16.msra.mxu0 0
    %2031 = vmatprep.subr.bf16.mxu0 0
    %2032 = vmatpush1.bf16.msra.mxu0 0
    %2033 = vmatprep.subr.bf16.mxu0 0
    %2034 = vmatpush1.bf16.msra.mxu0 0
    %2035 = vmatprep.subr.bf16.mxu0 0
    %2036 = vmatpush1.bf16.msra.mxu0 0
    %2037 = vmatprep.subr.bf16.mxu0 0
    %2038 = vmatpush1.bf16.msra.mxu0 0
    %2039 = vmatprep.subr.bf16.mxu0 0
    %2040 = vmatpush1.bf16.msra.mxu0 0
    %2041 = vmatprep.subr.bf16.mxu0 0
    %2042 = vmatpush1.bf16.msra.mxu0 0
    %2043 = vmatprep.subr.bf16.mxu0 0
    %2044 = vmatpush1.bf16.msra.mxu0 0
    %2045 = vmatprep.subr.bf16.mxu0 0
    %2046 = vmatpush1.bf16.msra.mxu0 0
    %2047 = vmatprep.mubr.bf16.mxu0 0
    %2048 = vmatmul.mubr.bf16.gmra.mrb[0].mxu0 %v2010
    %v2049 = vpop.f32.mrb[0].mxu0
    %v2050 = vadd.f32 0.0, %v2049
    %v2051 = vpop.f32.mrb[0].mxu0
    %v2052 = vpop.f32.mrb[0].mxu0
    %v2053 = vpop.f32.mrb[0].mxu0
    %2054 = vdwg.mxu0
    %v2055 = vpack.c.bf16 %v2050, %v2002
    %v2057 = vsel %vm267, %v2055, 0
    %2059 = vmatprep.subr.bf16.mxu0 0
    %2060 = vmatpush1.bf16.msra.mxu0 %v713
    %2061 = vmatprep.subr.bf16.mxu0 0
    %2062 = vmatpush1.bf16.msra.mxu0 0
    %2063 = vmatprep.subr.bf16.mxu0 0
    %2064 = vmatpush1.bf16.msra.mxu0 0
    %2065 = vmatprep.subr.bf16.mxu0 0
    %2066 = vmatpush1.bf16.msra.mxu0 0
    %2067 = vmatprep.subr.bf16.mxu0 0
    %2068 = vmatpush1.bf16.msra.mxu0 0
    %2069 = vmatprep.subr.bf16.mxu0 0
    %2070 = vmatpush1.bf16.msra.mxu0 0
    %2071 = vmatprep.subr.bf16.mxu0 0
    %2072 = vmatpush1.bf16.msra.mxu0 0
    %2073 = vmatprep.subr.bf16.mxu0 0
    %2074 = vmatpush1.bf16.msra.mxu0 0
    %2075 = vmatprep.subr.bf16.mxu0 0
    %2076 = vmatpush1.bf16.msra.mxu0 0
    %2077 = vmatprep.subr.bf16.mxu0 0
    %2078 = vmatpush1.bf16.msra.mxu0 0
    %2079 = vmatprep.subr.bf16.mxu0 0
    %2080 = vmatpush1.bf16.msra.mxu0 0
    %2081 = vmatprep.subr.bf16.mxu0 0
    %2082 = vmatpush1.bf16.msra.mxu0 0
    %2083 = vmatprep.subr.bf16.mxu0 0
    %2084 = vmatpush1.bf16.msra.mxu0 0
    %2085 = vmatprep.subr.bf16.mxu0 0
    %2086 = vmatpush1.bf16.msra.mxu0 0
    %2087 = vmatprep.subr.bf16.mxu0 0
    %2088 = vmatpush1.bf16.msra.mxu0 0
    %2089 = vmatprep.subr.bf16.mxu0 0
    %2090 = vmatpush1.bf16.msra.mxu0 0
    %2091 = vmatprep.mubr.bf16.mxu0 0
    %2092 = vmatmul.mubr.bf16.gmra.mrb[0].mxu0 %v2057
    %v2093 = vpop.f32.mrb[0].mxu0
    %v2094 = vadd.f32 0.0, %v2093
    %v2095 = vpop.f32.mrb[0].mxu0
    %v2096 = vpop.f32.mrb[0].mxu0
    %v2097 = vadd.f32 0.0, %v2096
    %v2098 = vpop.f32.mrb[0].mxu0
    %2099 = vdwg.mxu0
    %v2101 = vsel %vm267, %v1834, 0
    %2103 = vmatprep.subr.bf16.mxu0 0
    %2104 = vmatpush1.bf16.msra.mxu0 %v763
    %2105 = vmatprep.subr.bf16.mxu0 0
    %2106 = vmatpush1.bf16.msra.mxu0 0
    %2107 = vmatprep.subr.bf16.mxu0 0
    %2108 = vmatpush1.bf16.msra.mxu0 0
    %2109 = vmatprep.subr.bf16.mxu0 0
    %2110 = vmatpush1.bf16.msra.mxu0 0
    %2111 = vmatprep.subr.bf16.mxu0 0
    %2112 = vmatpush1.bf16.msra.mxu0 0
    %2113 = vmatprep.subr.bf16.mxu0 0
    %2114 = vmatpush1.bf16.msra.mxu0 0
    %2115 = vmatprep.subr.bf16.mxu0 0
    %2116 = vmatpush1.bf16.msra.mxu0 0
    %2117 = vmatprep.subr.bf16.mxu0 0
    %2118 = vmatpush1.bf16.msra.mxu0 0
    %2119 = vmatprep.subr.bf16.mxu0 0
    %2120 = vmatpush1.bf16.msra.mxu0 0
    %2121 = vmatprep.subr.bf16.mxu0 0
    %2122 = vmatpush1.bf16.msra.mxu0 0
    %2123 = vmatprep.subr.bf16.mxu0 0
    %2124 = vmatpush1.bf16.msra.mxu0 0
    %2125 = vmatprep.subr.bf16.mxu0 0
    %2126 = vmatpush1.bf16.msra.mxu0 0
    %2127 = vmatprep.subr.bf16.mxu0 0
    %2128 = vmatpush1.bf16.msra.mxu0 0
    %2129 = vmatprep.subr.bf16.mxu0 0
    %2130 = vmatpush1.bf16.msra.mxu0 0
    %2131 = vmatprep.subr.bf16.mxu0 0
    %2132 = vmatpush1.bf16.msra.mxu0 0
    %2133 = vmatprep.subr.bf16.mxu0 0
    %2134 = vmatpush1.bf16.msra.mxu0 0
    %2135 = vmatprep.mubr.bf16.mxu0 0
    %2136 = vmatmul.mubr.bf16.gmra.mrb[0].mxu0 %v2101
    %v2137 = vpop.f32.mrb[0].mxu0
    %v2138 = vadd.f32 %v2094, %v2137
    %v2139 = vpop.f32.mrb[0].mxu0
    %v2140 = vpop.f32.mrb[0].mxu0
    %v2141 = vadd.f32 %v2097, %v2140
    %v2142 = vpop.f32.mrb[0].mxu0
    %2143 = vdwg.mxu0
    %2144 = vrot.lane.b32.xlu0 %v1614, 112
    %v2145 = vpop.permute.xlu0 %2144
    %2146 = vrot.lane.b32.xlu0 %v1614, 80
    %v2147 = vpop.permute.xlu0 %2146
    %v2149 = vsel %vm267, %v2145, 0
    %v2152 = vsel %vm267, %v2147, 0
    %2154 = vmatprep.subr.bf16.mxu0 0
    %2155 = vmatpush1.bf16.xpose.msra.mxu0 %v2152
    %2156 = vmatprep.subr.bf16.mxu0 0
    %2157 = vmatpush1.bf16.xpose.msra.mxu0 0
    %2158 = vmatprep.subr.bf16.mxu0 0
    %2159 = vmatpush1.bf16.xpose.msra.mxu0 0
    %2160 = vmatprep.subr.bf16.mxu0 0
    %2161 = vmatpush1.bf16.xpose.msra.mxu0 0
    %2162 = vmatprep.subr.bf16.mxu0 0
    %2163 = vmatpush1.bf16.xpose.msra.mxu0 0
    %2164 = vmatprep.subr.bf16.mxu0 0
    %2165 = vmatpush1.bf16.xpose.msra.mxu0 0
    %2166 = vmatprep.subr.bf16.mxu0 0
    %2167 = vmatpush1.bf16.xpose.msra.mxu0 0
    %2168 = vmatprep.subr.bf16.mxu0 0
    %2169 = vmatpush1.bf16.xpose.msra.mxu0 0
    %2170 = vmatprep.subr.bf16.mxu0 0
    %2171 = vmatpush1.bf16.xpose.msra.mxu0 0
    %2172 = vmatprep.subr.bf16.mxu0 0
    %2173 = vmatpush1.bf16.xpose.msra.mxu0 0
    %2174 = vmatprep.subr.bf16.mxu0 0
    %2175 = vmatpush1.bf16.xpose.msra.mxu0 0
    %2176 = vmatprep.subr.bf16.mxu0 0
    %2177 = vmatpush1.bf16.xpose.msra.mxu0 0
    %2178 = vmatprep.subr.bf16.mxu0 0
    %2179 = vmatpush1.bf16.xpose.msra.mxu0 0
    %2180 = vmatprep.subr.bf16.mxu0 0
    %2181 = vmatpush1.bf16.xpose.msra.mxu0 0
    %2182 = vmatprep.subr.bf16.mxu0 0
    %2183 = vmatpush1.bf16.xpose.msra.mxu0 0
    %2184 = vmatprep.subr.bf16.mxu0 0
    %2185 = vmatpush1.bf16.xpose.msra.mxu0 0
    %2186 = vmatprep.mubr.bf16.mxu0 0
    %2187 = vmatmul.mubr.bf16.gmra.mrb[0].mxu0 %v2149
    %v2188 = vpop.f32.mrb[0].mxu0
    %v2189 = vadd.f32 0.0, %v2188
    %v2190 = vpop.f32.mrb[0].mxu0
    %v2191 = vpop.f32.mrb[0].mxu0
    %v2192 = vpop.f32.mrb[0].mxu0
    %2193 = vdwg.mxu0
    %2194 = vrot.lane.b32.xlu0 %v1615, 112
    %v2195 = vpop.permute.xlu0 %2194
    %2196 = vrot.lane.b32.xlu0 %v1615, 80
    %v2197 = vpop.permute.xlu0 %2196
    %v2199 = vsel %vm267, %v2195, 0
    %v2202 = vsel %vm267, %v2197, 0
    %2204 = vmatprep.subr.bf16.mxu0 0
    %2205 = vmatpush1.bf16.xpose.msra.mxu0 %v2202
    %2206 = vmatprep.subr.bf16.mxu0 0
    %2207 = vmatpush1.bf16.xpose.msra.mxu0 0
    %2208 = vmatprep.subr.bf16.mxu0 0
    %2209 = vmatpush1.bf16.xpose.msra.mxu0 0
    %2210 = vmatprep.subr.bf16.mxu0 0
    %2211 = vmatpush1.bf16.xpose.msra.mxu0 0
    %2212 = vmatprep.subr.bf16.mxu0 0
    %2213 = vmatpush1.bf16.xpose.msra.mxu0 0
    %2214 = vmatprep.subr.bf16.mxu0 0
    %2215 = vmatpush1.bf16.xpose.msra.mxu0 0
    %2216 = vmatprep.subr.bf16.mxu0 0
    %2217 = vmatpush1.bf16.xpose.msra.mxu0 0
    %2218 = vmatprep.subr.bf16.mxu0 0
    %2219 = vmatpush1.bf16.xpose.msra.mxu0 0
    %2220 = vmatprep.subr.bf16.mxu0 0
    %2221 = vmatpush1.bf16.xpose.msra.mxu0 0
    %2222 = vmatprep.subr.bf16.mxu0 0
    %2223 = vmatpush1.bf16.xpose.msra.mxu0 0
    %2224 = vmatprep.subr.bf16.mxu0 0
    %2225 = vmatpush1.bf16.xpose.msra.mxu0 0
    %2226 = vmatprep.subr.bf16.mxu0 0
    %2227 = vmatpush1.bf16.xpose.msra.mxu0 0
    %2228 = vmatprep.subr.bf16.mxu0 0
    %2229 = vmatpush1.bf16.xpose.msra.mxu0 0
    %2230 = vmatprep.subr.bf16.mxu0 0
    %2231 = vmatpush1.bf16.xpose.msra.mxu0 0
    %2232 = vmatprep.subr.bf16.mxu0 0
    %2233 = vmatpush1.bf16.xpose.msra.mxu0 0
    %2234 = vmatprep.subr.bf16.mxu0 0
    %2235 = vmatpush1.bf16.xpose.msra.mxu0 0
    %2236 = vmatprep.mubr.bf16.mxu0 0
    %2237 = vmatmul.mubr.bf16.gmra.mrb[0].mxu0 %v2199
    %v2238 = vpop.f32.mrb[0].mxu0
    %v2239 = vadd.f32 0.0, %v2238
    %v2240 = vpop.f32.mrb[0].mxu0
    %v2241 = vpop.f32.mrb[0].mxu0
    %v2242 = vpop.f32.mrb[0].mxu0
    %2243 = vdwg.mxu0
    %v2244 = vsel %vm267, %v2189, -inf
    %2245 = vmax.xlane.f32.xlu0 %v2244
    %v2246 = vpop.xlane.xlu0 %2245
    %v2247 = vsel %vm267, %v2239, -inf
    %2248 = vmax.xlane.f32.xlu0 %v2247
    %v2249 = vpop.xlane.xlu0 %2248
    %v2250 = vsub.f32 %v2189, %v2246
    %v2251 = vsub.f32 %v2239, %v2249
    %v2252 = vmul.f32 %v2250, 1.442695
    %v2253 = vpow.pop %v2252
    %v2254 = vmul.f32 %v2251, 1.442695
    %v2255 = vpow.pop %v2254
    %v2256 = vsel %vm267, %v2253, 0.0
    %2257 = vadd.xlane.f32.xlu0 %v2256
    %v2258 = vpop.xlane.xlu0 %2257
    %v2259 = vsel %vm267, %v2255, 0.0
    %2260 = vadd.xlane.f32.xlu0 %v2259
    %v2261 = vpop.xlane.xlu0 %2260
    %v2262 = vrcp.pop %v2258
    %v2263 = vrcp.pop %v2261
    %v2264 = vmul.f32 %v2253, %v2262
    %v2265 = vmul.f32 %v2255, %v2263
    %v2266 = vpack.c.bf16 %v2264, %v2264
    %v2267 = vpack.c.bf16 %v2265, %v2265
    %2268 = vrot.lane.b32.xlu0 %v1614, 48
    %v2269 = vpop.permute.xlu0 %2268
    %v2271 = vsel %vm267, %v2266, 0
    %v2274 = vsel %vm392, %v2269, 0
    %2276 = vmatprep.subr.bf16.mxu0 0
    %2277 = vmatpush1.bf16.msra.mxu0 %v2274
    %2278 = vmatprep.subr.bf16.mxu0 0
    %2279 = vmatpush1.bf16.msra.mxu0 0
    %2280 = vmatprep.subr.bf16.mxu0 0
    %2281 = vmatpush1.bf16.msra.mxu0 0
    %2282 = vmatprep.subr.bf16.mxu0 0
    %2283 = vmatpush1.bf16.msra.mxu0 0
    %2284 = vmatprep.subr.bf16.mxu0 0
    %2285 = vmatpush1.bf16.msra.mxu0 0
    %2286 = vmatprep.subr.bf16.mxu0 0
    %2287 = vmatpush1.bf16.msra.mxu0 0
    %2288 = vmatprep.subr.bf16.mxu0 0
    %2289 = vmatpush1.bf16.msra.mxu0 0
    %2290 = vmatprep.subr.bf16.mxu0 0
    %2291 = vmatpush1.bf16.msra.mxu0 0
    %2292 = vmatprep.subr.bf16.mxu0 0
    %2293 = vmatpush1.bf16.msra.mxu0 0
    %2294 = vmatprep.subr.bf16.mxu0 0
    %2295 = vmatpush1.bf16.msra.mxu0 0
    %2296 = vmatprep.subr.bf16.mxu0 0
    %2297 = vmatpush1.bf16.msra.mxu0 0
    %2298 = vmatprep.subr.bf16.mxu0 0
    %2299 = vmatpush1.bf16.msra.mxu0 0
    %2300 = vmatprep.subr.bf16.mxu0 0
    %2301 = vmatpush1.bf16.msra.mxu0 0
    %2302 = vmatprep.subr.bf16.mxu0 0
    %2303 = vmatpush1.bf16.msra.mxu0 0
    %2304 = vmatprep.subr.bf16.mxu0 0
    %2305 = vmatpush1.bf16.msra.mxu0 0
    %2306 = vmatprep.subr.bf16.mxu0 0
    %2307 = vmatpush1.bf16.msra.mxu0 0
    %2308 = vmatprep.mubr.bf16.mxu0 0
    %2309 = vmatmul.mubr.bf16.gmra.mrb[0].mxu0 %v2271
    %v2310 = vpop.f32.mrb[0].mxu0
    %v2311 = vadd.f32 0.0, %v2310
    %v2312 = vpop.f32.mrb[0].mxu0
    %v2313 = vpop.f32.mrb[0].mxu0
    %v2314 = vpop.f32.mrb[0].mxu0
    %2315 = vdwg.mxu0
    %2316 = vrot.lane.b32.xlu0 %v1615, 48
    %v2317 = vpop.permute.xlu0 %2316
    %v2319 = vsel %vm267, %v2267, 0
    %v2322 = vsel %vm392, %v2317, 0
    %2324 = vmatprep.subr.bf16.mxu0 0
    %2325 = vmatpush1.bf16.msra.mxu0 %v2322
    %2326 = vmatprep.subr.bf16.mxu0 0
    %2327 = vmatpush1.bf16.msra.mxu0 0
    %2328 = vmatprep.subr.bf16.mxu0 0
    %2329 = vmatpush1.bf16.msra.mxu0 0
    %2330 = vmatprep.subr.bf16.mxu0 0
    %2331 = vmatpush1.bf16.msra.mxu0 0
    %2332 = vmatprep.subr.bf16.mxu0 0
    %2333 = vmatpush1.bf16.msra.mxu0 0
    %2334 = vmatprep.subr.bf16.mxu0 0
    %2335 = vmatpush1.bf16.msra.mxu0 0
    %2336 = vmatprep.subr.bf16.mxu0 0
    %2337 = vmatpush1.bf16.msra.mxu0 0
    %2338 = vmatprep.subr.bf16.mxu0 0
    %2339 = vmatpush1.bf16.msra.mxu0 0
    %2340 = vmatprep.subr.bf16.mxu0 0
    %2341 = vmatpush1.bf16.msra.mxu0 0
    %2342 = vmatprep.subr.bf16.mxu0 0
    %2343 = vmatpush1.bf16.msra.mxu0 0
    %2344 = vmatprep.subr.bf16.mxu0 0
    %2345 = vmatpush1.bf16.msra.mxu0 0
    %2346 = vmatprep.subr.bf16.mxu0 0
    %2347 = vmatpush1.bf16.msra.mxu0 0
    %2348 = vmatprep.subr.bf16.mxu0 0
    %2349 = vmatpush1.bf16.msra.mxu0 0
    %2350 = vmatprep.subr.bf16.mxu0 0
    %2351 = vmatpush1.bf16.msra.mxu0 0
    %2352 = vmatprep.subr.bf16.mxu0 0
    %2353 = vmatpush1.bf16.msra.mxu0 0
    %2354 = vmatprep.subr.bf16.mxu0 0
    %2355 = vmatpush1.bf16.msra.mxu0 0
    %2356 = vmatprep.mubr.bf16.mxu0 0
    %2357 = vmatmul.mubr.bf16.gmra.mrb[0].mxu0 %v2319
    %v2358 = vpop.f32.mrb[0].mxu0
    %v2359 = vadd.f32 0.0, %v2358
    %v2360 = vpop.f32.mrb[0].mxu0
    %v2361 = vpop.f32.mrb[0].mxu0
    %v2362 = vpop.f32.mrb[0].mxu0
    %2363 = vdwg.mxu0
    %v2364 = vpack.c.bf16 %v2359, %v2311
    %v2366 = vsel %vm267, %v2364, 0
    %2368 = vmatprep.subr.bf16.mxu0 0
    %2369 = vmatpush1.bf16.msra.mxu0 %v1034
    %2370 = vmatprep.subr.bf16.mxu0 0
    %2371 = vmatpush1.bf16.msra.mxu0 0
    %2372 = vmatprep.subr.bf16.mxu0 0
    %2373 = vmatpush1.bf16.msra.mxu0 0
    %2374 = vmatprep.subr.bf16.mxu0 0
    %2375 = vmatpush1.bf16.msra.mxu0 0
    %2376 = vmatprep.subr.bf16.mxu0 0
    %2377 = vmatpush1.bf16.msra.mxu0 0
    %2378 = vmatprep.subr.bf16.mxu0 0
    %2379 = vmatpush1.bf16.msra.mxu0 0
    %2380 = vmatprep.subr.bf16.mxu0 0
    %2381 = vmatpush1.bf16.msra.mxu0 0
    %2382 = vmatprep.subr.bf16.mxu0 0
    %2383 = vmatpush1.bf16.msra.mxu0 0
    %2384 = vmatprep.subr.bf16.mxu0 0
    %2385 = vmatpush1.bf16.msra.mxu0 0
    %2386 = vmatprep.subr.bf16.mxu0 0
    %2387 = vmatpush1.bf16.msra.mxu0 0
    %2388 = vmatprep.subr.bf16.mxu0 0
    %2389 = vmatpush1.bf16.msra.mxu0 0
    %2390 = vmatprep.subr.bf16.mxu0 0
    %2391 = vmatpush1.bf16.msra.mxu0 0
    %2392 = vmatprep.subr.bf16.mxu0 0
    %2393 = vmatpush1.bf16.msra.mxu0 0
    %2394 = vmatprep.subr.bf16.mxu0 0
    %2395 = vmatpush1.bf16.msra.mxu0 0
    %2396 = vmatprep.subr.bf16.mxu0 0
    %2397 = vmatpush1.bf16.msra.mxu0 0
    %2398 = vmatprep.subr.bf16.mxu0 0
    %2399 = vmatpush1.bf16.msra.mxu0 0
    %2400 = vmatprep.mubr.bf16.mxu0 0
    %2401 = vmatmul.mubr.bf16.gmra.mrb[0].mxu0 %v2366
    %v2402 = vpop.f32.mrb[0].mxu0
    %v2403 = vadd.f32 0.0, %v2402
    %v2404 = vpop.f32.mrb[0].mxu0
    %v2405 = vpop.f32.mrb[0].mxu0
    %v2406 = vadd.f32 0.0, %v2405
    %v2407 = vpop.f32.mrb[0].mxu0
    %2408 = vdwg.mxu0
    %v2409 = vadd.f32 %v2138, %v2403
    %v2410 = vadd.f32 %v2141, %v2406
    %2411 = vrot.lane.b32.xlu0 %v1614, 104
    %v2412 = vpop.permute.xlu0 %2411
    %2413 = vrot.lane.b32.xlu0 %v1614, 72
    %v2414 = vpop.permute.xlu0 %2413
    %v2416 = vsel %vm267, %v2412, 0
    %v2419 = vsel %vm267, %v2414, 0
    %2421 = vmatprep.subr.bf16.mxu0 0
    %2422 = vmatpush1.bf16.xpose.msra.mxu0 %v2419
    %2423 = vmatprep.subr.bf16.mxu0 0
    %2424 = vmatpush1.bf16.xpose.msra.mxu0 0
    %2425 = vmatprep.subr.bf16.mxu0 0
    %2426 = vmatpush1.bf16.xpose.msra.mxu0 0
    %2427 = vmatprep.subr.bf16.mxu0 0
    %2428 = vmatpush1.bf16.xpose.msra.mxu0 0
    %2429 = vmatprep.subr.bf16.mxu0 0
    %2430 = vmatpush1.bf16.xpose.msra.mxu0 0
    %2431 = vmatprep.subr.bf16.mxu0 0
    %2432 = vmatpush1.bf16.xpose.msra.mxu0 0
    %2433 = vmatprep.subr.bf16.mxu0 0
    %2434 = vmatpush1.bf16.xpose.msra.mxu0 0
    %2435 = vmatprep.subr.bf16.mxu0 0
    %2436 = vmatpush1.bf16.xpose.msra.mxu0 0
    %2437 = vmatprep.subr.bf16.mxu0 0
    %2438 = vmatpush1.bf16.xpose.msra.mxu0 0
    %2439 = vmatprep.subr.bf16.mxu0 0
    %2440 = vmatpush1.bf16.xpose.msra.mxu0 0
    %2441 = vmatprep.subr.bf16.mxu0 0
    %2442 = vmatpush1.bf16.xpose.msra.mxu0 0
    %2443 = vmatprep.subr.bf16.mxu0 0
    %2444 = vmatpush1.bf16.xpose.msra.mxu0 0
    %2445 = vmatprep.subr.bf16.mxu0 0
    %2446 = vmatpush1.bf16.xpose.msra.mxu0 0
    %2447 = vmatprep.subr.bf16.mxu0 0
    %2448 = vmatpush1.bf16.xpose.msra.mxu0 0
    %2449 = vmatprep.subr.bf16.mxu0 0
    %2450 = vmatpush1.bf16.xpose.msra.mxu0 0
    %2451 = vmatprep.subr.bf16.mxu0 0
    %2452 = vmatpush1.bf16.xpose.msra.mxu0 0
    %2453 = vmatprep.mubr.bf16.mxu0 0
    %2454 = vmatmul.mubr.bf16.gmra.mrb[0].mxu0 %v2416
    %v2455 = vpop.f32.mrb[0].mxu0
    %v2456 = vadd.f32 0.0, %v2455
    %v2457 = vpop.f32.mrb[0].mxu0
    %v2458 = vpop.f32.mrb[0].mxu0
    %v2459 = vpop.f32.mrb[0].mxu0
    %2460 = vdwg.mxu0
    %2461 = vrot.lane.b32.xlu0 %v1615, 104
    %v2462 = vpop.permute.xlu0 %2461
    %2463 = vrot.lane.b32.xlu0 %v1615, 72
    %v2464 = vpop.permute.xlu0 %2463
    %v2466 = vsel %vm267, %v2462, 0
    %v2469 = vsel %vm267, %v2464, 0
    %2471 = vmatprep.subr.bf16.mxu0 0
    %2472 = vmatpush1.bf16.xpose.msra.mxu0 %v2469
    %2473 = vmatprep.subr.bf16.mxu0 0
    %2474 = vmatpush1.bf16.xpose.msra.mxu0 0
    %2475 = vmatprep.subr.bf16.mxu0 0
    %2476 = vmatpush1.bf16.xpose.msra.mxu0 0
    %2477 = vmatprep.subr.bf16.mxu0 0
    %2478 = vmatpush1.bf16.xpose.msra.mxu0 0
    %2479 = vmatprep.subr.bf16.mxu0 0
    %2480 = vmatpush1.bf16.xpose.msra.mxu0 0
    %2481 = vmatprep.subr.bf16.mxu0 0
    %2482 = vmatpush1.bf16.xpose.msra.mxu0 0
    %2483 = vmatprep.subr.bf16.mxu0 0
    %2484 = vmatpush1.bf16.xpose.msra.mxu0 0
    %2485 = vmatprep.subr.bf16.mxu0 0
    %2486 = vmatpush1.bf16.xpose.msra.mxu0 0
    %2487 = vmatprep.subr.bf16.mxu0 0
    %2488 = vmatpush1.bf16.xpose.msra.mxu0 0
    %2489 = vmatprep.subr.bf16.mxu0 0
    %2490 = vmatpush1.bf16.xpose.msra.mxu0 0
    %2491 = vmatprep.subr.bf16.mxu0 0
    %2492 = vmatpush1.bf16.xpose.msra.mxu0 0
    %2493 = vmatprep.subr.bf16.mxu0 0
    %2494 = vmatpush1.bf16.xpose.msra.mxu0 0
    %2495 = vmatprep.subr.bf16.mxu0 0
    %2496 = vmatpush1.bf16.xpose.msra.mxu0 0
    %2497 = vmatprep.subr.bf16.mxu0 0
    %2498 = vmatpush1.bf16.xpose.msra.mxu0 0
    %2499 = vmatprep.subr.bf16.mxu0 0
    %2500 = vmatpush1.bf16.xpose.msra.mxu0 0
    %2501 = vmatprep.subr.bf16.mxu0 0
    %2502 = vmatpush1.bf16.xpose.msra.mxu0 0
    %2503 = vmatprep.mubr.bf16.mxu0 0
    %2504 = vmatmul.mubr.bf16.gmra.mrb[0].mxu0 %v2466
    %v2505 = vpop.f32.mrb[0].mxu0
    %v2506 = vadd.f32 0.0, %v2505
    %v2507 = vpop.f32.mrb[0].mxu0
    %v2508 = vpop.f32.mrb[0].mxu0
    %v2509 = vpop.f32.mrb[0].mxu0
    %2510 = vdwg.mxu0
    %v2511 = vsel %vm267, %v2456, -inf
    %2512 = vmax.xlane.f32.xlu0 %v2511
    %v2513 = vpop.xlane.xlu0 %2512
    %v2514 = vsel %vm267, %v2506, -inf
    %2515 = vmax.xlane.f32.xlu0 %v2514
    %v2516 = vpop.xlane.xlu0 %2515
    %v2517 = vsub.f32 %v2456, %v2513
    %v2518 = vsub.f32 %v2506, %v2516
    %v2519 = vmul.f32 %v2517, 1.442695
    %v2520 = vpow.pop %v2519
    %v2521 = vmul.f32 %v2518, 1.442695
    %v2522 = vpow.pop %v2521
    %v2523 = vsel %vm267, %v2520, 0.0
    %2524 = vadd.xlane.f32.xlu0 %v2523
    %v2525 = vpop.xlane.xlu0 %2524
    %v2526 = vsel %vm267, %v2522, 0.0
    %2527 = vadd.xlane.f32.xlu0 %v2526
    %v2528 = vpop.xlane.xlu0 %2527
    %v2529 = vrcp.pop %v2525
    %v2530 = vrcp.pop %v2528
    %v2531 = vmul.f32 %v2520, %v2529
    %v2532 = vmul.f32 %v2522, %v2530
    %v2533 = vpack.c.bf16 %v2531, %v2531
    %v2534 = vpack.c.bf16 %v2532, %v2532
    %2535 = vrot.lane.b32.xlu0 %v1614, 40
    %v2536 = vpop.permute.xlu0 %2535
    %v2538 = vsel %vm267, %v2533, 0
    %v2541 = vsel %vm392, %v2536, 0
    %2543 = vmatprep.subr.bf16.mxu0 0
    %2544 = vmatpush1.bf16.msra.mxu0 %v2541
    %2545 = vmatprep.subr.bf16.mxu0 0
    %2546 = vmatpush1.bf16.msra.mxu0 0
    %2547 = vmatprep.subr.bf16.mxu0 0
    %2548 = vmatpush1.bf16.msra.mxu0 0
    %2549 = vmatprep.subr.bf16.mxu0 0
    %2550 = vmatpush1.bf16.msra.mxu0 0
    %2551 = vmatprep.subr.bf16.mxu0 0
    %2552 = vmatpush1.bf16.msra.mxu0 0
    %2553 = vmatprep.subr.bf16.mxu0 0
    %2554 = vmatpush1.bf16.msra.mxu0 0
    %2555 = vmatprep.subr.bf16.mxu0 0
    %2556 = vmatpush1.bf16.msra.mxu0 0
    %2557 = vmatprep.subr.bf16.mxu0 0
    %2558 = vmatpush1.bf16.msra.mxu0 0
    %2559 = vmatprep.subr.bf16.mxu0 0
    %2560 = vmatpush1.bf16.msra.mxu0 0
    %2561 = vmatprep.subr.bf16.mxu0 0
    %2562 = vmatpush1.bf16.msra.mxu0 0
    %2563 = vmatprep.subr.bf16.mxu0 0
    %2564 = vmatpush1.bf16.msra.mxu0 0
    %2565 = vmatprep.subr.bf16.mxu0 0
    %2566 = vmatpush1.bf16.msra.mxu0 0
    %2567 = vmatprep.subr.bf16.mxu0 0
    %2568 = vmatpush1.bf16.msra.mxu0 0
    %2569 = vmatprep.subr.bf16.mxu0 0
    %2570 = vmatpush1.bf16.msra.mxu0 0
    %2571 = vmatprep.subr.bf16.mxu0 0
    %2572 = vmatpush1.bf16.msra.mxu0 0
    %2573 = vmatprep.subr.bf16.mxu0 0
    %2574 = vmatpush1.bf16.msra.mxu0 0
    %2575 = vmatprep.mubr.bf16.mxu0 0
    %2576 = vmatmul.mubr.bf16.gmra.mrb[0].mxu0 %v2538
    %v2577 = vpop.f32.mrb[0].mxu0
    %v2578 = vadd.f32 0.0, %v2577
    %v2579 = vpop.f32.mrb[0].mxu0
    %v2580 = vpop.f32.mrb[0].mxu0
    %v2581 = vpop.f32.mrb[0].mxu0
    %2582 = vdwg.mxu0
    %2583 = vrot.lane.b32.xlu0 %v1615, 40
    %v2584 = vpop.permute.xlu0 %2583
    %v2586 = vsel %vm267, %v2534, 0
    %v2589 = vsel %vm392, %v2584, 0
    %2591 = vmatprep.subr.bf16.mxu0 0
    %2592 = vmatpush1.bf16.msra.mxu0 %v2589
    %2593 = vmatprep.subr.bf16.mxu0 0
    %2594 = vmatpush1.bf16.msra.mxu0 0
    %2595 = vmatprep.subr.bf16.mxu0 0
    %2596 = vmatpush1.bf16.msra.mxu0 0
    %2597 = vmatprep.subr.bf16.mxu0 0
    %2598 = vmatpush1.bf16.msra.mxu0 0
    %2599 = vmatprep.subr.bf16.mxu0 0
    %2600 = vmatpush1.bf16.msra.mxu0 0
    %2601 = vmatprep.subr.bf16.mxu0 0
    %2602 = vmatpush1.bf16.msra.mxu0 0
    %2603 = vmatprep.subr.bf16.mxu0 0
    %2604 = vmatpush1.bf16.msra.mxu0 0
    %2605 = vmatprep.subr.bf16.mxu0 0
    %2606 = vmatpush1.bf16.msra.mxu0 0
    %2607 = vmatprep.subr.bf16.mxu0 0
    %2608 = vmatpush1.bf16.msra.mxu0 0
    %2609 = vmatprep.subr.bf16.mxu0 0
    %2610 = vmatpush1.bf16.msra.mxu0 0
    %2611 = vmatprep.subr.bf16.mxu0 0
    %2612 = vmatpush1.bf16.msra.mxu0 0
    %2613 = vmatprep.subr.bf16.mxu0 0
    %2614 = vmatpush1.bf16.msra.mxu0 0
    %2615 = vmatprep.subr.bf16.mxu0 0
    %2616 = vmatpush1.bf16.msra.mxu0 0
    %2617 = vmatprep.subr.bf16.mxu0 0
    %2618 = vmatpush1.bf16.msra.mxu0 0
    %2619 = vmatprep.subr.bf16.mxu0 0
    %2620 = vmatpush1.bf16.msra.mxu0 0
    %2621 = vmatprep.subr.bf16.mxu0 0
    %2622 = vmatpush1.bf16.msra.mxu0 0
    %2623 = vmatprep.mubr.bf16.mxu0 0
    %2624 = vmatmul.mubr.bf16.gmra.mrb[0].mxu0 %v2586
    %v2625 = vpop.f32.mrb[0].mxu0
    %v2626 = vadd.f32 0.0, %v2625
    %v2627 = vpop.f32.mrb[0].mxu0
    %v2628 = vpop.f32.mrb[0].mxu0
    %v2629 = vpop.f32.mrb[0].mxu0
    %2630 = vdwg.mxu0
    %v2631 = vpack.c.bf16 %v2626, %v2578
    %v2633 = vsel %vm267, %v2631, 0
    %2635 = vmatprep.subr.bf16.mxu0 0
    %2636 = vmatpush1.bf16.msra.mxu0 %v1307
    %2637 = vmatprep.subr.bf16.mxu0 0
    %2638 = vmatpush1.bf16.msra.mxu0 0
    %2639 = vmatprep.subr.bf16.mxu0 0
    %2640 = vmatpush1.bf16.msra.mxu0 0
    %2641 = vmatprep.subr.bf16.mxu0 0
    %2642 = vmatpush1.bf16.msra.mxu0 0
    %2643 = vmatprep.subr.bf16.mxu0 0
    %2644 = vmatpush1.bf16.msra.mxu0 0
    %2645 = vmatprep.subr.bf16.mxu0 0
    %2646 = vmatpush1.bf16.msra.mxu0 0
    %2647 = vmatprep.subr.bf16.mxu0 0
    %2648 = vmatpush1.bf16.msra.mxu0 0
    %2649 = vmatprep.subr.bf16.mxu0 0
    %2650 = vmatpush1.bf16.msra.mxu0 0
    %2651 = vmatprep.subr.bf16.mxu0 0
    %2652 = vmatpush1.bf16.msra.mxu0 0
    %2653 = vmatprep.subr.bf16.mxu0 0
    %2654 = vmatpush1.bf16.msra.mxu0 0
    %2655 = vmatprep.subr.bf16.mxu0 0
    %2656 = vmatpush1.bf16.msra.mxu0 0
    %2657 = vmatprep.subr.bf16.mxu0 0
    %2658 = vmatpush1.bf16.msra.mxu0 0
    %2659 = vmatprep.subr.bf16.mxu0 0
    %2660 = vmatpush1.bf16.msra.mxu0 0
    %2661 = vmatprep.subr.bf16.mxu0 0
    %2662 = vmatpush1.bf16.msra.mxu0 0
    %2663 = vmatprep.subr.bf16.mxu0 0
    %2664 = vmatpush1.bf16.msra.mxu0 0
    %2665 = vmatprep.subr.bf16.mxu0 0
    %2666 = vmatpush1.bf16.msra.mxu0 0
    %2667 = vmatprep.mubr.bf16.mxu0 0
    %2668 = vmatmul.mubr.bf16.gmra.mrb[0].mxu0 %v2633
    %v2669 = vpop.f32.mrb[0].mxu0
    %v2670 = vadd.f32 0.0, %v2669
    %v2671 = vpop.f32.mrb[0].mxu0
    %v2672 = vpop.f32.mrb[0].mxu0
    %v2673 = vadd.f32 0.0, %v2672
    %v2674 = vpop.f32.mrb[0].mxu0
    %2675 = vdwg.mxu0
    %v2676 = vadd.f32 %v2409, %v2670
    %v2677 = vadd.f32 %v2410, %v2673
    %v2678 = vadd.f32 %v2676, %v63
    %v2679 = vadd.f32 %v2677, %v63
    %v2680 = vadd.f32 %v2678, %v1565
    %v2681 = vadd.f32 %v2679, %v1566
    %v2682 = vsel %vm167, %v2680, 0.0
    %2683 = vadd.xlane.f32.xlu0 %v2682
    %v2684 = vpop.xlane.xlu0 %2683
    %v2685 = vsel %vm167, %v2681, 0.0
    %2686 = vadd.xlane.f32.xlu0 %v2685
    %v2687 = vpop.xlane.xlu0 %2686
    %v2688 = vmul.f32 %v2684, %v174
    %v2689 = vmul.f32 %v2687, %v174
    %v2690 = vmul.f32 %v2680, %v2680
    %v2691 = vmul.f32 %v2681, %v2681
    %v2692 = vsel %vm167, %v2690, 0.0
    %2693 = vadd.xlane.f32.xlu0 %v2692
    %v2694 = vpop.xlane.xlu0 %2693
    %v2695 = vsel %vm167, %v2691, 0.0
    %2696 = vadd.xlane.f32.xlu0 %v2695
    %v2697 = vpop.xlane.xlu0 %2696
    %v2698 = vmul.f32 %v2694, %v174
    %v2699 = vmul.f32 %v2697, %v174
    %v2700 = vmul.f32 %v2688, %v2688
    %v2701 = vmul.f32 %v2689, %v2689
    %v2702 = vsub.f32 %v2698, %v2700
    %v2703 = vsub.f32 %v2699, %v2701
    %v2704 = vsub.f32 %v2680, %v2688
    %v2705 = vsub.f32 %v2681, %v2689
    %v2706 = vadd.f32 %v2702, 1e-12
    %v2707 = vadd.f32 %v2703, 1e-12
    %v2708 = vrsqrt.pop %v2706
    %v2709 = vrsqrt.pop %v2707
    %v2710 = vmul.f32 %v2704, %v2708
    %v2711 = vmul.f32 %v2705, %v2709
    %v2712 = vmul.f32 %v2710, %v75
    %v2713 = vmul.f32 %v2711, %v75
    %v2714 = vadd.f32 %v2712, %v79
    %v2715 = vadd.f32 %v2713, %v79
    %v2716 = vpack.c.bf16 %v2715, %v2714
    %v2718 = vsel %vm167, %v2716, 0
    %2720 = vmatprep.subr.bf16.mxu0 0
    %2721 = vmatpush1.bf16.msra.mxu0 %v1395
    %2722 = vmatprep.subr.bf16.mxu0 0
    %2723 = vmatpush1.bf16.msra.mxu0 %v1396
    %2724 = vmatprep.subr.bf16.mxu0 0
    %2725 = vmatpush1.bf16.msra.mxu0 0
    %2726 = vmatprep.subr.bf16.mxu0 0
    %2727 = vmatpush1.bf16.msra.mxu0 0
    %2728 = vmatprep.subr.bf16.mxu0 0
    %2729 = vmatpush1.bf16.msra.mxu0 0
    %2730 = vmatprep.subr.bf16.mxu0 0
    %2731 = vmatpush1.bf16.msra.mxu0 0
    %2732 = vmatprep.subr.bf16.mxu0 0
    %2733 = vmatpush1.bf16.msra.mxu0 0
    %2734 = vmatprep.subr.bf16.mxu0 0
    %2735 = vmatpush1.bf16.msra.mxu0 0
    %2736 = vmatprep.subr.bf16.mxu0 0
    %2737 = vmatpush1.bf16.msra.mxu0 0
    %2738 = vmatprep.subr.bf16.mxu0 0
    %2739 = vmatpush1.bf16.msra.mxu0 0
    %2740 = vmatprep.subr.bf16.mxu0 0
    %2741 = vmatpush1.bf16.msra.mxu0 0
    %2742 = vmatprep.subr.bf16.mxu0 0
    %2743 = vmatpush1.bf16.msra.mxu0 0
    %2744 = vmatprep.subr.bf16.mxu0 0
    %2745 = vmatpush1.bf16.msra.mxu0 0
    %2746 = vmatprep.subr.bf16.mxu0 0
    %2747 = vmatpush1.bf16.msra.mxu0 0
    %2748 = vmatprep.subr.bf16.mxu0 0
    %2749 = vmatpush1.bf16.msra.mxu0 0
    %2750 = vmatprep.subr.bf16.mxu0 0
    %2751 = vmatpush1.bf16.msra.mxu0 0
    %2752 = vmatprep.mubr.bf16.mxu0 0
    %2753 = vmatmul.mubr.bf16.gmra.mrb[0].mxu0 %v2718
    %v2754 = vpop.f32.mrb[0].mxu0
    %v2755 = vadd.f32 %v67, %v2754
    %v2756 = vpop.f32.mrb[0].mxu0
    %v2757 = vpop.f32.mrb[0].mxu0
    %v2758 = vadd.f32 %v67, %v2757
    %v2759 = vpop.f32.mrb[0].mxu0
    %2760 = vdwg.mxu0
    %v2761 = vmul.f32 %v2755, 0.5
    %v2762 = vmul.f32 %v2758, 0.5
    %v2763 = vmul.f32 %v2755, 0.044715
    %v2764 = vmul.f32 %v2758, 0.044715
    %v2765 = vmul.f32 %v2763, %v2755
    %v2766 = vmul.f32 %v2764, %v2758
    %v2767 = vmul.f32 %v2765, %v2755
    %v2768 = vmul.f32 %v2766, %v2758
    %v2769 = vadd.f32 %v2755, %v2767
    %v2770 = vadd.f32 %v2758, %v2768
    %v2771 = vmul.f32 %v2769, 0.7978846
    %v2772 = vmul.f32 %v2770, 0.7978846
    %v2773 = vtanh.pop %v2771
    %v2774 = vtanh.pop %v2772
    %v2775 = vadd.f32 %v2773, 1.0
    %v2776 = vadd.f32 %v2774, 1.0
    %v2777 = vmul.f32 %v2761, %v2775
    %v2778 = vmul.f32 %v2762, %v2776
    %v2779 = vpack.c.bf16 %v2778, %v2777
    %v2781 = vsel %vm1486, %v2779, 0
    %2783 = vmatprep.subr.bf16.mxu0 0
    %2784 = vmatpush1.bf16.msra.mxu0 %v1478
    %2785 = vmatprep.subr.bf16.mxu0 0
    %2786 = vmatpush1.bf16.msra.mxu0 %v1479
    %2787 = vmatprep.subr.bf16.mxu0 0
    %2788 = vmatpush1.bf16.msra.mxu0 %v1480
    %2789 = vmatprep.subr.bf16.mxu0 0
    %2790 = vmatpush1.bf16.msra.mxu0 %v1481
    %2791 = vmatprep.subr.bf16.mxu0 0
    %2792 = vmatpush1.bf16.msra.mxu0 0
    %2793 = vmatprep.subr.bf16.mxu0 0
    %2794 = vmatpush1.bf16.msra.mxu0 0
    %2795 = vmatprep.subr.bf16.mxu0 0
    %2796 = vmatpush1.bf16.msra.mxu0 0
    %2797 = vmatprep.subr.bf16.mxu0 0
    %2798 = vmatpush1.bf16.msra.mxu0 0
    %2799 = vmatprep.subr.bf16.mxu0 0
    %2800 = vmatpush1.bf16.msra.mxu0 0
    %2801 = vmatprep.subr.bf16.mxu0 0
    %2802 = vmatpush1.bf16.msra.mxu0 0
    %2803 = vmatprep.subr.bf16.mxu0 0
    %2804 = vmatpush1.bf16.msra.mxu0 0
    %2805 = vmatprep.subr.bf16.mxu0 0
    %2806 = vmatpush1.bf16.msra.mxu0 0
    %2807 = vmatprep.subr.bf16.mxu0 0
    %2808 = vmatpush1.bf16.msra.mxu0 0
    %2809 = vmatprep.subr.bf16.mxu0 0
    %2810 = vmatpush1.bf16.msra.mxu0 0
    %2811 = vmatprep.subr.bf16.mxu0 0
    %2812 = vmatpush1.bf16.msra.mxu0 0
    %2813 = vmatprep.subr.bf16.mxu0 0
    %2814 = vmatpush1.bf16.msra.mxu0 0
    %2815 = vmatprep.mubr.bf16.mxu0 0
    %2816 = vmatmul.mubr.bf16.gmra.mrb[0].mxu0 %v2781
    %v2817 = vpop.f32.mrb[0].mxu0
    %v2818 = vadd.f32 %v71, %v2817
    %v2819 = vpop.f32.mrb[0].mxu0
    %v2820 = vpop.f32.mrb[0].mxu0
    %v2821 = vadd.f32 %v71, %v2820
    %v2822 = vpop.f32.mrb[0].mxu0
    %2823 = vdwg.mxu0
    %v2824 = vadd.f32 %v2818, %v2714
    %v2825 = vadd.f32 %v2821, %v2715
    %v2826 = vsel %vm167, %v2824, 0.0
    %2827 = vadd.xlane.f32.xlu0 %v2826
    %v2828 = vpop.xlane.xlu0 %2827
    %v2829 = vsel %vm167, %v2825, 0.0
    %2830 = vadd.xlane.f32.xlu0 %v2829
    %v2831 = vpop.xlane.xlu0 %2830
    %v2832 = vmul.f32 %v2828, %v174
    %v2833 = vmul.f32 %v2831, %v174
    %v2834 = vmul.f32 %v2824, %v2824
    %v2835 = vmul.f32 %v2825, %v2825
    %v2836 = vsel %vm167, %v2834, 0.0
    %2837 = vadd.xlane.f32.xlu0 %v2836
    %v2838 = vpop.xlane.xlu0 %2837
    %v2839 = vsel %vm167, %v2835, 0.0
    %2840 = vadd.xlane.f32.xlu0 %v2839
    %v2841 = vpop.xlane.xlu0 %2840
    %v2842 = vmul.f32 %v2838, %v174
    %v2843 = vmul.f32 %v2841, %v174
    %v2844 = vmul.f32 %v2832, %v2832
    %v2845 = vmul.f32 %v2833, %v2833
    %v2846 = vsub.f32 %v2842, %v2844
    %v2847 = vsub.f32 %v2843, %v2845
    %v2848 = vsub.f32 %v2824, %v2832
    %v2849 = vsub.f32 %v2825, %v2833
    %v2850 = vadd.f32 %v2846, 1e-12
    %v2851 = vadd.f32 %v2847, 1e-12
    %v2852 = vrsqrt.pop %v2850
    %v2853 = vrsqrt.pop %v2851
    %v2854 = vmul.f32 %v2848, %v2852
    %v2855 = vmul.f32 %v2849, %v2853
    %v2856 = vmul.f32 %v2854, %v83
    %v2857 = vmul.f32 %v2855, %v83
    %v2858 = vadd.f32 %v2856, %v87
    %v2859 = vadd.f32 %v2857, %v87
    %2860 = vst.msk [vmem:[%s8] sm:$0xff] %vm167, %v2858
    %2861 = vst.msk [vmem:[%s8 + $0x8] sm:$0xff] %vm167, %v2859
    // Predicated region
    $region30: #{raw_bert_transformer_forward.1} parent=1 // pred_check
      _
    $region31: #{raw_bert_transformer_forward.1} parent=1 // pred_check_branch
      %2863 = sbr.rel (0) target = $region33
    $region32: #{raw_bert_transformer_forward.1} parent=1 // pred_region
      %s2865 = ssub.s32 256, 256
      %2866 = vsyncadd [#allocation3], %s2865
      %s2867 = sshll.u32 [#allocation5], 4
      %s2868 = int_to_ptr.vmem [resolvable:$true] %s2867
      %2873 = dma.vmem_to_hbm [thread:$0]  %s2868, 256, %s6, [#allocation3], 128, 128, 8
    $region33: #{raw_bert_transformer_forward.1} parent=1 // pred_fallthru
      _
    // Predicated region
    $region34: #{raw_bert_transformer_forward.1} parent=1 // pred_check
      _
    $region35: #{raw_bert_transformer_forward.1} parent=1 // pred_check_branch
      %2875 = sbr.rel (0) target = $region37
    $region36: #{raw_bert_transformer_forward.1} parent=1 // pred_region
      %s2877 = ssub.s32 256, 256
      %2878 = vsyncadd [#allocation7], %s2877
      %s2879 = sshll.u32 [#allocation6], 4
      %s2880 = int_to_ptr.vmem [resolvable:$true] %s2879
      %2885 = dma.vmem_to_hbm [thread:$0]  %s2880, 256, %s7, [#allocation7], 128, 128, 8
    $region37: #{raw_bert_transformer_forward.1} parent=1 // pred_fallthru
      _
    // Predicated region
    $region38: #{raw_bert_transformer_forward.1} parent=1 // pred_check
      _
    $region39: #{raw_bert_transformer_forward.1} parent=1 // pred_check_branch
      %2887 = sbr.rel (0) target = $region41
    $region40: #{raw_bert_transformer_forward.1} parent=1 // pred_region
      _
    $region41: #{raw_bert_transformer_forward.1} parent=1 // pred_fallthru
      _
    // Predicated region
    $region42: #{raw_bert_transformer_forward.1} parent=1 // pred_check
      _
    $region43: #{raw_bert_transformer_forward.1} parent=1 // pred_check_branch
      %2889 = sbr.rel (0) target = $region45
    $region44: #{raw_bert_transformer_forward.1} parent=1 // pred_region
      %2890 = dma.done [#allocation3], 256
    $region45: #{raw_bert_transformer_forward.1} parent=1 // pred_fallthru
      _
    // Predicated region
    $region46: #{raw_bert_transformer_forward.1} parent=1 // pred_check
      _
    $region47: #{raw_bert_transformer_forward.1} parent=1 // pred_check_branch
      %2892 = sbr.rel (0) target = $region49
    $region48: #{raw_bert_transformer_forward.1} parent=1 // pred_region
      %2893 = dma.done [#allocation7], 256
    $region49: #{raw_bert_transformer_forward.1} parent=1 // pred_fallthru
      _
    // Predicated region
    $region50: #{raw_bert_transformer_forward.1} parent=1 // pred_check
      _
    $region51: #{raw_bert_transformer_forward.1} parent=1 // pred_check_branch
      %2895 = sbr.rel (0) target = $region53
    $region52: #{raw_bert_transformer_forward.1} parent=1 // pred_region
      _
    $region53: #{raw_bert_transformer_forward.1} parent=1 // pred_fallthru
      _
    %2896 = vsyncpa [#allocation3], 1
    %2897 = vsyncpa [#allocation7], 1
    %2898 = vsyncpa [#allocation4], 1

</llo_original>
